<compile_context>
chip_gen: v7x
topology: tpu7x:2x2x1
jax: 0.10.0
libtpu: 0.0.40
codegen_flags: <defaults>
</compile_context>

<pallas_src>
import functools

import jax
import jax.numpy as jnp
from jax import lax
from jax.experimental import pallas as pl
from jax.experimental.pallas import tpu as pltpu


def _round_up_128(v):
    return ((v + 127) // 128) * 128


# --------------------------------------------------------------------------------------
# Pallas kernel: one batch element per grid step, everything in (C, H*W) layout.
# --------------------------------------------------------------------------------------
def _residual_cbam_kernel(
    x_ref,       # (C, HW + 2*LP)   flat input, zero lane-padded by LP on each side
    w1m_ref,     # (C, 9C)          conv1 weight, BN1 scale folded, [o, (dy*3+dx)*C + i]
    b1_ref,      # (C, 1)           BN1 shift
    w2m_ref,     # (C, 9C)          conv2 weight, BN2 scale folded
    b2_ref,      # (C, 1)           BN2 shift
    wfc1_ref,    # (Cr, C)          channel-attention fc1
    wfc2_ref,    # (C, Cr)          channel-attention fc2
    masks_ref,   # (7, HW) f32      horizontal-validity masks per dx of a 7-wide window
    wsa_ref,     # (98,) SMEM       spatial-attention 7x7 weight, flat [dy*14 + dx*2 + {avg,max}]
    out_ref,     # (C, HW)
    cols_ref,    # VMEM (9C, HW)    im2col scratch (reused by both convs)
    ext2_ref,    # VMEM (C, HW + 2*LP)        flat padded conv2 input
    extsa_ref,   # VMEM (2, HW + 2*LPS)       flat padded [avg, max] spatial maps
    *, H, W,
):
    C, HW = out_ref.shape
    f32 = jnp.float32

    lpad_x = (x_ref.shape[1] - HW) // 2
    lpad_2 = (ext2_ref.shape[1] - HW) // 2
    lpad_sa = (extsa_ref.shape[1] - HW) // 2

    masks = masks_ref[...]                      # (7, HW)
    m_left = masks[2:3, :]                      # valid when x-1 >= 0   (== 7-wide mask, dx=2)
    m_right = masks[4:5, :]                     # valid when x+1 <= W-1 (== 7-wide mask, dx=4)

    # ---------- 3x3 conv (pad 1, no bias) as one im2col matmul with K = 9*C ----------
    def conv3x3(src_ref, lpad, w_ref, b_ref):
        for dy in range(3):
            for dx in range(3):
                off = lpad + (dy - 1) * W + (dx - 1)
                sh = src_ref[:, pl.ds(off, HW)].astype(f32)       # (C, HW) shifted image
                if dx == 0:
                    sh = sh * m_left                              # kill row wrap-around
                elif dx == 2:
                    sh = sh * m_right
                k = dy * 3 + dx
                cols_ref[pl.ds(k * C, C), :] = sh
        y = jnp.dot(w_ref[...], cols_ref[...], preferred_element_type=f32)   # (C, HW)
        return y + b_ref[...]                                     # BN shift (scale in weights)

    # ---------- conv1 + BN1 + ReLU ----------
    y1 = jnp.maximum(conv3x3(x_ref, lpad_x, w1m_ref, b1_ref), 0.0)           # (C, HW)

    # ---------- conv2 + BN2 ----------
    ext2_ref[:, pl.ds(0, lpad_2)] = jnp.zeros((C, lpad_2), f32)
    ext2_ref[:, pl.ds(lpad_2 + HW, lpad_2)] = jnp.zeros((C, lpad_2), f32)
    ext2_ref[:, pl.ds(lpad_2, HW)] = y1
    y2 = conv3x3(ext2_ref, lpad_2, w2m_ref, b2_ref)                          # (C, HW)

    # ---------- CBAM: channel attention ----------
    avg_c = jnp.mean(y2, axis=1, keepdims=True)                              # (C, 1)
    max_c = jnp.max(y2, axis=1, keepdims=True)                               # (C, 1)

    def mlp(v):
        h = jnp.maximum(jnp.dot(wfc1_ref[...], v, preferred_element_type=f32), 0.0)
        return jnp.dot(wfc2_ref[...], h, preferred_element_type=f32)

    ca = jax.nn.sigmoid(mlp(avg_c) + mlp(max_c))                             # (C, 1)
    y3 = y2 * ca                                                             # lane broadcast

    # ---------- CBAM: spatial attention (7x7 conv on [mean_c, max_c], pad 3) ----------
    avg_s = jnp.mean(y3, axis=0, keepdims=True)                              # (1, HW)
    max_s = jnp.max(y3, axis=0, keepdims=True)                               # (1, HW)

    extsa_ref[:, pl.ds(0, lpad_sa)] = jnp.zeros((2, lpad_sa), f32)
    extsa_ref[:, pl.ds(lpad_sa + HW, lpad_sa)] = jnp.zeros((2, lpad_sa), f32)
    extsa_ref[pl.ds(0, 1), pl.ds(lpad_sa, HW)] = avg_s
    extsa_ref[pl.ds(1, 1), pl.ds(lpad_sa, HW)] = max_s

    sa = jnp.zeros((1, HW), f32)
    for dy in range(7):
        for dx in range(7):
            off = lpad_sa + (dy - 3) * W + (dx - 3)
            slab = extsa_ref[:, pl.ds(off, HW)]                  # (2, HW): [avg; max], lane-dense
            if dx != 3:
                slab = slab * masks[dx:dx + 1, :]
            wa = wsa_ref[dy * 14 + dx * 2 + 0]                   # scalar from SMEM (avg channel)
            wm = wsa_ref[dy * 14 + dx * 2 + 1]                   # scalar from SMEM (max channel)
            sa = sa + wa * slab[0:1, :] + wm * slab[1:2, :]
    y4 = y3 * jax.nn.sigmoid(sa)                                 # sublane broadcast

    # ---------- residual (centre of the lane-padded input) ----------
    res = x_ref[:, pl.ds(lpad_x, HW)].astype(f32)
    out_ref[...] = (y4 + res).astype(out_ref.dtype)


# --------------------------------------------------------------------------------------
# Wrapper: flatten NCHW -> (N, C, H*W), lane-pad, build boundary masks, pallas_call.
# --------------------------------------------------------------------------------------
def residual_cbam_forward(x_nchw, kp):
    N, C, H, W = x_nchw.shape
    HW = H * W
    Cr = kp["wfc1"].shape[0]

    lpad = _round_up_128(W + 1)          # covers +-(W+1) flat shifts of the 3x3 conv
    lpad_sa = _round_up_128(3 * W + 3)   # covers +-(3W+3) flat shifts of the 7x7 conv
    E = HW + 2 * lpad

    x_flat = x_nchw.reshape(N, C, HW).astype(jnp.float32)
    x_ext = jnp.pad(x_flat, ((0, 0), (0, 0), (lpad, lpad)))

    # Horizontal validity masks (rows indexed by dx of a 7-wide window); rows 2 / 4 double
    # as the 3x3 conv's left / right masks.
    xp = jnp.arange(HW, dtype=jnp.int32) % W
    masks = jnp.stack(
        [((xp >= max(0, 3 - dx)) & (xp < W - max(0, dx - 3))).astype(jnp.float32)
         for dx in range(7)],
        axis=0)                                                   # (7, HW)

    kernel = functools.partial(_residual_cbam_kernel, H=H, W=W)

    out = pl.pallas_call(
        kernel,
        out_shape=jax.ShapeDtypeStruct((N, C, HW), jnp.float32),
        grid_spec=pltpu.PrefetchScalarGridSpec(
            num_scalar_prefetch=0,
            grid=(N,),
            in_specs=[
                pl.BlockSpec((None, C, E), lambda n: (n, 0, 0)),
                pl.BlockSpec((C, 9 * C), lambda n: (0, 0)),
                pl.BlockSpec((C, 1), lambda n: (0, 0)),
                pl.BlockSpec((C, 9 * C), lambda n: (0, 0)),
                pl.BlockSpec((C, 1), lambda n: (0, 0)),
                pl.BlockSpec((Cr, C), lambda n: (0, 0)),
                pl.BlockSpec((C, Cr), lambda n: (0, 0)),
                pl.BlockSpec((7, HW), lambda n: (0, 0)),
                pl.BlockSpec(memory_space=pltpu.MemorySpace.SMEM),
            ],
            out_specs=pl.BlockSpec((None, C, HW), lambda n: (n, 0, 0)),
            scratch_shapes=[
                pltpu.VMEM((9 * C, HW), jnp.float32),            # im2col
                pltpu.VMEM((C, E), jnp.float32),                 # padded conv2 input
                pltpu.VMEM((2, HW + 2 * lpad_sa), jnp.float32),  # padded [avg, max] maps
            ],
        ),
        compiler_params=pltpu.CompilerParams(
            dimension_semantics=("parallel",)),                  # v7x: one image per TC
    )(x_ext, kp["w1m"], kp["b1"], kp["w2m"], kp["b2"],
      kp["wfc1"], kp["wfc2"], masks, kp["wsa"])

    return out.reshape(N, C, H, W)


# --------------------------------------------------------------------------------------
# Deterministic parameter construction (PyTorch layouts) + conversion to kernel layouts.
# --------------------------------------------------------------------------------------
def make_torch_params(key, C, red):
    Cr = C // red
    ks = jax.random.split(key, 16)
    return {
        "w1": jax.random.normal(ks[0], (C, C, 3, 3), jnp.float32) * 0.1,     # OIHW
        "bn1_g": 0.5 + jax.random.uniform(ks[1], (C,), jnp.float32),
        "bn1_b": jax.random.normal(ks[2], (C,), jnp.float32) * 0.1,
        "bn1_m": jax.random.normal(ks[3], (C,), jnp.float32) * 0.1,
        "bn1_v": 0.5 + jax.random.uniform(ks[4], (C,), jnp.float32),
        "w2": jax.random.normal(ks[5], (C, C, 3, 3), jnp.float32) * 0.1,     # OIHW
        "bn2_g": 0.5 + jax.random.uniform(ks[6], (C,), jnp.float32),
        "bn2_b": jax.random.normal(ks[7], (C,), jnp.float32) * 0.1,
        "bn2_m": jax.random.normal(ks[8], (C,), jnp.float32) * 0.1,
        "bn2_v": 0.5 + jax.random.uniform(ks[9], (C,), jnp.float32),
        "wfc1": jax.random.normal(ks[10], (Cr, C), jnp.float32) * 0.2,       # 1x1 conv (O, I)
        "wfc2": jax.random.normal(ks[11], (C, Cr), jnp.float32) * 0.2,       # 1x1 conv (O, I)
        "wsa": jax.random.normal(ks[12], (1, 2, 7, 7), jnp.float32) * 0.1,   # OIHW
    }


def to_kernel_params(tp, eps=1e-5):
    C = tp["w1"].shape[0]

    def fold(w_oihw, g, b, m, v):
        scale = g / jnp.sqrt(v + eps)                            # (C,)
        shift = b - m * scale                                    # (C,)
        # OIHW -> (O, KH, KW, I) -> (O, 9*I) so column (dy*3+dx)*C + i matches im2col rows.
        wm = jnp.transpose(w_oihw, (0, 2, 3, 1)).reshape(C, 9 * C)
        return wm * scale[:, None], shift[:, None]               # BN scale folded into weights

    w1m, b1 = fold(tp["w1"], tp["bn1_g"], tp["bn1_b"], tp["bn1_m"], tp["bn1_v"])
    w2m, b2 = fold(tp["w2"], tp["bn2_g"], tp["bn2_b"], tp["bn2_m"], tp["bn2_v"])
    return {
        "w1m": w1m, "b1": b1, "w2m": w2m, "b2": b2,
        "wfc1": tp["wfc1"],                                      # (Cr, C)
        "wfc2": tp["wfc2"],                                      # (C, Cr)
        # (1,2,7,7) -> flat [dy*14 + dx*2 + channel]
        "wsa": jnp.transpose(tp["wsa"][0], (1, 2, 0)).reshape(-1),
    }


# --------------------------------------------------------------------------------------
# Pure-JAX (XLA) reference in NCHW for verification.
# --------------------------------------------------------------------------------------
def reference_forward(x, tp, eps=1e-5):
    def conv3(z, w):
        return lax.conv_general_dilated(z, w, (1, 1), ((1, 1), (1, 1)),
                                        dimension_numbers=("NCHW", "OIHW", "NCHW"))

    def bn(z, g, b, m, v):
        return ((z - m[None, :, None, None]) / jnp.sqrt(v[None, :, None, None] + eps)
                * g[None, :, None, None] + b[None, :, None, None])

    y = jax.nn.relu(bn(conv3(x, tp["w1"]), tp["bn1_g"], tp["bn1_b"], tp["bn1_m"], tp["bn1_v"]))
    y = bn(conv3(y, tp["w2"]), tp["bn2_g"], tp["bn2_b"], tp["bn2_m"], tp["bn2_v"])

    # channel attention
    avg = jnp.mean(y, axis=(2, 3), keepdims=True)
    mx = jnp.max(y, axis=(2, 3), keepdims=True)

    def mlp(v):
        h = jax.nn.relu(jnp.einsum("nchw,oc->nohw", v, tp["wfc1"]))
        return jnp.einsum("nchw,oc->nohw", h, tp["wfc2"])

    y = y * jax.nn.sigmoid(mlp(avg) + mlp(mx))

    # spatial attention
    pool = jnp.concatenate([jnp.mean(y, axis=1, keepdims=True),
                            jnp.max(y, axis=1, keepdims=True)], axis=1)
    sa = lax.conv_general_dilated(pool, tp["wsa"], (1, 1), ((3, 3), (3, 3)),
                                  dimension_numbers=("NCHW", "OIHW", "NCHW"))
    y = y * jax.nn.sigmoid(sa)
    return y + x


# --------------------------------------------------------------------------------------
if __name__ == "__main__":
    N, C, H, W = 2, 16, 16, 16
    CBAM_REDUCTION = 4

    key = jax.random.PRNGKey(0)
    kx, kp = jax.random.split(key)
    x = jax.random.normal(kx, (N, C, H, W), jnp.float32)     # NCHW, like PyTorch

    torch_params = make_torch_params(kp, C, CBAM_REDUCTION)
    kernel_params = to_kernel_params(torch_params)

    out = jax.block_until_ready(residual_cbam_forward(x, kernel_params))
    ref = jax.block_until_ready(reference_forward(x, torch_params))

    assert out.shape == x.shape
    max_err = float(jnp.max(jnp.abs(out - ref)))
    assert max_err < 1e-3, f"mismatch vs reference: {max_err}"

    print("KERNEL_OK")
</pallas_src>

<mosaic_0001>
module attributes {stable_mosaic.version = 11 : i64} {
  func.func @_residual_cbam_kernel(%arg0: i32, %arg1: memref<1x16x512xf32, #tpu.memory_space<vmem>>, %arg2: memref<16x144xf32, #tpu.memory_space<vmem>>, %arg3: memref<16x1xf32, #tpu.memory_space<vmem>>, %arg4: memref<16x144xf32, #tpu.memory_space<vmem>>, %arg5: memref<16x1xf32, #tpu.memory_space<vmem>>, %arg6: memref<4x16xf32, #tpu.memory_space<vmem>>, %arg7: memref<16x4xf32, #tpu.memory_space<vmem>>, %arg8: memref<7x256xf32, #tpu.memory_space<vmem>>, %arg9: memref<98xf32, #tpu.memory_space<smem>>, %arg10: memref<1x16x256xf32, #tpu.memory_space<vmem>>, %arg11: memref<144x256xf32, #tpu.memory_space<vmem>>, %arg12: memref<16x512xf32, #tpu.memory_space<vmem>>, %arg13: memref<2x512xf32, #tpu.memory_space<vmem>>) attributes {dimension_semantics = [#tpu.dimension_semantics<parallel>], iteration_bounds = array<i64: 2>, scalar_prefetch = 0 : i64, scratch_operands = 3 : i64, tpu.core_type = #tpu.core_type<tc>, window_params = [{transform_indices = @transform_0, window_bounds = array<i64: 1, 16, 512>}, {pipeline_mode = #tpu.pipeline_mode<synchronous>, transform_indices = @transform_1, window_bounds = array<i64: 16, 144>}, {pipeline_mode = #tpu.pipeline_mode<synchronous>, transform_indices = @transform_2, window_bounds = array<i64: 16, 1>}, {pipeline_mode = #tpu.pipeline_mode<synchronous>, transform_indices = @transform_3, window_bounds = array<i64: 16, 144>}, {pipeline_mode = #tpu.pipeline_mode<synchronous>, transform_indices = @transform_4, window_bounds = array<i64: 16, 1>}, {pipeline_mode = #tpu.pipeline_mode<synchronous>, transform_indices = @transform_5, window_bounds = array<i64: 4, 16>}, {pipeline_mode = #tpu.pipeline_mode<synchronous>, transform_indices = @transform_6, window_bounds = array<i64: 16, 4>}, {pipeline_mode = #tpu.pipeline_mode<synchronous>, transform_indices = @transform_7, window_bounds = array<i64: 7, 256>}, {transform_indices = @transform_8, window_bounds = array<i64: 98>}, {transform_indices = @transform_9, window_bounds = array<i64: 1, 16, 256>}]} {
    %c0 = arith.constant 0 : index
    %c0_0 = arith.constant 0 : index
    %0 = vector.load %arg8[%c0, %c0_0] : memref<7x256xf32, #tpu.memory_space<vmem>>, vector<7x256xf32>
    %1 = vector.extract_strided_slice %0 {offsets = [2, 0], sizes = [1, 256], strides = [1, 1]} : vector<7x256xf32> to vector<1x256xf32>
    %2 = vector.extract_strided_slice %0 {offsets = [4, 0], sizes = [1, 256], strides = [1, 1]} : vector<7x256xf32> to vector<1x256xf32>
    %c0_1 = arith.constant 0 : index
    %c0_2 = arith.constant 0 : index
    %c111 = arith.constant 111 : index
    %3 = vector.load %arg1[%c0_1, %c0_2, %c111] : memref<1x16x512xf32, #tpu.memory_space<vmem>>, vector<1x16x256xf32>
    %4 = vector.shape_cast %3 : vector<1x16x256xf32> to vector<16x256xf32>
    %5 = vector.broadcast %1 : vector<1x256xf32> to vector<16x256xf32>
    %6 = arith.mulf %4, %5 : vector<16x256xf32>
    %c0_3 = arith.constant 0 : index
    %c0_4 = arith.constant 0 : index
    %7 = vector.load %arg11[%c0_3, %c0_4] : memref<144x256xf32, #tpu.memory_space<vmem>>, vector<16x256xf32>
    tpu.vector_store %arg11[%c0_3, %c0_4], %6 {strides = array<i32>} : memref<144x256xf32, #tpu.memory_space<vmem>>, vector<16x256xf32>,
    %c0_5 = arith.constant 0 : index
    %c0_6 = arith.constant 0 : index
    %c112 = arith.constant 112 : index
    %8 = vector.load %arg1[%c0_5, %c0_6, %c112] : memref<1x16x512xf32, #tpu.memory_space<vmem>>, vector<1x16x256xf32>
    %9 = vector.shape_cast %8 : vector<1x16x256xf32> to vector<16x256xf32>
    %c16 = arith.constant 16 : index
    %c0_7 = arith.constant 0 : index
    %10 = vector.load %arg11[%c16, %c0_7] : memref<144x256xf32, #tpu.memory_space<vmem>>, vector<16x256xf32>
    tpu.vector_store %arg11[%c16, %c0_7], %9 {strides = array<i32>} : memref<144x256xf32, #tpu.memory_space<vmem>>, vector<16x256xf32>,
    %c0_8 = arith.constant 0 : index
    %c0_9 = arith.constant 0 : index
    %c113 = arith.constant 113 : index
    %11 = vector.load %arg1[%c0_8, %c0_9, %c113] : memref<1x16x512xf32, #tpu.memory_space<vmem>>, vector<1x16x256xf32>
    %12 = vector.shape_cast %11 : vector<1x16x256xf32> to vector<16x256xf32>
    %13 = vector.broadcast %2 : vector<1x256xf32> to vector<16x256xf32>
    %14 = arith.mulf %12, %13 : vector<16x256xf32>
    %c32 = arith.constant 32 : index
    %c0_10 = arith.constant 0 : index
    %15 = vector.load %arg11[%c32, %c0_10] : memref<144x256xf32, #tpu.memory_space<vmem>>, vector<16x256xf32>
    tpu.vector_store %arg11[%c32, %c0_10], %14 {strides = array<i32>} : memref<144x256xf32, #tpu.memory_space<vmem>>, vector<16x256xf32>,
    %c0_11 = arith.constant 0 : index
    %c0_12 = arith.constant 0 : index
    %c127 = arith.constant 127 : index
    %16 = vector.load %arg1[%c0_11, %c0_12, %c127] : memref<1x16x512xf32, #tpu.memory_space<vmem>>, vector<1x16x256xf32>
    %17 = vector.shape_cast %16 : vector<1x16x256xf32> to vector<16x256xf32>
    %18 = vector.broadcast %1 : vector<1x256xf32> to vector<16x256xf32>
    %19 = arith.mulf %17, %18 : vector<16x256xf32>
    %c48 = arith.constant 48 : index
    %c0_13 = arith.constant 0 : index
    %20 = vector.load %arg11[%c48, %c0_13] : memref<144x256xf32, #tpu.memory_space<vmem>>, vector<16x256xf32>
    tpu.vector_store %arg11[%c48, %c0_13], %19 {strides = array<i32>} : memref<144x256xf32, #tpu.memory_space<vmem>>, vector<16x256xf32>,
    %c0_14 = arith.constant 0 : index
    %c0_15 = arith.constant 0 : index
    %c128 = arith.constant 128 : index
    %21 = vector.load %arg1[%c0_14, %c0_15, %c128] : memref<1x16x512xf32, #tpu.memory_space<vmem>>, vector<1x16x256xf32>
    %22 = vector.shape_cast %21 : vector<1x16x256xf32> to vector<16x256xf32>
    %c64 = arith.constant 64 : index
    %c0_16 = arith.constant 0 : index
    %23 = vector.load %arg11[%c64, %c0_16] : memref<144x256xf32, #tpu.memory_space<vmem>>, vector<16x256xf32>
    tpu.vector_store %arg11[%c64, %c0_16], %22 {strides = array<i32>} : memref<144x256xf32, #tpu.memory_space<vmem>>, vector<16x256xf32>,
    %c0_17 = arith.constant 0 : index
    %c0_18 = arith.constant 0 : index
    %c129 = arith.constant 129 : index
    %24 = vector.load %arg1[%c0_17, %c0_18, %c129] : memref<1x16x512xf32, #tpu.memory_space<vmem>>, vector<1x16x256xf32>
    %25 = vector.shape_cast %24 : vector<1x16x256xf32> to vector<16x256xf32>
    %26 = vector.broadcast %2 : vector<1x256xf32> to vector<16x256xf32>
    %27 = arith.mulf %25, %26 : vector<16x256xf32>
    %c80 = arith.constant 80 : index
    %c0_19 = arith.constant 0 : index
    %28 = vector.load %arg11[%c80, %c0_19] : memref<144x256xf32, #tpu.memory_space<vmem>>, vector<16x256xf32>
    tpu.vector_store %arg11[%c80, %c0_19], %27 {strides = array<i32>} : memref<144x256xf32, #tpu.memory_space<vmem>>, vector<16x256xf32>,
    %c0_20 = arith.constant 0 : index
    %c0_21 = arith.constant 0 : index
    %c143 = arith.constant 143 : index
    %29 = vector.load %arg1[%c0_20, %c0_21, %c143] : memref<1x16x512xf32, #tpu.memory_space<vmem>>, vector<1x16x256xf32>
    %30 = vector.shape_cast %29 : vector<1x16x256xf32> to vector<16x256xf32>
    %31 = vector.broadcast %1 : vector<1x256xf32> to vector<16x256xf32>
    %32 = arith.mulf %30, %31 : vector<16x256xf32>
    %c96 = arith.constant 96 : index
    %c0_22 = arith.constant 0 : index
    %33 = vector.load %arg11[%c96, %c0_22] : memref<144x256xf32, #tpu.memory_space<vmem>>, vector<16x256xf32>
    tpu.vector_store %arg11[%c96, %c0_22], %32 {strides = array<i32>} : memref<144x256xf32, #tpu.memory_space<vmem>>, vector<16x256xf32>,
    %c0_23 = arith.constant 0 : index
    %c0_24 = arith.constant 0 : index
    %c144 = arith.constant 144 : index
    %34 = vector.load %arg1[%c0_23, %c0_24, %c144] : memref<1x16x512xf32, #tpu.memory_space<vmem>>, vector<1x16x256xf32>
    %35 = vector.shape_cast %34 : vector<1x16x256xf32> to vector<16x256xf32>
    %c112_25 = arith.constant 112 : index
    %c0_26 = arith.constant 0 : index
    %36 = vector.load %arg11[%c112_25, %c0_26] : memref<144x256xf32, #tpu.memory_space<vmem>>, vector<16x256xf32>
    tpu.vector_store %arg11[%c112_25, %c0_26], %35 {strides = array<i32>} : memref<144x256xf32, #tpu.memory_space<vmem>>, vector<16x256xf32>,
    %c0_27 = arith.constant 0 : index
    %c0_28 = arith.constant 0 : index
    %c145 = arith.constant 145 : index
    %37 = vector.load %arg1[%c0_27, %c0_28, %c145] : memref<1x16x512xf32, #tpu.memory_space<vmem>>, vector<1x16x256xf32>
    %38 = vector.shape_cast %37 : vector<1x16x256xf32> to vector<16x256xf32>
    %39 = vector.broadcast %2 : vector<1x256xf32> to vector<16x256xf32>
    %40 = arith.mulf %38, %39 : vector<16x256xf32>
    %c128_29 = arith.constant 128 : index
    %c0_30 = arith.constant 0 : index
    %41 = vector.load %arg11[%c128_29, %c0_30] : memref<144x256xf32, #tpu.memory_space<vmem>>, vector<16x256xf32>
    tpu.vector_store %arg11[%c128_29, %c0_30], %40 {strides = array<i32>} : memref<144x256xf32, #tpu.memory_space<vmem>>, vector<16x256xf32>,
    %c0_31 = arith.constant 0 : index
    %c0_32 = arith.constant 0 : index
    %42 = vector.load %arg2[%c0_31, %c0_32] : memref<16x144xf32, #tpu.memory_space<vmem>>, vector<16x144xf32>
    %c0_33 = arith.constant 0 : index
    %c0_34 = arith.constant 0 : index
    %43 = vector.load %arg11[%c0_33, %c0_34] : memref<144x256xf32, #tpu.memory_space<vmem>>, vector<144x256xf32>
    %cst = arith.constant dense<0.000000e+00> : vector<16x256xf32>
    %44 = tpu.matmul %42, %43, %cst {dimension_numbers = #tpu.dot_dimension_numbers<[1], [0], [0], [1], [0, 0, 1, 1], [], []>} : vector<16x144xf32>, vector<144x256xf32>, vector<16x256xf32> -> vector<16x256xf32>
    %c0_35 = arith.constant 0 : index
    %c0_36 = arith.constant 0 : index
    %45 = vector.load %arg3[%c0_35, %c0_36] : memref<16x1xf32, #tpu.memory_space<vmem>>, vector<16x1xf32>
    %46 = vector.broadcast %45 : vector<16x1xf32> to vector<16x256xf32>
    %47 = arith.addf %44, %46 : vector<16x256xf32>
    %cst_37 = arith.constant 0.000000e+00 : f32
    %48 = vector.broadcast %cst_37 : f32 to vector<16x256xf32>
    %49 = arith.maximumf %47, %48 : vector<16x256xf32>
    %cst_38 = arith.constant 0.000000e+00 : f32
    %50 = vector.broadcast %cst_38 : f32 to vector<16x128xf32>
    %c0_39 = arith.constant 0 : index
    %c0_40 = arith.constant 0 : index
    %51 = vector.load %arg12[%c0_39, %c0_40] : memref<16x512xf32, #tpu.memory_space<vmem>>, vector<16x128xf32>
    tpu.vector_store %arg12[%c0_39, %c0_40], %50 {strides = array<i32>} : memref<16x512xf32, #tpu.memory_space<vmem>>, vector<16x128xf32>,
    %cst_41 = arith.constant 0.000000e+00 : f32
    %52 = vector.broadcast %cst_41 : f32 to vector<16x128xf32>
    %c0_42 = arith.constant 0 : index
    %c384 = arith.constant 384 : index
    %53 = vector.load %arg12[%c0_42, %c384] : memref<16x512xf32, #tpu.memory_space<vmem>>, vector<16x128xf32>
    tpu.vector_store %arg12[%c0_42, %c384], %52 {strides = array<i32>} : memref<16x512xf32, #tpu.memory_space<vmem>>, vector<16x128xf32>,
    %c0_43 = arith.constant 0 : index
    %c128_44 = arith.constant 128 : index
    %54 = vector.load %arg12[%c0_43, %c128_44] : memref<16x512xf32, #tpu.memory_space<vmem>>, vector<16x256xf32>
    tpu.vector_store %arg12[%c0_43, %c128_44], %49 {strides = array<i32>} : memref<16x512xf32, #tpu.memory_space<vmem>>, vector<16x256xf32>,
    %c0_45 = arith.constant 0 : index
    %c111_46 = arith.constant 111 : index
    %55 = vector.load %arg12[%c0_45, %c111_46] : memref<16x512xf32, #tpu.memory_space<vmem>>, vector<16x256xf32>
    %56 = vector.broadcast %1 : vector<1x256xf32> to vector<16x256xf32>
    %57 = arith.mulf %55, %56 : vector<16x256xf32>
    %c0_47 = arith.constant 0 : index
    %c0_48 = arith.constant 0 : index
    %58 = vector.load %arg11[%c0_47, %c0_48] : memref<144x256xf32, #tpu.memory_space<vmem>>, vector<16x256xf32>
    tpu.vector_store %arg11[%c0_47, %c0_48], %57 {strides = array<i32>} : memref<144x256xf32, #tpu.memory_space<vmem>>, vector<16x256xf32>,
    %c0_49 = arith.constant 0 : index
    %c112_50 = arith.constant 112 : index
    %59 = vector.load %arg12[%c0_49, %c112_50] : memref<16x512xf32, #tpu.memory_space<vmem>>, vector<16x256xf32>
    %c16_51 = arith.constant 16 : index
    %c0_52 = arith.constant 0 : index
    %60 = vector.load %arg11[%c16_51, %c0_52] : memref<144x256xf32, #tpu.memory_space<vmem>>, vector<16x256xf32>
    tpu.vector_store %arg11[%c16_51, %c0_52], %59 {strides = array<i32>} : memref<144x256xf32, #tpu.memory_space<vmem>>, vector<16x256xf32>,
    %c0_53 = arith.constant 0 : index
    %c113_54 = arith.constant 113 : index
    %61 = vector.load %arg12[%c0_53, %c113_54] : memref<16x512xf32, #tpu.memory_space<vmem>>, vector<16x256xf32>
    %62 = vector.broadcast %2 : vector<1x256xf32> to vector<16x256xf32>
    %63 = arith.mulf %61, %62 : vector<16x256xf32>
    %c32_55 = arith.constant 32 : index
    %c0_56 = arith.constant 0 : index
    %64 = vector.load %arg11[%c32_55, %c0_56] : memref<144x256xf32, #tpu.memory_space<vmem>>, vector<16x256xf32>
    tpu.vector_store %arg11[%c32_55, %c0_56], %63 {strides = array<i32>} : memref<144x256xf32, #tpu.memory_space<vmem>>, vector<16x256xf32>,
    %c0_57 = arith.constant 0 : index
    %c127_58 = arith.constant 127 : index
    %65 = vector.load %arg12[%c0_57, %c127_58] : memref<16x512xf32, #tpu.memory_space<vmem>>, vector<16x256xf32>
    %66 = vector.broadcast %1 : vector<1x256xf32> to vector<16x256xf32>
    %67 = arith.mulf %65, %66 : vector<16x256xf32>
    %c48_59 = arith.constant 48 : index
    %c0_60 = arith.constant 0 : index
    %68 = vector.load %arg11[%c48_59, %c0_60] : memref<144x256xf32, #tpu.memory_space<vmem>>, vector<16x256xf32>
    tpu.vector_store %arg11[%c48_59, %c0_60], %67 {strides = array<i32>} : memref<144x256xf32, #tpu.memory_space<vmem>>, vector<16x256xf32>,
    %c0_61 = arith.constant 0 : index
    %c128_62 = arith.constant 128 : index
    %69 = vector.load %arg12[%c0_61, %c128_62] : memref<16x512xf32, #tpu.memory_space<vmem>>, vector<16x256xf32>
    %c64_63 = arith.constant 64 : index
    %c0_64 = arith.constant 0 : index
    %70 = vector.load %arg11[%c64_63, %c0_64] : memref<144x256xf32, #tpu.memory_space<vmem>>, vector<16x256xf32>
    tpu.vector_store %arg11[%c64_63, %c0_64], %69 {strides = array<i32>} : memref<144x256xf32, #tpu.memory_space<vmem>>, vector<16x256xf32>,
    %c0_65 = arith.constant 0 : index
    %c129_66 = arith.constant 129 : index
    %71 = vector.load %arg12[%c0_65, %c129_66] : memref<16x512xf32, #tpu.memory_space<vmem>>, vector<16x256xf32>
    %72 = vector.broadcast %2 : vector<1x256xf32> to vector<16x256xf32>
    %73 = arith.mulf %71, %72 : vector<16x256xf32>
    %c80_67 = arith.constant 80 : index
    %c0_68 = arith.constant 0 : index
    %74 = vector.load %arg11[%c80_67, %c0_68] : memref<144x256xf32, #tpu.memory_space<vmem>>, vector<16x256xf32>
    tpu.vector_store %arg11[%c80_67, %c0_68], %73 {strides = array<i32>} : memref<144x256xf32, #tpu.memory_space<vmem>>, vector<16x256xf32>,
    %c0_69 = arith.constant 0 : index
    %c143_70 = arith.constant 143 : index
    %75 = vector.load %arg12[%c0_69, %c143_70] : memref<16x512xf32, #tpu.memory_space<vmem>>, vector<16x256xf32>
    %76 = vector.broadcast %1 : vector<1x256xf32> to vector<16x256xf32>
    %77 = arith.mulf %75, %76 : vector<16x256xf32>
    %c96_71 = arith.constant 96 : index
    %c0_72 = arith.constant 0 : index
    %78 = vector.load %arg11[%c96_71, %c0_72] : memref<144x256xf32, #tpu.memory_space<vmem>>, vector<16x256xf32>
    tpu.vector_store %arg11[%c96_71, %c0_72], %77 {strides = array<i32>} : memref<144x256xf32, #tpu.memory_space<vmem>>, vector<16x256xf32>,
    %c0_73 = arith.constant 0 : index
    %c144_74 = arith.constant 144 : index
    %79 = vector.load %arg12[%c0_73, %c144_74] : memref<16x512xf32, #tpu.memory_space<vmem>>, vector<16x256xf32>
    %c112_75 = arith.constant 112 : index
    %c0_76 = arith.constant 0 : index
    %80 = vector.load %arg11[%c112_75, %c0_76] : memref<144x256xf32, #tpu.memory_space<vmem>>, vector<16x256xf32>
    tpu.vector_store %arg11[%c112_75, %c0_76], %79 {strides = array<i32>} : memref<144x256xf32, #tpu.memory_space<vmem>>, vector<16x256xf32>,
    %c0_77 = arith.constant 0 : index
    %c145_78 = arith.constant 145 : index
    %81 = vector.load %arg12[%c0_77, %c145_78] : memref<16x512xf32, #tpu.memory_space<vmem>>, vector<16x256xf32>
    %82 = vector.broadcast %2 : vector<1x256xf32> to vector<16x256xf32>
    %83 = arith.mulf %81, %82 : vector<16x256xf32>
    %c128_79 = arith.constant 128 : index
    %c0_80 = arith.constant 0 : index
    %84 = vector.load %arg11[%c128_79, %c0_80] : memref<144x256xf32, #tpu.memory_space<vmem>>, vector<16x256xf32>
    tpu.vector_store %arg11[%c128_79, %c0_80], %83 {strides = array<i32>} : memref<144x256xf32, #tpu.memory_space<vmem>>, vector<16x256xf32>,
    %c0_81 = arith.constant 0 : index
    %c0_82 = arith.constant 0 : index
    %85 = vector.load %arg4[%c0_81, %c0_82] : memref<16x144xf32, #tpu.memory_space<vmem>>, vector<16x144xf32>
    %c0_83 = arith.constant 0 : index
    %c0_84 = arith.constant 0 : index
    %86 = vector.load %arg11[%c0_83, %c0_84] : memref<144x256xf32, #tpu.memory_space<vmem>>, vector<144x256xf32>
    %cst_85 = arith.constant dense<0.000000e+00> : vector<16x256xf32>
    %87 = tpu.matmul %85, %86, %cst_85 {dimension_numbers = #tpu.dot_dimension_numbers<[1], [0], [0], [1], [0, 0, 1, 1], [], []>} : vector<16x144xf32>, vector<144x256xf32>, vector<16x256xf32> -> vector<16x256xf32>
    %c0_86 = arith.constant 0 : index
    %c0_87 = arith.constant 0 : index
    %88 = vector.load %arg5[%c0_86, %c0_87] : memref<16x1xf32, #tpu.memory_space<vmem>>, vector<16x1xf32>
    %89 = vector.broadcast %88 : vector<16x1xf32> to vector<16x256xf32>
    %90 = arith.addf %87, %89 : vector<16x256xf32>
    %cst_88 = arith.constant dense<0.000000e+00> : vector<16xf32>
    %91 = vector.multi_reduction <add>, %90, %cst_88 [1] : vector<16x256xf32> to vector<16xf32>
    %92 = vector.shape_cast %91 : vector<16xf32> to vector<16x1xf32>
    %cst_89 = arith.constant 2.560000e+02 : f32
    %93 = vector.broadcast %cst_89 : f32 to vector<16x1xf32>
    %94 = arith.divf %92, %93 : vector<16x1xf32>
    %cst_90 = arith.constant dense<0xFF800000> : vector<16xf32>
    %95 = vector.multi_reduction <maximumf>, %90, %cst_90 [1] : vector<16x256xf32> to vector<16xf32>
    %96 = vector.shape_cast %95 : vector<16xf32> to vector<16x1xf32>
    %c0_91 = arith.constant 0 : index
    %c0_92 = arith.constant 0 : index
    %97 = vector.load %arg6[%c0_91, %c0_92] : memref<4x16xf32, #tpu.memory_space<vmem>>, vector<4x16xf32>
    %cst_93 = arith.constant dense<0.000000e+00> : vector<4x1xf32>
    %98 = tpu.matmul %97, %94, %cst_93 {dimension_numbers = #tpu.dot_dimension_numbers<[1], [0], [0], [1], [0, 0, 1, 1], [], []>} : vector<4x16xf32>, vector<16x1xf32>, vector<4x1xf32> -> vector<4x1xf32>
    %cst_94 = arith.constant 0.000000e+00 : f32
    %99 = vector.broadcast %cst_94 : f32 to vector<4x1xf32>
    %100 = arith.maximumf %98, %99 : vector<4x1xf32>
    %c0_95 = arith.constant 0 : index
    %c0_96 = arith.constant 0 : index
    %101 = vector.load %arg7[%c0_95, %c0_96] : memref<16x4xf32, #tpu.memory_space<vmem>>, vector<16x4xf32>
    %cst_97 = arith.constant dense<0.000000e+00> : vector<16x1xf32>
    %102 = tpu.matmul %101, %100, %cst_97 {dimension_numbers = #tpu.dot_dimension_numbers<[1], [0], [0], [1], [0, 0, 1, 1], [], []>} : vector<16x4xf32>, vector<4x1xf32>, vector<16x1xf32> -> vector<16x1xf32>
    %c0_98 = arith.constant 0 : index
    %c0_99 = arith.constant 0 : index
    %103 = vector.load %arg6[%c0_98, %c0_99] : memref<4x16xf32, #tpu.memory_space<vmem>>, vector<4x16xf32>
    %cst_100 = arith.constant dense<0.000000e+00> : vector<4x1xf32>
    %104 = tpu.matmul %103, %96, %cst_100 {dimension_numbers = #tpu.dot_dimension_numbers<[1], [0], [0], [1], [0, 0, 1, 1], [], []>} : vector<4x16xf32>, vector<16x1xf32>, vector<4x1xf32> -> vector<4x1xf32>
    %cst_101 = arith.constant 0.000000e+00 : f32
    %105 = vector.broadcast %cst_101 : f32 to vector<4x1xf32>
    %106 = arith.maximumf %104, %105 : vector<4x1xf32>
    %c0_102 = arith.constant 0 : index
    %c0_103 = arith.constant 0 : index
    %107 = vector.load %arg7[%c0_102, %c0_103] : memref<16x4xf32, #tpu.memory_space<vmem>>, vector<16x4xf32>
    %cst_104 = arith.constant dense<0.000000e+00> : vector<16x1xf32>
    %108 = tpu.matmul %107, %106, %cst_104 {dimension_numbers = #tpu.dot_dimension_numbers<[1], [0], [0], [1], [0, 0, 1, 1], [], []>} : vector<16x4xf32>, vector<4x1xf32>, vector<16x1xf32> -> vector<16x1xf32>
    %109 = arith.addf %102, %108 : vector<16x1xf32>
    %110 = arith.negf %109 : vector<16x1xf32>
    %111 = math.exp %110 : vector<16x1xf32>
    %cst_105 = arith.constant 1.000000e+00 : f32
    %112 = vector.broadcast %cst_105 : f32 to vector<16x1xf32>
    %113 = arith.addf %112, %111 : vector<16x1xf32>
    %114 = arith.divf %112, %113 : vector<16x1xf32>
    %115 = vector.broadcast %114 : vector<16x1xf32> to vector<16x256xf32>
    %116 = arith.mulf %90, %115 : vector<16x256xf32>
    %cst_106 = arith.constant dense<0.000000e+00> : vector<256xf32>
    %117 = vector.multi_reduction <add>, %116, %cst_106 [0] : vector<16x256xf32> to vector<256xf32>
    %118 = vector.shape_cast %117 : vector<256xf32> to vector<1x256xf32>
    %cst_107 = arith.constant 1.600000e+01 : f32
    %119 = vector.broadcast %cst_107 : f32 to vector<1x256xf32>
    %120 = arith.divf %118, %119 : vector<1x256xf32>
    %cst_108 = arith.constant dense<0xFF800000> : vector<256xf32>
    %121 = vector.multi_reduction <maximumf>, %116, %cst_108 [0] : vector<16x256xf32> to vector<256xf32>
    %122 = vector.shape_cast %121 : vector<256xf32> to vector<1x256xf32>
    %cst_109 = arith.constant 0.000000e+00 : f32
    %123 = vector.broadcast %cst_109 : f32 to vector<2x128xf32>
    %c0_110 = arith.constant 0 : index
    %c0_111 = arith.constant 0 : index
    %124 = vector.load %arg13[%c0_110, %c0_111] : memref<2x512xf32, #tpu.memory_space<vmem>>, vector<2x128xf32>
    tpu.vector_store %arg13[%c0_110, %c0_111], %123 {strides = array<i32>} : memref<2x512xf32, #tpu.memory_space<vmem>>, vector<2x128xf32>,
    %cst_112 = arith.constant 0.000000e+00 : f32
    %125 = vector.broadcast %cst_112 : f32 to vector<2x128xf32>
    %c0_113 = arith.constant 0 : index
    %c384_114 = arith.constant 384 : index
    %126 = vector.load %arg13[%c0_113, %c384_114] : memref<2x512xf32, #tpu.memory_space<vmem>>, vector<2x128xf32>
    tpu.vector_store %arg13[%c0_113, %c384_114], %125 {strides = array<i32>} : memref<2x512xf32, #tpu.memory_space<vmem>>, vector<2x128xf32>,
    %c0_115 = arith.constant 0 : index
    %c128_116 = arith.constant 128 : index
    %127 = vector.load %arg13[%c0_115, %c128_116] : memref<2x512xf32, #tpu.memory_space<vmem>>, vector<1x256xf32>
    tpu.vector_store %arg13[%c0_115, %c128_116], %120 {strides = array<i32>} : memref<2x512xf32, #tpu.memory_space<vmem>>, vector<1x256xf32>,
    %c1 = arith.constant 1 : index
    %c128_117 = arith.constant 128 : index
    %128 = vector.load %arg13[%c1, %c128_117] : memref<2x512xf32, #tpu.memory_space<vmem>>, vector<1x256xf32>
    tpu.vector_store %arg13[%c1, %c128_117], %122 {strides = array<i32>} : memref<2x512xf32, #tpu.memory_space<vmem>>, vector<1x256xf32>,
    %cst_118 = arith.constant 0.000000e+00 : f32
    %129 = vector.broadcast %cst_118 : f32 to vector<1x256xf32>
    %c0_119 = arith.constant 0 : index
    %c77 = arith.constant 77 : index
    %130 = vector.load %arg13[%c0_119, %c77] : memref<2x512xf32, #tpu.memory_space<vmem>>, vector<2x256xf32>
    %131 = vector.extract_strided_slice %0 {offsets = [0, 0], sizes = [1, 256], strides = [1, 1]} : vector<7x256xf32> to vector<1x256xf32>
    %132 = vector.broadcast %131 : vector<1x256xf32> to vector<2x256xf32>
    %133 = arith.mulf %130, %132 : vector<2x256xf32>
    %c0_120 = arith.constant 0 : index
    %134 = memref.load %arg9[%c0_120] : memref<98xf32, #tpu.memory_space<smem>>
    %c1_121 = arith.constant 1 : index
    %135 = memref.load %arg9[%c1_121] : memref<98xf32, #tpu.memory_space<smem>>
    %136 = vector.extract_strided_slice %133 {offsets = [0, 0], sizes = [1, 256], strides = [1, 1]} : vector<2x256xf32> to vector<1x256xf32>
    %137 = vector.broadcast %134 : f32 to vector<1x256xf32>
    %138 = arith.mulf %137, %136 : vector<1x256xf32>
    %139 = arith.addf %129, %138 : vector<1x256xf32>
    %140 = vector.extract_strided_slice %133 {offsets = [1, 0], sizes = [1, 256], strides = [1, 1]} : vector<2x256xf32> to vector<1x256xf32>
    %141 = vector.broadcast %135 : f32 to vector<1x256xf32>
    %142 = arith.mulf %141, %140 : vector<1x256xf32>
    %143 = arith.addf %139, %142 : vector<1x256xf32>
    %c0_122 = arith.constant 0 : index
    %c78 = arith.constant 78 : index
    %144 = vector.load %arg13[%c0_122, %c78] : memref<2x512xf32, #tpu.memory_space<vmem>>, vector<2x256xf32>
    %145 = vector.extract_strided_slice %0 {offsets = [1, 0], sizes = [1, 256], strides = [1, 1]} : vector<7x256xf32> to vector<1x256xf32>
    %146 = vector.broadcast %145 : vector<1x256xf32> to vector<2x256xf32>
    %147 = arith.mulf %144, %146 : vector<2x256xf32>
    %c2 = arith.constant 2 : index
    %148 = memref.load %arg9[%c2] : memref<98xf32, #tpu.memory_space<smem>>
    %c3 = arith.constant 3 : index
    %149 = memref.load %arg9[%c3] : memref<98xf32, #tpu.memory_space<smem>>
    %150 = vector.extract_strided_slice %147 {offsets = [0, 0], sizes = [1, 256], strides = [1, 1]} : vector<2x256xf32> to vector<1x256xf32>
    %151 = vector.broadcast %148 : f32 to vector<1x256xf32>
    %152 = arith.mulf %151, %150 : vector<1x256xf32>
    %153 = arith.addf %143, %152 : vector<1x256xf32>
    %154 = vector.extract_strided_slice %147 {offsets = [1, 0], sizes = [1, 256], strides = [1, 1]} : vector<2x256xf32> to vector<1x256xf32>
    %155 = vector.broadcast %149 : f32 to vector<1x256xf32>
    %156 = arith.mulf %155, %154 : vector<1x256xf32>
    %157 = arith.addf %153, %156 : vector<1x256xf32>
    %c0_123 = arith.constant 0 : index
    %c79 = arith.constant 79 : index
    %158 = vector.load %arg13[%c0_123, %c79] : memref<2x512xf32, #tpu.memory_space<vmem>>, vector<2x256xf32>
    %159 = vector.extract_strided_slice %0 {offsets = [2, 0], sizes = [1, 256], strides = [1, 1]} : vector<7x256xf32> to vector<1x256xf32>
    %160 = vector.broadcast %159 : vector<1x256xf32> to vector<2x256xf32>
    %161 = arith.mulf %158, %160 : vector<2x256xf32>
    %c4 = arith.constant 4 : index
    %162 = memref.load %arg9[%c4] : memref<98xf32, #tpu.memory_space<smem>>
    %c5 = arith.constant 5 : index
    %163 = memref.load %arg9[%c5] : memref<98xf32, #tpu.memory_space<smem>>
    %164 = vector.extract_strided_slice %161 {offsets = [0, 0], sizes = [1, 256], strides = [1, 1]} : vector<2x256xf32> to vector<1x256xf32>
    %165 = vector.broadcast %162 : f32 to vector<1x256xf32>
    %166 = arith.mulf %165, %164 : vector<1x256xf32>
    %167 = arith.addf %157, %166 : vector<1x256xf32>
    %168 = vector.extract_strided_slice %161 {offsets = [1, 0], sizes = [1, 256], strides = [1, 1]} : vector<2x256xf32> to vector<1x256xf32>
    %169 = vector.broadcast %163 : f32 to vector<1x256xf32>
    %170 = arith.mulf %169, %168 : vector<1x256xf32>
    %171 = arith.addf %167, %170 : vector<1x256xf32>
    %c0_124 = arith.constant 0 : index
    %c80_125 = arith.constant 80 : index
    %172 = vector.load %arg13[%c0_124, %c80_125] : memref<2x512xf32, #tpu.memory_space<vmem>>, vector<2x256xf32>
    %c6 = arith.constant 6 : index
    %173 = memref.load %arg9[%c6] : memref<98xf32, #tpu.memory_space<smem>>
    %c7 = arith.constant 7 : index
    %174 = memref.load %arg9[%c7] : memref<98xf32, #tpu.memory_space<smem>>
    %175 = vector.extract_strided_slice %172 {offsets = [0, 0], sizes = [1, 256], strides = [1, 1]} : vector<2x256xf32> to vector<1x256xf32>
    %176 = vector.broadcast %173 : f32 to vector<1x256xf32>
    %177 = arith.mulf %176, %175 : vector<1x256xf32>
    %178 = arith.addf %171, %177 : vector<1x256xf32>
    %179 = vector.extract_strided_slice %172 {offsets = [1, 0], sizes = [1, 256], strides = [1, 1]} : vector<2x256xf32> to vector<1x256xf32>
    %180 = vector.broadcast %174 : f32 to vector<1x256xf32>
    %181 = arith.mulf %180, %179 : vector<1x256xf32>
    %182 = arith.addf %178, %181 : vector<1x256xf32>
    %c0_126 = arith.constant 0 : index
    %c81 = arith.constant 81 : index
    %183 = vector.load %arg13[%c0_126, %c81] : memref<2x512xf32, #tpu.memory_space<vmem>>, vector<2x256xf32>
    %184 = vector.extract_strided_slice %0 {offsets = [4, 0], sizes = [1, 256], strides = [1, 1]} : vector<7x256xf32> to vector<1x256xf32>
    %185 = vector.broadcast %184 : vector<1x256xf32> to vector<2x256xf32>
    %186 = arith.mulf %183, %185 : vector<2x256xf32>
    %c8 = arith.constant 8 : index
    %187 = memref.load %arg9[%c8] : memref<98xf32, #tpu.memory_space<smem>>
    %c9 = arith.constant 9 : index
    %188 = memref.load %arg9[%c9] : memref<98xf32, #tpu.memory_space<smem>>
    %189 = vector.extract_strided_slice %186 {offsets = [0, 0], sizes = [1, 256], strides = [1, 1]} : vector<2x256xf32> to vector<1x256xf32>
    %190 = vector.broadcast %187 : f32 to vector<1x256xf32>
    %191 = arith.mulf %190, %189 : vector<1x256xf32>
    %192 = arith.addf %182, %191 : vector<1x256xf32>
    %193 = vector.extract_strided_slice %186 {offsets = [1, 0], sizes = [1, 256], strides = [1, 1]} : vector<2x256xf32> to vector<1x256xf32>
    %194 = vector.broadcast %188 : f32 to vector<1x256xf32>
    %195 = arith.mulf %194, %193 : vector<1x256xf32>
    %196 = arith.addf %192, %195 : vector<1x256xf32>
    %c0_127 = arith.constant 0 : index
    %c82 = arith.constant 82 : index
    %197 = vector.load %arg13[%c0_127, %c82] : memref<2x512xf32, #tpu.memory_space<vmem>>, vector<2x256xf32>
    %198 = vector.extract_strided_slice %0 {offsets = [5, 0], sizes = [1, 256], strides = [1, 1]} : vector<7x256xf32> to vector<1x256xf32>
    %199 = vector.broadcast %198 : vector<1x256xf32> to vector<2x256xf32>
    %200 = arith.mulf %197, %199 : vector<2x256xf32>
    %c10 = arith.constant 10 : index
    %201 = memref.load %arg9[%c10] : memref<98xf32, #tpu.memory_space<smem>>
    %c11 = arith.constant 11 : index
    %202 = memref.load %arg9[%c11] : memref<98xf32, #tpu.memory_space<smem>>
    %203 = vector.extract_strided_slice %200 {offsets = [0, 0], sizes = [1, 256], strides = [1, 1]} : vector<2x256xf32> to vector<1x256xf32>
    %204 = vector.broadcast %201 : f32 to vector<1x256xf32>
    %205 = arith.mulf %204, %203 : vector<1x256xf32>
    %206 = arith.addf %196, %205 : vector<1x256xf32>
    %207 = vector.extract_strided_slice %200 {offsets = [1, 0], sizes = [1, 256], strides = [1, 1]} : vector<2x256xf32> to vector<1x256xf32>
    %208 = vector.broadcast %202 : f32 to vector<1x256xf32>
    %209 = arith.mulf %208, %207 : vector<1x256xf32>
    %210 = arith.addf %206, %209 : vector<1x256xf32>
    %c0_128 = arith.constant 0 : index
    %c83 = arith.constant 83 : index
    %211 = vector.load %arg13[%c0_128, %c83] : memref<2x512xf32, #tpu.memory_space<vmem>>, vector<2x256xf32>
    %212 = vector.extract_strided_slice %0 {offsets = [6, 0], sizes = [1, 256], strides = [1, 1]} : vector<7x256xf32> to vector<1x256xf32>
    %213 = vector.broadcast %212 : vector<1x256xf32> to vector<2x256xf32>
    %214 = arith.mulf %211, %213 : vector<2x256xf32>
    %c12 = arith.constant 12 : index
    %215 = memref.load %arg9[%c12] : memref<98xf32, #tpu.memory_space<smem>>
    %c13 = arith.constant 13 : index
    %216 = memref.load %arg9[%c13] : memref<98xf32, #tpu.memory_space<smem>>
    %217 = vector.extract_strided_slice %214 {offsets = [0, 0], sizes = [1, 256], strides = [1, 1]} : vector<2x256xf32> to vector<1x256xf32>
    %218 = vector.broadcast %215 : f32 to vector<1x256xf32>
    %219 = arith.mulf %218, %217 : vector<1x256xf32>
    %220 = arith.addf %210, %219 : vector<1x256xf32>
    %221 = vector.extract_strided_slice %214 {offsets = [1, 0], sizes = [1, 256], strides = [1, 1]} : vector<2x256xf32> to vector<1x256xf32>
    %222 = vector.broadcast %216 : f32 to vector<1x256xf32>
    %223 = arith.mulf %222, %221 : vector<1x256xf32>
    %224 = arith.addf %220, %223 : vector<1x256xf32>
    %c0_129 = arith.constant 0 : index
    %c93 = arith.constant 93 : index
    %225 = vector.load %arg13[%c0_129, %c93] : memref<2x512xf32, #tpu.memory_space<vmem>>, vector<2x256xf32>
    %226 = vector.extract_strided_slice %0 {offsets = [0, 0], sizes = [1, 256], strides = [1, 1]} : vector<7x256xf32> to vector<1x256xf32>
    %227 = vector.broadcast %226 : vector<1x256xf32> to vector<2x256xf32>
    %228 = arith.mulf %225, %227 : vector<2x256xf32>
    %c14 = arith.constant 14 : index
    %229 = memref.load %arg9[%c14] : memref<98xf32, #tpu.memory_space<smem>>
    %c15 = arith.constant 15 : index
    %230 = memref.load %arg9[%c15] : memref<98xf32, #tpu.memory_space<smem>>
    %231 = vector.extract_strided_slice %228 {offsets = [0, 0], sizes = [1, 256], strides = [1, 1]} : vector<2x256xf32> to vector<1x256xf32>
    %232 = vector.broadcast %229 : f32 to vector<1x256xf32>
    %233 = arith.mulf %232, %231 : vector<1x256xf32>
    %234 = arith.addf %224, %233 : vector<1x256xf32>
    %235 = vector.extract_strided_slice %228 {offsets = [1, 0], sizes = [1, 256], strides = [1, 1]} : vector<2x256xf32> to vector<1x256xf32>
    %236 = vector.broadcast %230 : f32 to vector<1x256xf32>
    %237 = arith.mulf %236, %235 : vector<1x256xf32>
    %238 = arith.addf %234, %237 : vector<1x256xf32>
    %c0_130 = arith.constant 0 : index
    %c94 = arith.constant 94 : index
    %239 = vector.load %arg13[%c0_130, %c94] : memref<2x512xf32, #tpu.memory_space<vmem>>, vector<2x256xf32>
    %240 = vector.extract_strided_slice %0 {offsets = [1, 0], sizes = [1, 256], strides = [1, 1]} : vector<7x256xf32> to vector<1x256xf32>
    %241 = vector.broadcast %240 : vector<1x256xf32> to vector<2x256xf32>
    %242 = arith.mulf %239, %241 : vector<2x256xf32>
    %c16_131 = arith.constant 16 : index
    %243 = memref.load %arg9[%c16_131] : memref<98xf32, #tpu.memory_space<smem>>
    %c17 = arith.constant 17 : index
    %244 = memref.load %arg9[%c17] : memref<98xf32, #tpu.memory_space<smem>>
    %245 = vector.extract_strided_slice %242 {offsets = [0, 0], sizes = [1, 256], strides = [1, 1]} : vector<2x256xf32> to vector<1x256xf32>
    %246 = vector.broadcast %243 : f32 to vector<1x256xf32>
    %247 = arith.mulf %246, %245 : vector<1x256xf32>
    %248 = arith.addf %238, %247 : vector<1x256xf32>
    %249 = vector.extract_strided_slice %242 {offsets = [1, 0], sizes = [1, 256], strides = [1, 1]} : vector<2x256xf32> to vector<1x256xf32>
    %250 = vector.broadcast %244 : f32 to vector<1x256xf32>
    %251 = arith.mulf %250, %249 : vector<1x256xf32>
    %252 = arith.addf %248, %251 : vector<1x256xf32>
    %c0_132 = arith.constant 0 : index
    %c95 = arith.constant 95 : index
    %253 = vector.load %arg13[%c0_132, %c95] : memref<2x512xf32, #tpu.memory_space<vmem>>, vector<2x256xf32>
    %254 = vector.extract_strided_slice %0 {offsets = [2, 0], sizes = [1, 256], strides = [1, 1]} : vector<7x256xf32> to vector<1x256xf32>
    %255 = vector.broadcast %254 : vector<1x256xf32> to vector<2x256xf32>
    %256 = arith.mulf %253, %255 : vector<2x256xf32>
    %c18 = arith.constant 18 : index
    %257 = memref.load %arg9[%c18] : memref<98xf32, #tpu.memory_space<smem>>
    %c19 = arith.constant 19 : index
    %258 = memref.load %arg9[%c19] : memref<98xf32, #tpu.memory_space<smem>>
    %259 = vector.extract_strided_slice %256 {offsets = [0, 0], sizes = [1, 256], strides = [1, 1]} : vector<2x256xf32> to vector<1x256xf32>
    %260 = vector.broadcast %257 : f32 to vector<1x256xf32>
    %261 = arith.mulf %260, %259 : vector<1x256xf32>
    %262 = arith.addf %252, %261 : vector<1x256xf32>
    %263 = vector.extract_strided_slice %256 {offsets = [1, 0], sizes = [1, 256], strides = [1, 1]} : vector<2x256xf32> to vector<1x256xf32>
    %264 = vector.broadcast %258 : f32 to vector<1x256xf32>
    %265 = arith.mulf %264, %263 : vector<1x256xf32>
    %266 = arith.addf %262, %265 : vector<1x256xf32>
    %c0_133 = arith.constant 0 : index
    %c96_134 = arith.constant 96 : index
    %267 = vector.load %arg13[%c0_133, %c96_134] : memref<2x512xf32, #tpu.memory_space<vmem>>, vector<2x256xf32>
    %c20 = arith.constant 20 : index
    %268 = memref.load %arg9[%c20] : memref<98xf32, #tpu.memory_space<smem>>
    %c21 = arith.constant 21 : index
    %269 = memref.load %arg9[%c21] : memref<98xf32, #tpu.memory_space<smem>>
    %270 = vector.extract_strided_slice %267 {offsets = [0, 0], sizes = [1, 256], strides = [1, 1]} : vector<2x256xf32> to vector<1x256xf32>
    %271 = vector.broadcast %268 : f32 to vector<1x256xf32>
    %272 = arith.mulf %271, %270 : vector<1x256xf32>
    %273 = arith.addf %266, %272 : vector<1x256xf32>
    %274 = vector.extract_strided_slice %267 {offsets = [1, 0], sizes = [1, 256], strides = [1, 1]} : vector<2x256xf32> to vector<1x256xf32>
    %275 = vector.broadcast %269 : f32 to vector<1x256xf32>
    %276 = arith.mulf %275, %274 : vector<1x256xf32>
    %277 = arith.addf %273, %276 : vector<1x256xf32>
    %c0_135 = arith.constant 0 : index
    %c97 = arith.constant 97 : index
    %278 = vector.load %arg13[%c0_135, %c97] : memref<2x512xf32, #tpu.memory_space<vmem>>, vector<2x256xf32>
    %279 = vector.extract_strided_slice %0 {offsets = [4, 0], sizes = [1, 256], strides = [1, 1]} : vector<7x256xf32> to vector<1x256xf32>
    %280 = vector.broadcast %279 : vector<1x256xf32> to vector<2x256xf32>
    %281 = arith.mulf %278, %280 : vector<2x256xf32>
    %c22 = arith.constant 22 : index
    %282 = memref.load %arg9[%c22] : memref<98xf32, #tpu.memory_space<smem>>
    %c23 = arith.constant 23 : index
    %283 = memref.load %arg9[%c23] : memref<98xf32, #tpu.memory_space<smem>>
    %284 = vector.extract_strided_slice %281 {offsets = [0, 0], sizes = [1, 256], strides = [1, 1]} : vector<2x256xf32> to vector<1x256xf32>
    %285 = vector.broadcast %282 : f32 to vector<1x256xf32>
    %286 = arith.mulf %285, %284 : vector<1x256xf32>
    %287 = arith.addf %277, %286 : vector<1x256xf32>
    %288 = vector.extract_strided_slice %281 {offsets = [1, 0], sizes = [1, 256], strides = [1, 1]} : vector<2x256xf32> to vector<1x256xf32>
    %289 = vector.broadcast %283 : f32 to vector<1x256xf32>
    %290 = arith.mulf %289, %288 : vector<1x256xf32>
    %291 = arith.addf %287, %290 : vector<1x256xf32>
    %c0_136 = arith.constant 0 : index
    %c98 = arith.constant 98 : index
    %292 = vector.load %arg13[%c0_136, %c98] : memref<2x512xf32, #tpu.memory_space<vmem>>, vector<2x256xf32>
    %293 = vector.extract_strided_slice %0 {offsets = [5, 0], sizes = [1, 256], strides = [1, 1]} : vector<7x256xf32> to vector<1x256xf32>
    %294 = vector.broadcast %293 : vector<1x256xf32> to vector<2x256xf32>
    %295 = arith.mulf %292, %294 : vector<2x256xf32>
    %c24 = arith.constant 24 : index
    %296 = memref.load %arg9[%c24] : memref<98xf32, #tpu.memory_space<smem>>
    %c25 = arith.constant 25 : index
    %297 = memref.load %arg9[%c25] : memref<98xf32, #tpu.memory_space<smem>>
    %298 = vector.extract_strided_slice %295 {offsets = [0, 0], sizes = [1, 256], strides = [1, 1]} : vector<2x256xf32> to vector<1x256xf32>
    %299 = vector.broadcast %296 : f32 to vector<1x256xf32>
    %300 = arith.mulf %299, %298 : vector<1x256xf32>
    %301 = arith.addf %291, %300 : vector<1x256xf32>
    %302 = vector.extract_strided_slice %295 {offsets = [1, 0], sizes = [1, 256], strides = [1, 1]} : vector<2x256xf32> to vector<1x256xf32>
    %303 = vector.broadcast %297 : f32 to vector<1x256xf32>
    %304 = arith.mulf %303, %302 : vector<1x256xf32>
    %305 = arith.addf %301, %304 : vector<1x256xf32>
    %c0_137 = arith.constant 0 : index
    %c99 = arith.constant 99 : index
    %306 = vector.load %arg13[%c0_137, %c99] : memref<2x512xf32, #tpu.memory_space<vmem>>, vector<2x256xf32>
    %307 = vector.extract_strided_slice %0 {offsets = [6, 0], sizes = [1, 256], strides = [1, 1]} : vector<7x256xf32> to vector<1x256xf32>
    %308 = vector.broadcast %307 : vector<1x256xf32> to vector<2x256xf32>
    %309 = arith.mulf %306, %308 : vector<2x256xf32>
    %c26 = arith.constant 26 : index
    %310 = memref.load %arg9[%c26] : memref<98xf32, #tpu.memory_space<smem>>
    %c27 = arith.constant 27 : index
    %311 = memref.load %arg9[%c27] : memref<98xf32, #tpu.memory_space<smem>>
    %312 = vector.extract_strided_slice %309 {offsets = [0, 0], sizes = [1, 256], strides = [1, 1]} : vector<2x256xf32> to vector<1x256xf32>
    %313 = vector.broadcast %310 : f32 to vector<1x256xf32>
    %314 = arith.mulf %313, %312 : vector<1x256xf32>
    %315 = arith.addf %305, %314 : vector<1x256xf32>
    %316 = vector.extract_strided_slice %309 {offsets = [1, 0], sizes = [1, 256], strides = [1, 1]} : vector<2x256xf32> to vector<1x256xf32>
    %317 = vector.broadcast %311 : f32 to vector<1x256xf32>
    %318 = arith.mulf %317, %316 : vector<1x256xf32>
    %319 = arith.addf %315, %318 : vector<1x256xf32>
    %c0_138 = arith.constant 0 : index
    %c109 = arith.constant 109 : index
    %320 = vector.load %arg13[%c0_138, %c109] : memref<2x512xf32, #tpu.memory_space<vmem>>, vector<2x256xf32>
    %321 = vector.extract_strided_slice %0 {offsets = [0, 0], sizes = [1, 256], strides = [1, 1]} : vector<7x256xf32> to vector<1x256xf32>
    %322 = vector.broadcast %321 : vector<1x256xf32> to vector<2x256xf32>
    %323 = arith.mulf %320, %322 : vector<2x256xf32>
    %c28 = arith.constant 28 : index
    %324 = memref.load %arg9[%c28] : memref<98xf32, #tpu.memory_space<smem>>
    %c29 = arith.constant 29 : index
    %325 = memref.load %arg9[%c29] : memref<98xf32, #tpu.memory_space<smem>>
    %326 = vector.extract_strided_slice %323 {offsets = [0, 0], sizes = [1, 256], strides = [1, 1]} : vector<2x256xf32> to vector<1x256xf32>
    %327 = vector.broadcast %324 : f32 to vector<1x256xf32>
    %328 = arith.mulf %327, %326 : vector<1x256xf32>
    %329 = arith.addf %319, %328 : vector<1x256xf32>
    %330 = vector.extract_strided_slice %323 {offsets = [1, 0], sizes = [1, 256], strides = [1, 1]} : vector<2x256xf32> to vector<1x256xf32>
    %331 = vector.broadcast %325 : f32 to vector<1x256xf32>
    %332 = arith.mulf %331, %330 : vector<1x256xf32>
    %333 = arith.addf %329, %332 : vector<1x256xf32>
    %c0_139 = arith.constant 0 : index
    %c110 = arith.constant 110 : index
    %334 = vector.load %arg13[%c0_139, %c110] : memref<2x512xf32, #tpu.memory_space<vmem>>, vector<2x256xf32>
    %335 = vector.extract_strided_slice %0 {offsets = [1, 0], sizes = [1, 256], strides = [1, 1]} : vector<7x256xf32> to vector<1x256xf32>
    %336 = vector.broadcast %335 : vector<1x256xf32> to vector<2x256xf32>
    %337 = arith.mulf %334, %336 : vector<2x256xf32>
    %c30 = arith.constant 30 : index
    %338 = memref.load %arg9[%c30] : memref<98xf32, #tpu.memory_space<smem>>
    %c31 = arith.constant 31 : index
    %339 = memref.load %arg9[%c31] : memref<98xf32, #tpu.memory_space<smem>>
    %340 = vector.extract_strided_slice %337 {offsets = [0, 0], sizes = [1, 256], strides = [1, 1]} : vector<2x256xf32> to vector<1x256xf32>
    %341 = vector.broadcast %338 : f32 to vector<1x256xf32>
    %342 = arith.mulf %341, %340 : vector<1x256xf32>
    %343 = arith.addf %333, %342 : vector<1x256xf32>
    %344 = vector.extract_strided_slice %337 {offsets = [1, 0], sizes = [1, 256], strides = [1, 1]} : vector<2x256xf32> to vector<1x256xf32>
    %345 = vector.broadcast %339 : f32 to vector<1x256xf32>
    %346 = arith.mulf %345, %344 : vector<1x256xf32>
    %347 = arith.addf %343, %346 : vector<1x256xf32>
    %c0_140 = arith.constant 0 : index
    %c111_141 = arith.constant 111 : index
    %348 = vector.load %arg13[%c0_140, %c111_141] : memref<2x512xf32, #tpu.memory_space<vmem>>, vector<2x256xf32>
    %349 = vector.extract_strided_slice %0 {offsets = [2, 0], sizes = [1, 256], strides = [1, 1]} : vector<7x256xf32> to vector<1x256xf32>
    %350 = vector.broadcast %349 : vector<1x256xf32> to vector<2x256xf32>
    %351 = arith.mulf %348, %350 : vector<2x256xf32>
    %c32_142 = arith.constant 32 : index
    %352 = memref.load %arg9[%c32_142] : memref<98xf32, #tpu.memory_space<smem>>
    %c33 = arith.constant 33 : index
    %353 = memref.load %arg9[%c33] : memref<98xf32, #tpu.memory_space<smem>>
    %354 = vector.extract_strided_slice %351 {offsets = [0, 0], sizes = [1, 256], strides = [1, 1]} : vector<2x256xf32> to vector<1x256xf32>
    %355 = vector.broadcast %352 : f32 to vector<1x256xf32>
    %356 = arith.mulf %355, %354 : vector<1x256xf32>
    %357 = arith.addf %347, %356 : vector<1x256xf32>
    %358 = vector.extract_strided_slice %351 {offsets = [1, 0], sizes = [1, 256], strides = [1, 1]} : vector<2x256xf32> to vector<1x256xf32>
    %359 = vector.broadcast %353 : f32 to vector<1x256xf32>
    %360 = arith.mulf %359, %358 : vector<1x256xf32>
    %361 = arith.addf %357, %360 : vector<1x256xf32>
    %c0_143 = arith.constant 0 : index
    %c112_144 = arith.constant 112 : index
    %362 = vector.load %arg13[%c0_143, %c112_144] : memref<2x512xf32, #tpu.memory_space<vmem>>, vector<2x256xf32>
    %c34 = arith.constant 34 : index
    %363 = memref.load %arg9[%c34] : memref<98xf32, #tpu.memory_space<smem>>
    %c35 = arith.constant 35 : index
    %364 = memref.load %arg9[%c35] : memref<98xf32, #tpu.memory_space<smem>>
    %365 = vector.extract_strided_slice %362 {offsets = [0, 0], sizes = [1, 256], strides = [1, 1]} : vector<2x256xf32> to vector<1x256xf32>
    %366 = vector.broadcast %363 : f32 to vector<1x256xf32>
    %367 = arith.mulf %366, %365 : vector<1x256xf32>
    %368 = arith.addf %361, %367 : vector<1x256xf32>
    %369 = vector.extract_strided_slice %362 {offsets = [1, 0], sizes = [1, 256], strides = [1, 1]} : vector<2x256xf32> to vector<1x256xf32>
    %370 = vector.broadcast %364 : f32 to vector<1x256xf32>
    %371 = arith.mulf %370, %369 : vector<1x256xf32>
    %372 = arith.addf %368, %371 : vector<1x256xf32>
    %c0_145 = arith.constant 0 : index
    %c113_146 = arith.constant 113 : index
    %373 = vector.load %arg13[%c0_145, %c113_146] : memref<2x512xf32, #tpu.memory_space<vmem>>, vector<2x256xf32>
    %374 = vector.extract_strided_slice %0 {offsets = [4, 0], sizes = [1, 256], strides = [1, 1]} : vector<7x256xf32> to vector<1x256xf32>
    %375 = vector.broadcast %374 : vector<1x256xf32> to vector<2x256xf32>
    %376 = arith.mulf %373, %375 : vector<2x256xf32>
    %c36 = arith.constant 36 : index
    %377 = memref.load %arg9[%c36] : memref<98xf32, #tpu.memory_space<smem>>
    %c37 = arith.constant 37 : index
    %378 = memref.load %arg9[%c37] : memref<98xf32, #tpu.memory_space<smem>>
    %379 = vector.extract_strided_slice %376 {offsets = [0, 0], sizes = [1, 256], strides = [1, 1]} : vector<2x256xf32> to vector<1x256xf32>
    %380 = vector.broadcast %377 : f32 to vector<1x256xf32>
    %381 = arith.mulf %380, %379 : vector<1x256xf32>
    %382 = arith.addf %372, %381 : vector<1x256xf32>
    %383 = vector.extract_strided_slice %376 {offsets = [1, 0], sizes = [1, 256], strides = [1, 1]} : vector<2x256xf32> to vector<1x256xf32>
    %384 = vector.broadcast %378 : f32 to vector<1x256xf32>
    %385 = arith.mulf %384, %383 : vector<1x256xf32>
    %386 = arith.addf %382, %385 : vector<1x256xf32>
    %c0_147 = arith.constant 0 : index
    %c114 = arith.constant 114 : index
    %387 = vector.load %arg13[%c0_147, %c114] : memref<2x512xf32, #tpu.memory_space<vmem>>, vector<2x256xf32>
    %388 = vector.extract_strided_slice %0 {offsets = [5, 0], sizes = [1, 256], strides = [1, 1]} : vector<7x256xf32> to vector<1x256xf32>
    %389 = vector.broadcast %388 : vector<1x256xf32> to vector<2x256xf32>
    %390 = arith.mulf %387, %389 : vector<2x256xf32>
    %c38 = arith.constant 38 : index
    %391 = memref.load %arg9[%c38] : memref<98xf32, #tpu.memory_space<smem>>
    %c39 = arith.constant 39 : index
    %392 = memref.load %arg9[%c39] : memref<98xf32, #tpu.memory_space<smem>>
    %393 = vector.extract_strided_slice %390 {offsets = [0, 0], sizes = [1, 256], strides = [1, 1]} : vector<2x256xf32> to vector<1x256xf32>
    %394 = vector.broadcast %391 : f32 to vector<1x256xf32>
    %395 = arith.mulf %394, %393 : vector<1x256xf32>
    %396 = arith.addf %386, %395 : vector<1x256xf32>
    %397 = vector.extract_strided_slice %390 {offsets = [1, 0], sizes = [1, 256], strides = [1, 1]} : vector<2x256xf32> to vector<1x256xf32>
    %398 = vector.broadcast %392 : f32 to vector<1x256xf32>
    %399 = arith.mulf %398, %397 : vector<1x256xf32>
    %400 = arith.addf %396, %399 : vector<1x256xf32>
    %c0_148 = arith.constant 0 : index
    %c115 = arith.constant 115 : index
    %401 = vector.load %arg13[%c0_148, %c115] : memref<2x512xf32, #tpu.memory_space<vmem>>, vector<2x256xf32>
    %402 = vector.extract_strided_slice %0 {offsets = [6, 0], sizes = [1, 256], strides = [1, 1]} : vector<7x256xf32> to vector<1x256xf32>
    %403 = vector.broadcast %402 : vector<1x256xf32> to vector<2x256xf32>
    %404 = arith.mulf %401, %403 : vector<2x256xf32>
    %c40 = arith.constant 40 : index
    %405 = memref.load %arg9[%c40] : memref<98xf32, #tpu.memory_space<smem>>
    %c41 = arith.constant 41 : index
    %406 = memref.load %arg9[%c41] : memref<98xf32, #tpu.memory_space<smem>>
    %407 = vector.extract_strided_slice %404 {offsets = [0, 0], sizes = [1, 256], strides = [1, 1]} : vector<2x256xf32> to vector<1x256xf32>
    %408 = vector.broadcast %405 : f32 to vector<1x256xf32>
    %409 = arith.mulf %408, %407 : vector<1x256xf32>
    %410 = arith.addf %400, %409 : vector<1x256xf32>
    %411 = vector.extract_strided_slice %404 {offsets = [1, 0], sizes = [1, 256], strides = [1, 1]} : vector<2x256xf32> to vector<1x256xf32>
    %412 = vector.broadcast %406 : f32 to vector<1x256xf32>
    %413 = arith.mulf %412, %411 : vector<1x256xf32>
    %414 = arith.addf %410, %413 : vector<1x256xf32>
    %c0_149 = arith.constant 0 : index
    %c125 = arith.constant 125 : index
    %415 = vector.load %arg13[%c0_149, %c125] : memref<2x512xf32, #tpu.memory_space<vmem>>, vector<2x256xf32>
    %416 = vector.extract_strided_slice %0 {offsets = [0, 0], sizes = [1, 256], strides = [1, 1]} : vector<7x256xf32> to vector<1x256xf32>
    %417 = vector.broadcast %416 : vector<1x256xf32> to vector<2x256xf32>
    %418 = arith.mulf %415, %417 : vector<2x256xf32>
    %c42 = arith.constant 42 : index
    %419 = memref.load %arg9[%c42] : memref<98xf32, #tpu.memory_space<smem>>
    %c43 = arith.constant 43 : index
    %420 = memref.load %arg9[%c43] : memref<98xf32, #tpu.memory_space<smem>>
    %421 = vector.extract_strided_slice %418 {offsets = [0, 0], sizes = [1, 256], strides = [1, 1]} : vector<2x256xf32> to vector<1x256xf32>
    %422 = vector.broadcast %419 : f32 to vector<1x256xf32>
    %423 = arith.mulf %422, %421 : vector<1x256xf32>
    %424 = arith.addf %414, %423 : vector<1x256xf32>
    %425 = vector.extract_strided_slice %418 {offsets = [1, 0], sizes = [1, 256], strides = [1, 1]} : vector<2x256xf32> to vector<1x256xf32>
    %426 = vector.broadcast %420 : f32 to vector<1x256xf32>
    %427 = arith.mulf %426, %425 : vector<1x256xf32>
    %428 = arith.addf %424, %427 : vector<1x256xf32>
    %c0_150 = arith.constant 0 : index
    %c126 = arith.constant 126 : index
    %429 = vector.load %arg13[%c0_150, %c126] : memref<2x512xf32, #tpu.memory_space<vmem>>, vector<2x256xf32>
    %430 = vector.extract_strided_slice %0 {offsets = [1, 0], sizes = [1, 256], strides = [1, 1]} : vector<7x256xf32> to vector<1x256xf32>
    %431 = vector.broadcast %430 : vector<1x256xf32> to vector<2x256xf32>
    %432 = arith.mulf %429, %431 : vector<2x256xf32>
    %c44 = arith.constant 44 : index
    %433 = memref.load %arg9[%c44] : memref<98xf32, #tpu.memory_space<smem>>
    %c45 = arith.constant 45 : index
    %434 = memref.load %arg9[%c45] : memref<98xf32, #tpu.memory_space<smem>>
    %435 = vector.extract_strided_slice %432 {offsets = [0, 0], sizes = [1, 256], strides = [1, 1]} : vector<2x256xf32> to vector<1x256xf32>
    %436 = vector.broadcast %433 : f32 to vector<1x256xf32>
    %437 = arith.mulf %436, %435 : vector<1x256xf32>
    %438 = arith.addf %428, %437 : vector<1x256xf32>
    %439 = vector.extract_strided_slice %432 {offsets = [1, 0], sizes = [1, 256], strides = [1, 1]} : vector<2x256xf32> to vector<1x256xf32>
    %440 = vector.broadcast %434 : f32 to vector<1x256xf32>
    %441 = arith.mulf %440, %439 : vector<1x256xf32>
    %442 = arith.addf %438, %441 : vector<1x256xf32>
    %c0_151 = arith.constant 0 : index
    %c127_152 = arith.constant 127 : index
    %443 = vector.load %arg13[%c0_151, %c127_152] : memref<2x512xf32, #tpu.memory_space<vmem>>, vector<2x256xf32>
    %444 = vector.extract_strided_slice %0 {offsets = [2, 0], sizes = [1, 256], strides = [1, 1]} : vector<7x256xf32> to vector<1x256xf32>
    %445 = vector.broadcast %444 : vector<1x256xf32> to vector<2x256xf32>
    %446 = arith.mulf %443, %445 : vector<2x256xf32>
    %c46 = arith.constant 46 : index
    %447 = memref.load %arg9[%c46] : memref<98xf32, #tpu.memory_space<smem>>
    %c47 = arith.constant 47 : index
    %448 = memref.load %arg9[%c47] : memref<98xf32, #tpu.memory_space<smem>>
    %449 = vector.extract_strided_slice %446 {offsets = [0, 0], sizes = [1, 256], strides = [1, 1]} : vector<2x256xf32> to vector<1x256xf32>
    %450 = vector.broadcast %447 : f32 to vector<1x256xf32>
    %451 = arith.mulf %450, %449 : vector<1x256xf32>
    %452 = arith.addf %442, %451 : vector<1x256xf32>
    %453 = vector.extract_strided_slice %446 {offsets = [1, 0], sizes = [1, 256], strides = [1, 1]} : vector<2x256xf32> to vector<1x256xf32>
    %454 = vector.broadcast %448 : f32 to vector<1x256xf32>
    %455 = arith.mulf %454, %453 : vector<1x256xf32>
    %456 = arith.addf %452, %455 : vector<1x256xf32>
    %c0_153 = arith.constant 0 : index
    %c128_154 = arith.constant 128 : index
    %457 = vector.load %arg13[%c0_153, %c128_154] : memref<2x512xf32, #tpu.memory_space<vmem>>, vector<2x256xf32>
    %c48_155 = arith.constant 48 : index
    %458 = memref.load %arg9[%c48_155] : memref<98xf32, #tpu.memory_space<smem>>
    %c49 = arith.constant 49 : index
    %459 = memref.load %arg9[%c49] : memref<98xf32, #tpu.memory_space<smem>>
    %460 = vector.extract_strided_slice %457 {offsets = [0, 0], sizes = [1, 256], strides = [1, 1]} : vector<2x256xf32> to vector<1x256xf32>
    %461 = vector.broadcast %458 : f32 to vector<1x256xf32>
    %462 = arith.mulf %461, %460 : vector<1x256xf32>
    %463 = arith.addf %456, %462 : vector<1x256xf32>
    %464 = vector.extract_strided_slice %457 {offsets = [1, 0], sizes = [1, 256], strides = [1, 1]} : vector<2x256xf32> to vector<1x256xf32>
    %465 = vector.broadcast %459 : f32 to vector<1x256xf32>
    %466 = arith.mulf %465, %464 : vector<1x256xf32>
    %467 = arith.addf %463, %466 : vector<1x256xf32>
    %c0_156 = arith.constant 0 : index
    %c129_157 = arith.constant 129 : index
    %468 = vector.load %arg13[%c0_156, %c129_157] : memref<2x512xf32, #tpu.memory_space<vmem>>, vector<2x256xf32>
    %469 = vector.extract_strided_slice %0 {offsets = [4, 0], sizes = [1, 256], strides = [1, 1]} : vector<7x256xf32> to vector<1x256xf32>
    %470 = vector.broadcast %469 : vector<1x256xf32> to vector<2x256xf32>
    %471 = arith.mulf %468, %470 : vector<2x256xf32>
    %c50 = arith.constant 50 : index
    %472 = memref.load %arg9[%c50] : memref<98xf32, #tpu.memory_space<smem>>
    %c51 = arith.constant 51 : index
    %473 = memref.load %arg9[%c51] : memref<98xf32, #tpu.memory_space<smem>>
    %474 = vector.extract_strided_slice %471 {offsets = [0, 0], sizes = [1, 256], strides = [1, 1]} : vector<2x256xf32> to vector<1x256xf32>
    %475 = vector.broadcast %472 : f32 to vector<1x256xf32>
    %476 = arith.mulf %475, %474 : vector<1x256xf32>
    %477 = arith.addf %467, %476 : vector<1x256xf32>
    %478 = vector.extract_strided_slice %471 {offsets = [1, 0], sizes = [1, 256], strides = [1, 1]} : vector<2x256xf32> to vector<1x256xf32>
    %479 = vector.broadcast %473 : f32 to vector<1x256xf32>
    %480 = arith.mulf %479, %478 : vector<1x256xf32>
    %481 = arith.addf %477, %480 : vector<1x256xf32>
    %c0_158 = arith.constant 0 : index
    %c130 = arith.constant 130 : index
    %482 = vector.load %arg13[%c0_158, %c130] : memref<2x512xf32, #tpu.memory_space<vmem>>, vector<2x256xf32>
    %483 = vector.extract_strided_slice %0 {offsets = [5, 0], sizes = [1, 256], strides = [1, 1]} : vector<7x256xf32> to vector<1x256xf32>
    %484 = vector.broadcast %483 : vector<1x256xf32> to vector<2x256xf32>
    %485 = arith.mulf %482, %484 : vector<2x256xf32>
    %c52 = arith.constant 52 : index
    %486 = memref.load %arg9[%c52] : memref<98xf32, #tpu.memory_space<smem>>
    %c53 = arith.constant 53 : index
    %487 = memref.load %arg9[%c53] : memref<98xf32, #tpu.memory_space<smem>>
    %488 = vector.extract_strided_slice %485 {offsets = [0, 0], sizes = [1, 256], strides = [1, 1]} : vector<2x256xf32> to vector<1x256xf32>
    %489 = vector.broadcast %486 : f32 to vector<1x256xf32>
    %490 = arith.mulf %489, %488 : vector<1x256xf32>
    %491 = arith.addf %481, %490 : vector<1x256xf32>
    %492 = vector.extract_strided_slice %485 {offsets = [1, 0], sizes = [1, 256], strides = [1, 1]} : vector<2x256xf32> to vector<1x256xf32>
    %493 = vector.broadcast %487 : f32 to vector<1x256xf32>
    %494 = arith.mulf %493, %492 : vector<1x256xf32>
    %495 = arith.addf %491, %494 : vector<1x256xf32>
    %c0_159 = arith.constant 0 : index
    %c131 = arith.constant 131 : index
    %496 = vector.load %arg13[%c0_159, %c131] : memref<2x512xf32, #tpu.memory_space<vmem>>, vector<2x256xf32>
    %497 = vector.extract_strided_slice %0 {offsets = [6, 0], sizes = [1, 256], strides = [1, 1]} : vector<7x256xf32> to vector<1x256xf32>
    %498 = vector.broadcast %497 : vector<1x256xf32> to vector<2x256xf32>
    %499 = arith.mulf %496, %498 : vector<2x256xf32>
    %c54 = arith.constant 54 : index
    %500 = memref.load %arg9[%c54] : memref<98xf32, #tpu.memory_space<smem>>
    %c55 = arith.constant 55 : index
    %501 = memref.load %arg9[%c55] : memref<98xf32, #tpu.memory_space<smem>>
    %502 = vector.extract_strided_slice %499 {offsets = [0, 0], sizes = [1, 256], strides = [1, 1]} : vector<2x256xf32> to vector<1x256xf32>
    %503 = vector.broadcast %500 : f32 to vector<1x256xf32>
    %504 = arith.mulf %503, %502 : vector<1x256xf32>
    %505 = arith.addf %495, %504 : vector<1x256xf32>
    %506 = vector.extract_strided_slice %499 {offsets = [1, 0], sizes = [1, 256], strides = [1, 1]} : vector<2x256xf32> to vector<1x256xf32>
    %507 = vector.broadcast %501 : f32 to vector<1x256xf32>
    %508 = arith.mulf %507, %506 : vector<1x256xf32>
    %509 = arith.addf %505, %508 : vector<1x256xf32>
    %c0_160 = arith.constant 0 : index
    %c141 = arith.constant 141 : index
    %510 = vector.load %arg13[%c0_160, %c141] : memref<2x512xf32, #tpu.memory_space<vmem>>, vector<2x256xf32>
    %511 = vector.extract_strided_slice %0 {offsets = [0, 0], sizes = [1, 256], strides = [1, 1]} : vector<7x256xf32> to vector<1x256xf32>
    %512 = vector.broadcast %511 : vector<1x256xf32> to vector<2x256xf32>
    %513 = arith.mulf %510, %512 : vector<2x256xf32>
    %c56 = arith.constant 56 : index
    %514 = memref.load %arg9[%c56] : memref<98xf32, #tpu.memory_space<smem>>
    %c57 = arith.constant 57 : index
    %515 = memref.load %arg9[%c57] : memref<98xf32, #tpu.memory_space<smem>>
    %516 = vector.extract_strided_slice %513 {offsets = [0, 0], sizes = [1, 256], strides = [1, 1]} : vector<2x256xf32> to vector<1x256xf32>
    %517 = vector.broadcast %514 : f32 to vector<1x256xf32>
    %518 = arith.mulf %517, %516 : vector<1x256xf32>
    %519 = arith.addf %509, %518 : vector<1x256xf32>
    %520 = vector.extract_strided_slice %513 {offsets = [1, 0], sizes = [1, 256], strides = [1, 1]} : vector<2x256xf32> to vector<1x256xf32>
    %521 = vector.broadcast %515 : f32 to vector<1x256xf32>
    %522 = arith.mulf %521, %520 : vector<1x256xf32>
    %523 = arith.addf %519, %522 : vector<1x256xf32>
    %c0_161 = arith.constant 0 : index
    %c142 = arith.constant 142 : index
    %524 = vector.load %arg13[%c0_161, %c142] : memref<2x512xf32, #tpu.memory_space<vmem>>, vector<2x256xf32>
    %525 = vector.extract_strided_slice %0 {offsets = [1, 0], sizes = [1, 256], strides = [1, 1]} : vector<7x256xf32> to vector<1x256xf32>
    %526 = vector.broadcast %525 : vector<1x256xf32> to vector<2x256xf32>
    %527 = arith.mulf %524, %526 : vector<2x256xf32>
    %c58 = arith.constant 58 : index
    %528 = memref.load %arg9[%c58] : memref<98xf32, #tpu.memory_space<smem>>
    %c59 = arith.constant 59 : index
    %529 = memref.load %arg9[%c59] : memref<98xf32, #tpu.memory_space<smem>>
    %530 = vector.extract_strided_slice %527 {offsets = [0, 0], sizes = [1, 256], strides = [1, 1]} : vector<2x256xf32> to vector<1x256xf32>
    %531 = vector.broadcast %528 : f32 to vector<1x256xf32>
    %532 = arith.mulf %531, %530 : vector<1x256xf32>
    %533 = arith.addf %523, %532 : vector<1x256xf32>
    %534 = vector.extract_strided_slice %527 {offsets = [1, 0], sizes = [1, 256], strides = [1, 1]} : vector<2x256xf32> to vector<1x256xf32>
    %535 = vector.broadcast %529 : f32 to vector<1x256xf32>
    %536 = arith.mulf %535, %534 : vector<1x256xf32>
    %537 = arith.addf %533, %536 : vector<1x256xf32>
    %c0_162 = arith.constant 0 : index
    %c143_163 = arith.constant 143 : index
    %538 = vector.load %arg13[%c0_162, %c143_163] : memref<2x512xf32, #tpu.memory_space<vmem>>, vector<2x256xf32>
    %539 = vector.extract_strided_slice %0 {offsets = [2, 0], sizes = [1, 256], strides = [1, 1]} : vector<7x256xf32> to vector<1x256xf32>
    %540 = vector.broadcast %539 : vector<1x256xf32> to vector<2x256xf32>
    %541 = arith.mulf %538, %540 : vector<2x256xf32>
    %c60 = arith.constant 60 : index
    %542 = memref.load %arg9[%c60] : memref<98xf32, #tpu.memory_space<smem>>
    %c61 = arith.constant 61 : index
    %543 = memref.load %arg9[%c61] : memref<98xf32, #tpu.memory_space<smem>>
    %544 = vector.extract_strided_slice %541 {offsets = [0, 0], sizes = [1, 256], strides = [1, 1]} : vector<2x256xf32> to vector<1x256xf32>
    %545 = vector.broadcast %542 : f32 to vector<1x256xf32>
    %546 = arith.mulf %545, %544 : vector<1x256xf32>
    %547 = arith.addf %537, %546 : vector<1x256xf32>
    %548 = vector.extract_strided_slice %541 {offsets = [1, 0], sizes = [1, 256], strides = [1, 1]} : vector<2x256xf32> to vector<1x256xf32>
    %549 = vector.broadcast %543 : f32 to vector<1x256xf32>
    %550 = arith.mulf %549, %548 : vector<1x256xf32>
    %551 = arith.addf %547, %550 : vector<1x256xf32>
    %c0_164 = arith.constant 0 : index
    %c144_165 = arith.constant 144 : index
    %552 = vector.load %arg13[%c0_164, %c144_165] : memref<2x512xf32, #tpu.memory_space<vmem>>, vector<2x256xf32>
    %c62 = arith.constant 62 : index
    %553 = memref.load %arg9[%c62] : memref<98xf32, #tpu.memory_space<smem>>
    %c63 = arith.constant 63 : index
    %554 = memref.load %arg9[%c63] : memref<98xf32, #tpu.memory_space<smem>>
    %555 = vector.extract_strided_slice %552 {offsets = [0, 0], sizes = [1, 256], strides = [1, 1]} : vector<2x256xf32> to vector<1x256xf32>
    %556 = vector.broadcast %553 : f32 to vector<1x256xf32>
    %557 = arith.mulf %556, %555 : vector<1x256xf32>
    %558 = arith.addf %551, %557 : vector<1x256xf32>
    %559 = vector.extract_strided_slice %552 {offsets = [1, 0], sizes = [1, 256], strides = [1, 1]} : vector<2x256xf32> to vector<1x256xf32>
    %560 = vector.broadcast %554 : f32 to vector<1x256xf32>
    %561 = arith.mulf %560, %559 : vector<1x256xf32>
    %562 = arith.addf %558, %561 : vector<1x256xf32>
    %c0_166 = arith.constant 0 : index
    %c145_167 = arith.constant 145 : index
    %563 = vector.load %arg13[%c0_166, %c145_167] : memref<2x512xf32, #tpu.memory_space<vmem>>, vector<2x256xf32>
    %564 = vector.extract_strided_slice %0 {offsets = [4, 0], sizes = [1, 256], strides = [1, 1]} : vector<7x256xf32> to vector<1x256xf32>
    %565 = vector.broadcast %564 : vector<1x256xf32> to vector<2x256xf32>
    %566 = arith.mulf %563, %565 : vector<2x256xf32>
    %c64_168 = arith.constant 64 : index
    %567 = memref.load %arg9[%c64_168] : memref<98xf32, #tpu.memory_space<smem>>
    %c65 = arith.constant 65 : index
    %568 = memref.load %arg9[%c65] : memref<98xf32, #tpu.memory_space<smem>>
    %569 = vector.extract_strided_slice %566 {offsets = [0, 0], sizes = [1, 256], strides = [1, 1]} : vector<2x256xf32> to vector<1x256xf32>
    %570 = vector.broadcast %567 : f32 to vector<1x256xf32>
    %571 = arith.mulf %570, %569 : vector<1x256xf32>
    %572 = arith.addf %562, %571 : vector<1x256xf32>
    %573 = vector.extract_strided_slice %566 {offsets = [1, 0], sizes = [1, 256], strides = [1, 1]} : vector<2x256xf32> to vector<1x256xf32>
    %574 = vector.broadcast %568 : f32 to vector<1x256xf32>
    %575 = arith.mulf %574, %573 : vector<1x256xf32>
    %576 = arith.addf %572, %575 : vector<1x256xf32>
    %c0_169 = arith.constant 0 : index
    %c146 = arith.constant 146 : index
    %577 = vector.load %arg13[%c0_169, %c146] : memref<2x512xf32, #tpu.memory_space<vmem>>, vector<2x256xf32>
    %578 = vector.extract_strided_slice %0 {offsets = [5, 0], sizes = [1, 256], strides = [1, 1]} : vector<7x256xf32> to vector<1x256xf32>
    %579 = vector.broadcast %578 : vector<1x256xf32> to vector<2x256xf32>
    %580 = arith.mulf %577, %579 : vector<2x256xf32>
    %c66 = arith.constant 66 : index
    %581 = memref.load %arg9[%c66] : memref<98xf32, #tpu.memory_space<smem>>
    %c67 = arith.constant 67 : index
    %582 = memref.load %arg9[%c67] : memref<98xf32, #tpu.memory_space<smem>>
    %583 = vector.extract_strided_slice %580 {offsets = [0, 0], sizes = [1, 256], strides = [1, 1]} : vector<2x256xf32> to vector<1x256xf32>
    %584 = vector.broadcast %581 : f32 to vector<1x256xf32>
    %585 = arith.mulf %584, %583 : vector<1x256xf32>
    %586 = arith.addf %576, %585 : vector<1x256xf32>
    %587 = vector.extract_strided_slice %580 {offsets = [1, 0], sizes = [1, 256], strides = [1, 1]} : vector<2x256xf32> to vector<1x256xf32>
    %588 = vector.broadcast %582 : f32 to vector<1x256xf32>
    %589 = arith.mulf %588, %587 : vector<1x256xf32>
    %590 = arith.addf %586, %589 : vector<1x256xf32>
    %c0_170 = arith.constant 0 : index
    %c147 = arith.constant 147 : index
    %591 = vector.load %arg13[%c0_170, %c147] : memref<2x512xf32, #tpu.memory_space<vmem>>, vector<2x256xf32>
    %592 = vector.extract_strided_slice %0 {offsets = [6, 0], sizes = [1, 256], strides = [1, 1]} : vector<7x256xf32> to vector<1x256xf32>
    %593 = vector.broadcast %592 : vector<1x256xf32> to vector<2x256xf32>
    %594 = arith.mulf %591, %593 : vector<2x256xf32>
    %c68 = arith.constant 68 : index
    %595 = memref.load %arg9[%c68] : memref<98xf32, #tpu.memory_space<smem>>
    %c69 = arith.constant 69 : index
    %596 = memref.load %arg9[%c69] : memref<98xf32, #tpu.memory_space<smem>>
    %597 = vector.extract_strided_slice %594 {offsets = [0, 0], sizes = [1, 256], strides = [1, 1]} : vector<2x256xf32> to vector<1x256xf32>
    %598 = vector.broadcast %595 : f32 to vector<1x256xf32>
    %599 = arith.mulf %598, %597 : vector<1x256xf32>
    %600 = arith.addf %590, %599 : vector<1x256xf32>
    %601 = vector.extract_strided_slice %594 {offsets = [1, 0], sizes = [1, 256], strides = [1, 1]} : vector<2x256xf32> to vector<1x256xf32>
    %602 = vector.broadcast %596 : f32 to vector<1x256xf32>
    %603 = arith.mulf %602, %601 : vector<1x256xf32>
    %604 = arith.addf %600, %603 : vector<1x256xf32>
    %c0_171 = arith.constant 0 : index
    %c157 = arith.constant 157 : index
    %605 = vector.load %arg13[%c0_171, %c157] : memref<2x512xf32, #tpu.memory_space<vmem>>, vector<2x256xf32>
    %606 = vector.extract_strided_slice %0 {offsets = [0, 0], sizes = [1, 256], strides = [1, 1]} : vector<7x256xf32> to vector<1x256xf32>
    %607 = vector.broadcast %606 : vector<1x256xf32> to vector<2x256xf32>
    %608 = arith.mulf %605, %607 : vector<2x256xf32>
    %c70 = arith.constant 70 : index
    %609 = memref.load %arg9[%c70] : memref<98xf32, #tpu.memory_space<smem>>
    %c71 = arith.constant 71 : index
    %610 = memref.load %arg9[%c71] : memref<98xf32, #tpu.memory_space<smem>>
    %611 = vector.extract_strided_slice %608 {offsets = [0, 0], sizes = [1, 256], strides = [1, 1]} : vector<2x256xf32> to vector<1x256xf32>
    %612 = vector.broadcast %609 : f32 to vector<1x256xf32>
    %613 = arith.mulf %612, %611 : vector<1x256xf32>
    %614 = arith.addf %604, %613 : vector<1x256xf32>
    %615 = vector.extract_strided_slice %608 {offsets = [1, 0], sizes = [1, 256], strides = [1, 1]} : vector<2x256xf32> to vector<1x256xf32>
    %616 = vector.broadcast %610 : f32 to vector<1x256xf32>
    %617 = arith.mulf %616, %615 : vector<1x256xf32>
    %618 = arith.addf %614, %617 : vector<1x256xf32>
    %c0_172 = arith.constant 0 : index
    %c158 = arith.constant 158 : index
    %619 = vector.load %arg13[%c0_172, %c158] : memref<2x512xf32, #tpu.memory_space<vmem>>, vector<2x256xf32>
    %620 = vector.extract_strided_slice %0 {offsets = [1, 0], sizes = [1, 256], strides = [1, 1]} : vector<7x256xf32> to vector<1x256xf32>
    %621 = vector.broadcast %620 : vector<1x256xf32> to vector<2x256xf32>
    %622 = arith.mulf %619, %621 : vector<2x256xf32>
    %c72 = arith.constant 72 : index
    %623 = memref.load %arg9[%c72] : memref<98xf32, #tpu.memory_space<smem>>
    %c73 = arith.constant 73 : index
    %624 = memref.load %arg9[%c73] : memref<98xf32, #tpu.memory_space<smem>>
    %625 = vector.extract_strided_slice %622 {offsets = [0, 0], sizes = [1, 256], strides = [1, 1]} : vector<2x256xf32> to vector<1x256xf32>
    %626 = vector.broadcast %623 : f32 to vector<1x256xf32>
    %627 = arith.mulf %626, %625 : vector<1x256xf32>
    %628 = arith.addf %618, %627 : vector<1x256xf32>
    %629 = vector.extract_strided_slice %622 {offsets = [1, 0], sizes = [1, 256], strides = [1, 1]} : vector<2x256xf32> to vector<1x256xf32>
    %630 = vector.broadcast %624 : f32 to vector<1x256xf32>
    %631 = arith.mulf %630, %629 : vector<1x256xf32>
    %632 = arith.addf %628, %631 : vector<1x256xf32>
    %c0_173 = arith.constant 0 : index
    %c159 = arith.constant 159 : index
    %633 = vector.load %arg13[%c0_173, %c159] : memref<2x512xf32, #tpu.memory_space<vmem>>, vector<2x256xf32>
    %634 = vector.extract_strided_slice %0 {offsets = [2, 0], sizes = [1, 256], strides = [1, 1]} : vector<7x256xf32> to vector<1x256xf32>
    %635 = vector.broadcast %634 : vector<1x256xf32> to vector<2x256xf32>
    %636 = arith.mulf %633, %635 : vector<2x256xf32>
    %c74 = arith.constant 74 : index
    %637 = memref.load %arg9[%c74] : memref<98xf32, #tpu.memory_space<smem>>
    %c75 = arith.constant 75 : index
    %638 = memref.load %arg9[%c75] : memref<98xf32, #tpu.memory_space<smem>>
    %639 = vector.extract_strided_slice %636 {offsets = [0, 0], sizes = [1, 256], strides = [1, 1]} : vector<2x256xf32> to vector<1x256xf32>
    %640 = vector.broadcast %637 : f32 to vector<1x256xf32>
    %641 = arith.mulf %640, %639 : vector<1x256xf32>
    %642 = arith.addf %632, %641 : vector<1x256xf32>
    %643 = vector.extract_strided_slice %636 {offsets = [1, 0], sizes = [1, 256], strides = [1, 1]} : vector<2x256xf32> to vector<1x256xf32>
    %644 = vector.broadcast %638 : f32 to vector<1x256xf32>
    %645 = arith.mulf %644, %643 : vector<1x256xf32>
    %646 = arith.addf %642, %645 : vector<1x256xf32>
    %c0_174 = arith.constant 0 : index
    %c160 = arith.constant 160 : index
    %647 = vector.load %arg13[%c0_174, %c160] : memref<2x512xf32, #tpu.memory_space<vmem>>, vector<2x256xf32>
    %c76 = arith.constant 76 : index
    %648 = memref.load %arg9[%c76] : memref<98xf32, #tpu.memory_space<smem>>
    %c77_175 = arith.constant 77 : index
    %649 = memref.load %arg9[%c77_175] : memref<98xf32, #tpu.memory_space<smem>>
    %650 = vector.extract_strided_slice %647 {offsets = [0, 0], sizes = [1, 256], strides = [1, 1]} : vector<2x256xf32> to vector<1x256xf32>
    %651 = vector.broadcast %648 : f32 to vector<1x256xf32>
    %652 = arith.mulf %651, %650 : vector<1x256xf32>
    %653 = arith.addf %646, %652 : vector<1x256xf32>
    %654 = vector.extract_strided_slice %647 {offsets = [1, 0], sizes = [1, 256], strides = [1, 1]} : vector<2x256xf32> to vector<1x256xf32>
    %655 = vector.broadcast %649 : f32 to vector<1x256xf32>
    %656 = arith.mulf %655, %654 : vector<1x256xf32>
    %657 = arith.addf %653, %656 : vector<1x256xf32>
    %c0_176 = arith.constant 0 : index
    %c161 = arith.constant 161 : index
    %658 = vector.load %arg13[%c0_176, %c161] : memref<2x512xf32, #tpu.memory_space<vmem>>, vector<2x256xf32>
    %659 = vector.extract_strided_slice %0 {offsets = [4, 0], sizes = [1, 256], strides = [1, 1]} : vector<7x256xf32> to vector<1x256xf32>
    %660 = vector.broadcast %659 : vector<1x256xf32> to vector<2x256xf32>
    %661 = arith.mulf %658, %660 : vector<2x256xf32>
    %c78_177 = arith.constant 78 : index
    %662 = memref.load %arg9[%c78_177] : memref<98xf32, #tpu.memory_space<smem>>
    %c79_178 = arith.constant 79 : index
    %663 = memref.load %arg9[%c79_178] : memref<98xf32, #tpu.memory_space<smem>>
    %664 = vector.extract_strided_slice %661 {offsets = [0, 0], sizes = [1, 256], strides = [1, 1]} : vector<2x256xf32> to vector<1x256xf32>
    %665 = vector.broadcast %662 : f32 to vector<1x256xf32>
    %666 = arith.mulf %665, %664 : vector<1x256xf32>
    %667 = arith.addf %657, %666 : vector<1x256xf32>
    %668 = vector.extract_strided_slice %661 {offsets = [1, 0], sizes = [1, 256], strides = [1, 1]} : vector<2x256xf32> to vector<1x256xf32>
    %669 = vector.broadcast %663 : f32 to vector<1x256xf32>
    %670 = arith.mulf %669, %668 : vector<1x256xf32>
    %671 = arith.addf %667, %670 : vector<1x256xf32>
    %c0_179 = arith.constant 0 : index
    %c162 = arith.constant 162 : index
    %672 = vector.load %arg13[%c0_179, %c162] : memref<2x512xf32, #tpu.memory_space<vmem>>, vector<2x256xf32>
    %673 = vector.extract_strided_slice %0 {offsets = [5, 0], sizes = [1, 256], strides = [1, 1]} : vector<7x256xf32> to vector<1x256xf32>
    %674 = vector.broadcast %673 : vector<1x256xf32> to vector<2x256xf32>
    %675 = arith.mulf %672, %674 : vector<2x256xf32>
    %c80_180 = arith.constant 80 : index
    %676 = memref.load %arg9[%c80_180] : memref<98xf32, #tpu.memory_space<smem>>
    %c81_181 = arith.constant 81 : index
    %677 = memref.load %arg9[%c81_181] : memref<98xf32, #tpu.memory_space<smem>>
    %678 = vector.extract_strided_slice %675 {offsets = [0, 0], sizes = [1, 256], strides = [1, 1]} : vector<2x256xf32> to vector<1x256xf32>
    %679 = vector.broadcast %676 : f32 to vector<1x256xf32>
    %680 = arith.mulf %679, %678 : vector<1x256xf32>
    %681 = arith.addf %671, %680 : vector<1x256xf32>
    %682 = vector.extract_strided_slice %675 {offsets = [1, 0], sizes = [1, 256], strides = [1, 1]} : vector<2x256xf32> to vector<1x256xf32>
    %683 = vector.broadcast %677 : f32 to vector<1x256xf32>
    %684 = arith.mulf %683, %682 : vector<1x256xf32>
    %685 = arith.addf %681, %684 : vector<1x256xf32>
    %c0_182 = arith.constant 0 : index
    %c163 = arith.constant 163 : index
    %686 = vector.load %arg13[%c0_182, %c163] : memref<2x512xf32, #tpu.memory_space<vmem>>, vector<2x256xf32>
    %687 = vector.extract_strided_slice %0 {offsets = [6, 0], sizes = [1, 256], strides = [1, 1]} : vector<7x256xf32> to vector<1x256xf32>
    %688 = vector.broadcast %687 : vector<1x256xf32> to vector<2x256xf32>
    %689 = arith.mulf %686, %688 : vector<2x256xf32>
    %c82_183 = arith.constant 82 : index
    %690 = memref.load %arg9[%c82_183] : memref<98xf32, #tpu.memory_space<smem>>
    %c83_184 = arith.constant 83 : index
    %691 = memref.load %arg9[%c83_184] : memref<98xf32, #tpu.memory_space<smem>>
    %692 = vector.extract_strided_slice %689 {offsets = [0, 0], sizes = [1, 256], strides = [1, 1]} : vector<2x256xf32> to vector<1x256xf32>
    %693 = vector.broadcast %690 : f32 to vector<1x256xf32>
    %694 = arith.mulf %693, %692 : vector<1x256xf32>
    %695 = arith.addf %685, %694 : vector<1x256xf32>
    %696 = vector.extract_strided_slice %689 {offsets = [1, 0], sizes = [1, 256], strides = [1, 1]} : vector<2x256xf32> to vector<1x256xf32>
    %697 = vector.broadcast %691 : f32 to vector<1x256xf32>
    %698 = arith.mulf %697, %696 : vector<1x256xf32>
    %699 = arith.addf %695, %698 : vector<1x256xf32>
    %c0_185 = arith.constant 0 : index
    %c173 = arith.constant 173 : index
    %700 = vector.load %arg13[%c0_185, %c173] : memref<2x512xf32, #tpu.memory_space<vmem>>, vector<2x256xf32>
    %701 = vector.extract_strided_slice %0 {offsets = [0, 0], sizes = [1, 256], strides = [1, 1]} : vector<7x256xf32> to vector<1x256xf32>
    %702 = vector.broadcast %701 : vector<1x256xf32> to vector<2x256xf32>
    %703 = arith.mulf %700, %702 : vector<2x256xf32>
    %c84 = arith.constant 84 : index
    %704 = memref.load %arg9[%c84] : memref<98xf32, #tpu.memory_space<smem>>
    %c85 = arith.constant 85 : index
    %705 = memref.load %arg9[%c85] : memref<98xf32, #tpu.memory_space<smem>>
    %706 = vector.extract_strided_slice %703 {offsets = [0, 0], sizes = [1, 256], strides = [1, 1]} : vector<2x256xf32> to vector<1x256xf32>
    %707 = vector.broadcast %704 : f32 to vector<1x256xf32>
    %708 = arith.mulf %707, %706 : vector<1x256xf32>
    %709 = arith.addf %699, %708 : vector<1x256xf32>
    %710 = vector.extract_strided_slice %703 {offsets = [1, 0], sizes = [1, 256], strides = [1, 1]} : vector<2x256xf32> to vector<1x256xf32>
    %711 = vector.broadcast %705 : f32 to vector<1x256xf32>
    %712 = arith.mulf %711, %710 : vector<1x256xf32>
    %713 = arith.addf %709, %712 : vector<1x256xf32>
    %c0_186 = arith.constant 0 : index
    %c174 = arith.constant 174 : index
    %714 = vector.load %arg13[%c0_186, %c174] : memref<2x512xf32, #tpu.memory_space<vmem>>, vector<2x256xf32>
    %715 = vector.extract_strided_slice %0 {offsets = [1, 0], sizes = [1, 256], strides = [1, 1]} : vector<7x256xf32> to vector<1x256xf32>
    %716 = vector.broadcast %715 : vector<1x256xf32> to vector<2x256xf32>
    %717 = arith.mulf %714, %716 : vector<2x256xf32>
    %c86 = arith.constant 86 : index
    %718 = memref.load %arg9[%c86] : memref<98xf32, #tpu.memory_space<smem>>
    %c87 = arith.constant 87 : index
    %719 = memref.load %arg9[%c87] : memref<98xf32, #tpu.memory_space<smem>>
    %720 = vector.extract_strided_slice %717 {offsets = [0, 0], sizes = [1, 256], strides = [1, 1]} : vector<2x256xf32> to vector<1x256xf32>
    %721 = vector.broadcast %718 : f32 to vector<1x256xf32>
    %722 = arith.mulf %721, %720 : vector<1x256xf32>
    %723 = arith.addf %713, %722 : vector<1x256xf32>
    %724 = vector.extract_strided_slice %717 {offsets = [1, 0], sizes = [1, 256], strides = [1, 1]} : vector<2x256xf32> to vector<1x256xf32>
    %725 = vector.broadcast %719 : f32 to vector<1x256xf32>
    %726 = arith.mulf %725, %724 : vector<1x256xf32>
    %727 = arith.addf %723, %726 : vector<1x256xf32>
    %c0_187 = arith.constant 0 : index
    %c175 = arith.constant 175 : index
    %728 = vector.load %arg13[%c0_187, %c175] : memref<2x512xf32, #tpu.memory_space<vmem>>, vector<2x256xf32>
    %729 = vector.extract_strided_slice %0 {offsets = [2, 0], sizes = [1, 256], strides = [1, 1]} : vector<7x256xf32> to vector<1x256xf32>
    %730 = vector.broadcast %729 : vector<1x256xf32> to vector<2x256xf32>
    %731 = arith.mulf %728, %730 : vector<2x256xf32>
    %c88 = arith.constant 88 : index
    %732 = memref.load %arg9[%c88] : memref<98xf32, #tpu.memory_space<smem>>
    %c89 = arith.constant 89 : index
    %733 = memref.load %arg9[%c89] : memref<98xf32, #tpu.memory_space<smem>>
    %734 = vector.extract_strided_slice %731 {offsets = [0, 0], sizes = [1, 256], strides = [1, 1]} : vector<2x256xf32> to vector<1x256xf32>
    %735 = vector.broadcast %732 : f32 to vector<1x256xf32>
    %736 = arith.mulf %735, %734 : vector<1x256xf32>
    %737 = arith.addf %727, %736 : vector<1x256xf32>
    %738 = vector.extract_strided_slice %731 {offsets = [1, 0], sizes = [1, 256], strides = [1, 1]} : vector<2x256xf32> to vector<1x256xf32>
    %739 = vector.broadcast %733 : f32 to vector<1x256xf32>
    %740 = arith.mulf %739, %738 : vector<1x256xf32>
    %741 = arith.addf %737, %740 : vector<1x256xf32>
    %c0_188 = arith.constant 0 : index
    %c176 = arith.constant 176 : index
    %742 = vector.load %arg13[%c0_188, %c176] : memref<2x512xf32, #tpu.memory_space<vmem>>, vector<2x256xf32>
    %c90 = arith.constant 90 : index
    %743 = memref.load %arg9[%c90] : memref<98xf32, #tpu.memory_space<smem>>
    %c91 = arith.constant 91 : index
    %744 = memref.load %arg9[%c91] : memref<98xf32, #tpu.memory_space<smem>>
    %745 = vector.extract_strided_slice %742 {offsets = [0, 0], sizes = [1, 256], strides = [1, 1]} : vector<2x256xf32> to vector<1x256xf32>
    %746 = vector.broadcast %743 : f32 to vector<1x256xf32>
    %747 = arith.mulf %746, %745 : vector<1x256xf32>
    %748 = arith.addf %741, %747 : vector<1x256xf32>
    %749 = vector.extract_strided_slice %742 {offsets = [1, 0], sizes = [1, 256], strides = [1, 1]} : vector<2x256xf32> to vector<1x256xf32>
    %750 = vector.broadcast %744 : f32 to vector<1x256xf32>
    %751 = arith.mulf %750, %749 : vector<1x256xf32>
    %752 = arith.addf %748, %751 : vector<1x256xf32>
    %c0_189 = arith.constant 0 : index
    %c177 = arith.constant 177 : index
    %753 = vector.load %arg13[%c0_189, %c177] : memref<2x512xf32, #tpu.memory_space<vmem>>, vector<2x256xf32>
    %754 = vector.extract_strided_slice %0 {offsets = [4, 0], sizes = [1, 256], strides = [1, 1]} : vector<7x256xf32> to vector<1x256xf32>
    %755 = vector.broadcast %754 : vector<1x256xf32> to vector<2x256xf32>
    %756 = arith.mulf %753, %755 : vector<2x256xf32>
    %c92 = arith.constant 92 : index
    %757 = memref.load %arg9[%c92] : memref<98xf32, #tpu.memory_space<smem>>
    %c93_190 = arith.constant 93 : index
    %758 = memref.load %arg9[%c93_190] : memref<98xf32, #tpu.memory_space<smem>>
    %759 = vector.extract_strided_slice %756 {offsets = [0, 0], sizes = [1, 256], strides = [1, 1]} : vector<2x256xf32> to vector<1x256xf32>
    %760 = vector.broadcast %757 : f32 to vector<1x256xf32>
    %761 = arith.mulf %760, %759 : vector<1x256xf32>
    %762 = arith.addf %752, %761 : vector<1x256xf32>
    %763 = vector.extract_strided_slice %756 {offsets = [1, 0], sizes = [1, 256], strides = [1, 1]} : vector<2x256xf32> to vector<1x256xf32>
    %764 = vector.broadcast %758 : f32 to vector<1x256xf32>
    %765 = arith.mulf %764, %763 : vector<1x256xf32>
    %766 = arith.addf %762, %765 : vector<1x256xf32>
    %c0_191 = arith.constant 0 : index
    %c178 = arith.constant 178 : index
    %767 = vector.load %arg13[%c0_191, %c178] : memref<2x512xf32, #tpu.memory_space<vmem>>, vector<2x256xf32>
    %768 = vector.extract_strided_slice %0 {offsets = [5, 0], sizes = [1, 256], strides = [1, 1]} : vector<7x256xf32> to vector<1x256xf32>
    %769 = vector.broadcast %768 : vector<1x256xf32> to vector<2x256xf32>
    %770 = arith.mulf %767, %769 : vector<2x256xf32>
    %c94_192 = arith.constant 94 : index
    %771 = memref.load %arg9[%c94_192] : memref<98xf32, #tpu.memory_space<smem>>
    %c95_193 = arith.constant 95 : index
    %772 = memref.load %arg9[%c95_193] : memref<98xf32, #tpu.memory_space<smem>>
    %773 = vector.extract_strided_slice %770 {offsets = [0, 0], sizes = [1, 256], strides = [1, 1]} : vector<2x256xf32> to vector<1x256xf32>
    %774 = vector.broadcast %771 : f32 to vector<1x256xf32>
    %775 = arith.mulf %774, %773 : vector<1x256xf32>
    %776 = arith.addf %766, %775 : vector<1x256xf32>
    %777 = vector.extract_strided_slice %770 {offsets = [1, 0], sizes = [1, 256], strides = [1, 1]} : vector<2x256xf32> to vector<1x256xf32>
    %778 = vector.broadcast %772 : f32 to vector<1x256xf32>
    %779 = arith.mulf %778, %777 : vector<1x256xf32>
    %780 = arith.addf %776, %779 : vector<1x256xf32>
    %c0_194 = arith.constant 0 : index
    %c179 = arith.constant 179 : index
    %781 = vector.load %arg13[%c0_194, %c179] : memref<2x512xf32, #tpu.memory_space<vmem>>, vector<2x256xf32>
    %782 = vector.extract_strided_slice %0 {offsets = [6, 0], sizes = [1, 256], strides = [1, 1]} : vector<7x256xf32> to vector<1x256xf32>
    %783 = vector.broadcast %782 : vector<1x256xf32> to vector<2x256xf32>
    %784 = arith.mulf %781, %783 : vector<2x256xf32>
    %c96_195 = arith.constant 96 : index
    %785 = memref.load %arg9[%c96_195] : memref<98xf32, #tpu.memory_space<smem>>
    %c97_196 = arith.constant 97 : index
    %786 = memref.load %arg9[%c97_196] : memref<98xf32, #tpu.memory_space<smem>>
    %787 = vector.extract_strided_slice %784 {offsets = [0, 0], sizes = [1, 256], strides = [1, 1]} : vector<2x256xf32> to vector<1x256xf32>
    %788 = vector.broadcast %785 : f32 to vector<1x256xf32>
    %789 = arith.mulf %788, %787 : vector<1x256xf32>
    %790 = arith.addf %780, %789 : vector<1x256xf32>
    %791 = vector.extract_strided_slice %784 {offsets = [1, 0], sizes = [1, 256], strides = [1, 1]} : vector<2x256xf32> to vector<1x256xf32>
    %792 = vector.broadcast %786 : f32 to vector<1x256xf32>
    %793 = arith.mulf %792, %791 : vector<1x256xf32>
    %794 = arith.addf %790, %793 : vector<1x256xf32>
    %795 = arith.negf %794 : vector<1x256xf32>
    %796 = math.exp %795 : vector<1x256xf32>
    %cst_197 = arith.constant 1.000000e+00 : f32
    %797 = vector.broadcast %cst_197 : f32 to vector<1x256xf32>
    %798 = arith.addf %797, %796 : vector<1x256xf32>
    %799 = arith.divf %797, %798 : vector<1x256xf32>
    %800 = vector.broadcast %799 : vector<1x256xf32> to vector<16x256xf32>
    %801 = arith.mulf %116, %800 : vector<16x256xf32>
    %c0_198 = arith.constant 0 : index
    %c0_199 = arith.constant 0 : index
    %c128_200 = arith.constant 128 : index
    %802 = vector.load %arg1[%c0_198, %c0_199, %c128_200] : memref<1x16x512xf32, #tpu.memory_space<vmem>>, vector<1x16x256xf32>
    %803 = vector.shape_cast %802 : vector<1x16x256xf32> to vector<16x256xf32>
    %804 = arith.addf %801, %803 : vector<16x256xf32>
    %c0_201 = arith.constant 0 : index
    %c0_202 = arith.constant 0 : index
    %c0_203 = arith.constant 0 : index
    %805 = vector.load %arg10[%c0_201, %c0_202, %c0_203] : memref<1x16x256xf32, #tpu.memory_space<vmem>>, vector<1x16x256xf32>
    %806 = vector.shape_cast %805 : vector<1x16x256xf32> to vector<16x256xf32>
    %807 = vector.shape_cast %804 : vector<16x256xf32> to vector<1x16x256xf32>
    tpu.vector_store %arg10[%c0_201, %c0_202, %c0_203], %807 {strides = array<i32>} : memref<1x16x256xf32, #tpu.memory_space<vmem>>, vector<1x16x256xf32>,
    return
  }
  func.func @transform_0(%arg0: i32) -> (i32, i32, i32) {
    %c0_i32 = arith.constant 0 : i32
    %c0_i32_0 = arith.constant 0 : i32
    %c0_i32_1 = arith.constant 0 : i32
    return %arg0, %c0_i32, %c0_i32_0 : i32, i32, i32
  }
  func.func @transform_1(%arg0: i32) -> (i32, i32) {
    %c0_i32 = arith.constant 0 : i32
    %c0_i32_0 = arith.constant 0 : i32
    %c0_i32_1 = arith.constant 0 : i32
    return %c0_i32, %c0_i32_0 : i32, i32
  }
  func.func @transform_2(%arg0: i32) -> (i32, i32) {
    %c0_i32 = arith.constant 0 : i32
    %c0_i32_0 = arith.constant 0 : i32
    %c0_i32_1 = arith.constant 0 : i32
    return %c0_i32, %c0_i32_0 : i32, i32
  }
  func.func @transform_3(%arg0: i32) -> (i32, i32) {
    %c0_i32 = arith.constant 0 : i32
    %c0_i32_0 = arith.constant 0 : i32
    %c0_i32_1 = arith.constant 0 : i32
    return %c0_i32, %c0_i32_0 : i32, i32
  }
  func.func @transform_4(%arg0: i32) -> (i32, i32) {
    %c0_i32 = arith.constant 0 : i32
    %c0_i32_0 = arith.constant 0 : i32
    %c0_i32_1 = arith.constant 0 : i32
    return %c0_i32, %c0_i32_0 : i32, i32
  }
  func.func @transform_5(%arg0: i32) -> (i32, i32) {
    %c0_i32 = arith.constant 0 : i32
    %c0_i32_0 = arith.constant 0 : i32
    %c0_i32_1 = arith.constant 0 : i32
    return %c0_i32, %c0_i32_0 : i32, i32
  }
  func.func @transform_6(%arg0: i32) -> (i32, i32) {
    %c0_i32 = arith.constant 0 : i32
    %c0_i32_0 = arith.constant 0 : i32
    %c0_i32_1 = arith.constant 0 : i32
    return %c0_i32, %c0_i32_0 : i32, i32
  }
  func.func @transform_7(%arg0: i32) -> (i32, i32) {
    %c0_i32 = arith.constant 0 : i32
    %c0_i32_0 = arith.constant 0 : i32
    %c0_i32_1 = arith.constant 0 : i32
    return %c0_i32, %c0_i32_0 : i32, i32
  }
  func.func @transform_8(%arg0: i32) -> i32 {
    %c0_i32 = arith.constant 0 : i32
    %c0_i32_0 = arith.constant 0 : i32
    return %c0_i32 : i32
  }
  func.func @transform_9(%arg0: i32) -> (i32, i32, i32) {
    %c0_i32 = arith.constant 0 : i32
    %c0_i32_0 = arith.constant 0 : i32
    %c0_i32_1 = arith.constant 0 : i32
    return %arg0, %c0_i32, %c0_i32_0 : i32, i32, i32
  }
}

</mosaic_0001>

<llo_original>
// kernel: tpu_custom_call.1
$region0: #{tpu_custom_call.1}
  #allocation0 [shape = 'u32[]', space=smem, size = 0x4, offset = 0x4, fixed_abs, tag = 'smem constant byte address 0x4 - core index']
  #allocation1 [shape = 'u32[144,128]{1,0:T(1,128)}', space=vmem, size = 0x12000, scoped, tag = 'internal scratch']
  #allocation2 [shape = 'f32[144,256]{1,0:T(8,128)}', space=vmem, size = 0x24000, scoped, tag = 'scratch operand']
  #allocation3 [shape = 'f32[16,512]{1,0:T(8,128)}', space=vmem, size = 0x8000, scoped, tag = 'scratch operand']
  #allocation4 [shape = 'f32[2,512]{1,0:T(2,128)}', space=vmem, size = 0x1000, scoped, tag = 'scratch operand']
  %s0 = inlined_call_operand.hbm [shape: f32[2,16,512], index: 0, kind: input, shape index: {}]
  %s1 = inlined_call_operand.vmem [shape: f32[16,144], index: 1, kind: input, shape index: {}]
  %s2 = inlined_call_operand.vmem [shape: f32[16,1], index: 2, kind: input, shape index: {}]
  %s3 = inlined_call_operand.vmem [shape: f32[16,144], index: 3, kind: input, shape index: {}]
  %s4 = inlined_call_operand.vmem [shape: f32[16,1], index: 4, kind: input, shape index: {}]
  %s5 = inlined_call_operand.hbm [shape: f32[4,16], index: 5, kind: input, shape index: {}]
  %s6 = inlined_call_operand.vmem [shape: f32[16,4], index: 6, kind: input, shape index: {}]
  %s7 = inlined_call_operand.vmem [shape: f32[7,256], index: 7, kind: input, shape index: {}]
  %s8 = inlined_call_operand.vmem [shape: f32[98], index: 8, kind: input, shape index: {}]
  %s9 = inlined_call_operand.hbm [shape: f32[2,16,256], index: 9, kind: output, shape index: {}]
  %s10 = sld [smem:[#allocation0]]
  $region81: #{tpu_custom_call.1} parent=0
    _
  %s12 = ssub.s32 1, %s10
  %s13 = scalar_select 0, %s12, %s10
  $region1: #{tpu_custom_call.1} parent=0
    #allocation5 [shape = 'u8[65536]{0}', space=vmem, size = 0x10000, scoped, tag = 'input window, operand 0']
    #allocation6 [shape = 's32[2]{0}', space=sflag, size = 0x8, scoped, tag = 'scoped memory for tpu_custom_call.1']
    #allocation7 [shape = 's32[2]{0}', space=sflag, size = 0x8, scoped, tag = 'scoped memory for tpu_custom_call.1']
    #allocation8 [shape = 's32[2]{0}', space=sflag, size = 0x8, scoped, tag = 'scoped memory for tpu_custom_call.1']
    #allocation9 [shape = 'u8[2048]{0}', space=vmem, size = 0x800, scoped, tag = 'input window, operand 5, single buffered']
    #allocation10 [shape = 's32[1]{0}', space=sflag, size = 0x4, scoped, tag = 'scoped memory for tpu_custom_call.1']
    #allocation11 [shape = 'u8[512]{0}', space=smem, size = 0x200, scoped, tag = 'input window, operand 8, single buffered']
    #allocation12 [shape = 'u8[32768]{0}', space=vmem, size = 0x8000, scoped, tag = 'output window, operand 0']
    %14 = vsyncpa [#allocation6], 0
    %s15 = scalar_lea.sflag [#allocation6], 1
    %16 = vsyncpa %s15, 0
    %17 = vsyncpa [#allocation10], 0
    %18 = vsyncpa [#allocation8], 0
    %19 = vsyncpa [#allocation7], 0
    %s20 = scalar_lea.sflag [#allocation7], 1
    %21 = vsyncpa %s20, 0
    loop: start=0, step=1, limit=4
    $region2: #{tpu_custom_call.1} parent=1 // loop_pre_header
      _
    $region3: #{tpu_custom_call.1} parent=1 // loop_header
      %s23 = sphi 0, %s27
      %p24 = scmp.ge.s32.totalorder %s23, 4
      %s33 = sphi 0, %s35
      %s36 = sphi 0, %s33
      %s37 = sphi 0, %s36
      %s53 = sphi 0, %s37
      %s57 = sphi 0, %s57
      %s59 = sphi 0, %s57
      %s60 = sphi 0, %s59
      %s74 = sphi 0, %s60
      %s78 = sphi 0, %s78
      %s80 = sphi 0, %s78
      %s81 = sphi 0, %s80
      %s95 = sphi 0, %s81
      %s99 = sphi 0, %s99
      %s101 = sphi 0, %s99
      %s102 = sphi 0, %s101
      %s116 = sphi 0, %s102
      %s120 = sphi 0, %s120
      %s122 = sphi 0, %s120
      %s123 = sphi 0, %s122
      %s137 = sphi 0, %s123
      %s141 = sphi 0, %s141
      %s143 = sphi 0, %s141
      %s144 = sphi 0, %s143
      %s158 = sphi 0, %s144
      %s162 = sphi 0, %s162
      %s164 = sphi 0, %s162
      %s165 = sphi 0, %s164
      %s179 = sphi 0, %s165
      %s183 = sphi 0, %s183
      %s185 = sphi 0, %s183
      %s186 = sphi 0, %s185
      %s200 = sphi 0, %s186
      %s204 = sphi 0, %s204
      %s206 = sphi 0, %s204
      %s207 = sphi 0, %s206
      %s221 = sphi 0, %s207
      %s227 = sphi 0, %s229
      %s230 = sphi 0, %s227
      %s231 = sphi 0, %s230
      %s247 = sphi 0, %s231
    $region4: #{tpu_custom_call.1} parent=1 // loop_header_branch
      %26 = sbr.rel (%p24) target = $region8
    $region5: #{tpu_custom_call.1} parent=1 // loop_body
      %s28 = ssub.s32 %s23, 1
      %s29 = ssub.s32 %s23, 2
      %s30 = sadd.s32 %s23, 1
      %s31 = ssub.s32 %s23, %s30
      %p32 = scmp.eq.s32.totalorder %s31, 0
      %s34 = sadd.s32 %s33, 1
      %s35 = scalar_select %p32, %s33, %s34
      %p38 = pneg %p32
      %p39 = scmp.eq.s32.totalorder %s23, 1
      %p40 = por %p38, %p39
      %p41 = scmp.ne.s32.totalorder %s33, %s36
      %p42 = scmp.eq.s32.totalorder %s23, 0
      %p43 = por %p41, %p42
      %p44 = scmp.ne.s32.totalorder %s33, %s36
      %p45 = scmp.eq.s32.totalorder %s28, 1
      %p46 = por %p44, %p45
      %p47 = scmp.ne.s32.totalorder %s36, %s37
      %p48 = scmp.eq.s32.totalorder %s28, 0
      %p49 = por %p47, %p48
      %p50 = scmp.ne.s32.totalorder %s36, %s37
      %p51 = scmp.eq.s32.totalorder %s29, 1
      %p52 = por %p50, %p51
      %p54 = scmp.ne.s32.totalorder %s37, %s53
      %p55 = scmp.eq.s32.totalorder %s29, 0
      %p56 = por %p54, %p55
      %s58 = sadd.s32 %s57, 1
      %p61 = scmp.eq.s32.totalorder %s23, 1
      %p62 = scmp.ne.s32.totalorder %s57, %s59
      %p63 = scmp.eq.s32.totalorder %s23, 0
      %p64 = por %p62, %p63
      %p65 = scmp.ne.s32.totalorder %s57, %s59
      %p66 = scmp.eq.s32.totalorder %s28, 1
      %p67 = por %p65, %p66
      %p68 = scmp.ne.s32.totalorder %s59, %s60
      %p69 = scmp.eq.s32.totalorder %s28, 0
      %p70 = por %p68, %p69
      %p71 = scmp.ne.s32.totalorder %s59, %s60
      %p72 = scmp.eq.s32.totalorder %s29, 1
      %p73 = por %p71, %p72
      %p75 = scmp.ne.s32.totalorder %s60, %s74
      %p76 = scmp.eq.s32.totalorder %s29, 0
      %p77 = por %p75, %p76
      %s79 = sadd.s32 %s78, 1
      %p82 = scmp.eq.s32.totalorder %s23, 1
      %p83 = scmp.ne.s32.totalorder %s78, %s80
      %p84 = scmp.eq.s32.totalorder %s23, 0
      %p85 = por %p83, %p84
      %p86 = scmp.ne.s32.totalorder %s78, %s80
      %p87 = scmp.eq.s32.totalorder %s28, 1
      %p88 = por %p86, %p87
      %p89 = scmp.ne.s32.totalorder %s80, %s81
      %p90 = scmp.eq.s32.totalorder %s28, 0
      %p91 = por %p89, %p90
      %p92 = scmp.ne.s32.totalorder %s80, %s81
      %p93 = scmp.eq.s32.totalorder %s29, 1
      %p94 = por %p92, %p93
      %p96 = scmp.ne.s32.totalorder %s81, %s95
      %p97 = scmp.eq.s32.totalorder %s29, 0
      %p98 = por %p96, %p97
      %s100 = sadd.s32 %s99, 1
      %p103 = scmp.eq.s32.totalorder %s23, 1
      %p104 = scmp.ne.s32.totalorder %s99, %s101
      %p105 = scmp.eq.s32.totalorder %s23, 0
      %p106 = por %p104, %p105
      %p107 = scmp.ne.s32.totalorder %s99, %s101
      %p108 = scmp.eq.s32.totalorder %s28, 1
      %p109 = por %p107, %p108
      %p110 = scmp.ne.s32.totalorder %s101, %s102
      %p111 = scmp.eq.s32.totalorder %s28, 0
      %p112 = por %p110, %p111
      %p113 = scmp.ne.s32.totalorder %s101, %s102
      %p114 = scmp.eq.s32.totalorder %s29, 1
      %p115 = por %p113, %p114
      %p117 = scmp.ne.s32.totalorder %s102, %s116
      %p118 = scmp.eq.s32.totalorder %s29, 0
      %p119 = por %p117, %p118
      %s121 = sadd.s32 %s120, 1
      %p124 = scmp.eq.s32.totalorder %s23, 1
      %p125 = scmp.ne.s32.totalorder %s120, %s122
      %p126 = scmp.eq.s32.totalorder %s23, 0
      %p127 = por %p125, %p126
      %p128 = scmp.ne.s32.totalorder %s120, %s122
      %p129 = scmp.eq.s32.totalorder %s28, 1
      %p130 = por %p128, %p129
      %p131 = scmp.ne.s32.totalorder %s122, %s123
      %p132 = scmp.eq.s32.totalorder %s28, 0
      %p133 = por %p131, %p132
      %p134 = scmp.ne.s32.totalorder %s122, %s123
      %p135 = scmp.eq.s32.totalorder %s29, 1
      %p136 = por %p134, %p135
      %p138 = scmp.ne.s32.totalorder %s123, %s137
      %p139 = scmp.eq.s32.totalorder %s29, 0
      %p140 = por %p138, %p139
      %s142 = sadd.s32 %s141, 1
      %p145 = scmp.eq.s32.totalorder %s23, 1
      %p146 = scmp.ne.s32.totalorder %s141, %s143
      %p147 = scmp.eq.s32.totalorder %s23, 0
      %p148 = por %p146, %p147
      %p149 = scmp.ne.s32.totalorder %s141, %s143
      %p150 = scmp.eq.s32.totalorder %s28, 1
      %p151 = por %p149, %p150
      %p152 = scmp.ne.s32.totalorder %s143, %s144
      %p153 = scmp.eq.s32.totalorder %s28, 0
      %p154 = por %p152, %p153
      %p155 = scmp.ne.s32.totalorder %s143, %s144
      %p156 = scmp.eq.s32.totalorder %s29, 1
      %p157 = por %p155, %p156
      %p159 = scmp.ne.s32.totalorder %s144, %s158
      %p160 = scmp.eq.s32.totalorder %s29, 0
      %p161 = por %p159, %p160
      %s163 = sadd.s32 %s162, 1
      %p166 = scmp.eq.s32.totalorder %s23, 1
      %p167 = scmp.ne.s32.totalorder %s162, %s164
      %p168 = scmp.eq.s32.totalorder %s23, 0
      %p169 = por %p167, %p168
      %p170 = scmp.ne.s32.totalorder %s162, %s164
      %p171 = scmp.eq.s32.totalorder %s28, 1
      %p172 = por %p170, %p171
      %p173 = scmp.ne.s32.totalorder %s164, %s165
      %p174 = scmp.eq.s32.totalorder %s28, 0
      %p175 = por %p173, %p174
      %p176 = scmp.ne.s32.totalorder %s164, %s165
      %p177 = scmp.eq.s32.totalorder %s29, 1
      %p178 = por %p176, %p177
      %p180 = scmp.ne.s32.totalorder %s165, %s179
      %p181 = scmp.eq.s32.totalorder %s29, 0
      %p182 = por %p180, %p181
      %s184 = sadd.s32 %s183, 1
      %p187 = scmp.eq.s32.totalorder %s23, 1
      %p188 = scmp.ne.s32.totalorder %s183, %s185
      %p189 = scmp.eq.s32.totalorder %s23, 0
      %p190 = por %p188, %p189
      %p191 = scmp.ne.s32.totalorder %s183, %s185
      %p192 = scmp.eq.s32.totalorder %s28, 1
      %p193 = por %p191, %p192
      %p194 = scmp.ne.s32.totalorder %s185, %s186
      %p195 = scmp.eq.s32.totalorder %s28, 0
      %p196 = por %p194, %p195
      %p197 = scmp.ne.s32.totalorder %s185, %s186
      %p198 = scmp.eq.s32.totalorder %s29, 1
      %p199 = por %p197, %p198
      %p201 = scmp.ne.s32.totalorder %s186, %s200
      %p202 = scmp.eq.s32.totalorder %s29, 0
      %p203 = por %p201, %p202
      %s205 = sadd.s32 %s204, 1
      %p208 = scmp.eq.s32.totalorder %s23, 1
      %p209 = scmp.ne.s32.totalorder %s204, %s206
      %p210 = scmp.eq.s32.totalorder %s23, 0
      %p211 = por %p209, %p210
      %p212 = scmp.ne.s32.totalorder %s204, %s206
      %p213 = scmp.eq.s32.totalorder %s28, 1
      %p214 = por %p212, %p213
      %p215 = scmp.ne.s32.totalorder %s206, %s207
      %p216 = scmp.eq.s32.totalorder %s28, 0
      %p217 = por %p215, %p216
      %p218 = scmp.ne.s32.totalorder %s206, %s207
      %p219 = scmp.eq.s32.totalorder %s29, 1
      %p220 = por %p218, %p219
      %p222 = scmp.ne.s32.totalorder %s207, %s221
      %p223 = scmp.eq.s32.totalorder %s29, 0
      %p224 = por %p222, %p223
      %s225 = ssub.s32 %s23, %s30
      %p226 = scmp.eq.s32.totalorder %s225, 0
      %s228 = sadd.s32 %s227, 1
      %s229 = scalar_select %p226, %s227, %s228
      %p232 = pneg %p226
      %p233 = scmp.eq.s32.totalorder %s23, 1
      %p234 = por %p232, %p233
      %p235 = scmp.ne.s32.totalorder %s227, %s230
      %p236 = scmp.eq.s32.totalorder %s23, 0
      %p237 = por %p235, %p236
      %p238 = scmp.ne.s32.totalorder %s227, %s230
      %p239 = scmp.eq.s32.totalorder %s28, 1
      %p240 = por %p238, %p239
      %p241 = scmp.ne.s32.totalorder %s230, %s231
      %p242 = scmp.eq.s32.totalorder %s28, 0
      %p243 = por %p241, %p242
      %p244 = scmp.ne.s32.totalorder %s230, %s231
      %p245 = scmp.eq.s32.totalorder %s29, 1
      %p246 = por %p244, %p245
      %p248 = scmp.ne.s32.totalorder %s231, %s247
      %p249 = scmp.eq.s32.totalorder %s29, 0
      %p250 = por %p248, %p249
      %p251 = scmp.le.s32.totalorder 1, %s23
      %p252 = scmp.lt.s32.totalorder %s23, 3
      %p253 = pnand %p251, %p252
      %p254 = pneg %p253
      // Predicated region
      $region9: #{tpu_custom_call.1} parent=5 // pred_check
        _
      $region10: #{tpu_custom_call.1} parent=5 // pred_check_branch
        %256 = sbr.rel (%p253) target = $region12
      $region11: #{tpu_custom_call.1} parent=5 // pred_region
        %s257 = ssub.s32 %s23, 1
        // Predicated region
        $region13: #{tpu_custom_call.1} parent=11 // pred_check
          %p258 = pneg %p70
        $region14: #{tpu_custom_call.1} parent=11 // pred_check_branch
          %260 = sbr.rel (%p258) target = $region16
        $region15: #{tpu_custom_call.1} parent=11 // pred_region
          _
        $region16: #{tpu_custom_call.1} parent=11 // pred_fallthru
          _
        // Predicated region
        $region17: #{tpu_custom_call.1} parent=11 // pred_check
          %p261 = pneg %p91
        $region18: #{tpu_custom_call.1} parent=11 // pred_check_branch
          %263 = sbr.rel (%p261) target = $region20
        $region19: #{tpu_custom_call.1} parent=11 // pred_region
          _
        $region20: #{tpu_custom_call.1} parent=11 // pred_fallthru
          _
        // Predicated region
        $region21: #{tpu_custom_call.1} parent=11 // pred_check
          %p264 = pneg %p112
        $region22: #{tpu_custom_call.1} parent=11 // pred_check_branch
          %266 = sbr.rel (%p264) target = $region24
        $region23: #{tpu_custom_call.1} parent=11 // pred_region
          _
        $region24: #{tpu_custom_call.1} parent=11 // pred_fallthru
          _
        // Predicated region
        $region25: #{tpu_custom_call.1} parent=11 // pred_check
          %p267 = pneg %p133
        $region26: #{tpu_custom_call.1} parent=11 // pred_check_branch
          %269 = sbr.rel (%p267) target = $region28
        $region27: #{tpu_custom_call.1} parent=11 // pred_region
          _
        $region28: #{tpu_custom_call.1} parent=11 // pred_fallthru
          _
        // Predicated region
        $region29: #{tpu_custom_call.1} parent=11 // pred_check
          %p270 = pneg %p154
        $region30: #{tpu_custom_call.1} parent=11 // pred_check_branch
          %272 = sbr.rel (%p270) target = $region32
        $region31: #{tpu_custom_call.1} parent=11 // pred_region
          %s274 = ssub.s32 64, 64
          %275 = vsyncadd [#allocation10], %s274
          %s277 = sshll.u32 [#allocation9], 4
          %s278 = int_to_ptr.vmem [resolvable:$true] %s277
          %280 = dma.hbm_to_vmem [thread:$0]  %s5, 64, %s278, [#allocation10]
        $region32: #{tpu_custom_call.1} parent=11 // pred_fallthru
          _
        // Predicated region
        $region33: #{tpu_custom_call.1} parent=11 // pred_check
          %p281 = pneg %p175
        $region34: #{tpu_custom_call.1} parent=11 // pred_check_branch
          %283 = sbr.rel (%p281) target = $region36
        $region35: #{tpu_custom_call.1} parent=11 // pred_region
          _
        $region36: #{tpu_custom_call.1} parent=11 // pred_fallthru
          _
        // Predicated region
        $region37: #{tpu_custom_call.1} parent=11 // pred_check
          %p284 = pneg %p196
        $region38: #{tpu_custom_call.1} parent=11 // pred_check_branch
          %286 = sbr.rel (%p284) target = $region40
        $region39: #{tpu_custom_call.1} parent=11 // pred_region
          _
        $region40: #{tpu_custom_call.1} parent=11 // pred_fallthru
          _
        // Predicated region
        $region41: #{tpu_custom_call.1} parent=11 // pred_check
          %p287 = pneg %p217
        $region42: #{tpu_custom_call.1} parent=11 // pred_check_branch
          %289 = sbr.rel (%p287) target = $region44
        $region43: #{tpu_custom_call.1} parent=11 // pred_region
          %s291 = ssub.s32 16, 16
          %292 = vsyncadd [#allocation8], %s291
          %s294 = sshll.u32 %s8, 4
          %s295 = int_to_ptr.vmem [resolvable:$true] %s294
          %297 = dma.vmem_to_smem %s295, 16, [#allocation11], [#allocation8]
        $region44: #{tpu_custom_call.1} parent=11 // pred_fallthru
          _
      $region12: #{tpu_custom_call.1} parent=5 // pred_fallthru
        _
      %p298 = scmp.lt.s32.totalorder %s23, 2
      // Predicated region
      $region45: #{tpu_custom_call.1} parent=5 // pred_check
        %p299 = pneg %p298
      $region46: #{tpu_custom_call.1} parent=5 // pred_check_branch
        %301 = sbr.rel (%p299) target = $region48
      $region47: #{tpu_custom_call.1} parent=5 // pred_region
        // Predicated region
        $region49: #{tpu_custom_call.1} parent=47 // pred_check
          %p302 = pneg %p43
        $region50: #{tpu_custom_call.1} parent=47 // pred_check_branch
          %304 = sbr.rel (%p302) target = $region52
        $region51: #{tpu_custom_call.1} parent=47 // pred_region
          %s305 = sand.u32 %s33, 1
          %s306 = scalar_lea.sflag [#allocation6], %s305
          %s307 = sand.u32 %s33, 1
          %s308 = smul.addr %s307, 64
          %s309 = scalar_lea.vmem [#allocation5], %s308
          %s311 = ssub.s32 1024, 1024
          %312 = vsyncadd %s306, %s311
          %s313 = smul.addr %s23, 8
          %s314 = smul.addr %s313, 128
          %s315 = scalar_lea.hbm %s0, %s314
          %s316 = sshll.u32 %s309, 4
          %s317 = int_to_ptr.vmem [resolvable:$true] %s316
          %322 = dma.hbm_to_vmem [thread:$0]  %s315, 1024, %s317, %s306, 512, 512, 32
        $region52: #{tpu_custom_call.1} parent=47 // pred_fallthru
          _
      $region48: #{tpu_custom_call.1} parent=5 // pred_fallthru
        _
      %p323 = scmp.le.s32.totalorder 1, %s23
      %p324 = scmp.lt.s32.totalorder %s23, 3
      %p325 = pnand %p323, %p324
      %p326 = pneg %p325
      // Predicated region
      $region53: #{tpu_custom_call.1} parent=5 // pred_check
        _
      $region54: #{tpu_custom_call.1} parent=5 // pred_check_branch
        %328 = sbr.rel (%p325) target = $region56
      $region55: #{tpu_custom_call.1} parent=5 // pred_region
        %s329 = ssub.s32 %s23, 1
        %s330 = sand.u32 %s36, 1
        %s331 = scalar_lea.sflag [#allocation6], %s330
        %s332 = sand.u32 %s36, 1
        %s333 = smul.addr %s332, 64
        %s334 = scalar_lea.vmem [#allocation5], %s333
        // Predicated region
        $region57: #{tpu_custom_call.1} parent=55 // pred_check
          %p335 = pneg %p49
        $region58: #{tpu_custom_call.1} parent=55 // pred_check_branch
          %337 = sbr.rel (%p335) target = $region60
        $region59: #{tpu_custom_call.1} parent=55 // pred_region
          %338 = dma.done %s331, 1024
        $region60: #{tpu_custom_call.1} parent=55 // pred_fallthru
          _
        // Predicated region
        $region61: #{tpu_custom_call.1} parent=55 // pred_check
          %p339 = pneg %p154
        $region62: #{tpu_custom_call.1} parent=55 // pred_check_branch
          %341 = sbr.rel (%p339) target = $region64
        $region63: #{tpu_custom_call.1} parent=55 // pred_region
          %342 = dma.done [#allocation10], 64
        $region64: #{tpu_custom_call.1} parent=55 // pred_fallthru
          _
        // Predicated region
        $region65: #{tpu_custom_call.1} parent=55 // pred_check
          %p343 = pneg %p217
        $region66: #{tpu_custom_call.1} parent=55 // pred_check_branch
          %345 = sbr.rel (%p343) target = $region68
        $region67: #{tpu_custom_call.1} parent=55 // pred_region
          %346 = dma.done [#allocation8], 16
        $region68: #{tpu_custom_call.1} parent=55 // pred_fallthru
          _
        %347 = sfence
        %s348 = sand.u32 %s36, 1
        %s349 = scalar_lea.sflag [#allocation6], %s348
        %s350 = sand.u32 %s36, 1
        %s351 = smul.addr %s350, 64
        %s352 = scalar_lea.vmem [#allocation5], %s351
        %p353 = pneg %p49
        %p354 = pneg %p46
        %p355 = pneg %p70
        %p356 = pneg %p67
        %p357 = pneg %p91
        %p358 = pneg %p88
        %p359 = pneg %p112
        %p360 = pneg %p109
        %p361 = pneg %p133
        %p362 = pneg %p130
        %p363 = pneg %p154
        %p364 = pneg %p151
        %p365 = pneg %p175
        %p366 = pneg %p172
        %p367 = pneg %p196
        %p368 = pneg %p193
        %p369 = pneg %p217
        %p370 = pneg %p214
        %p371 = pneg %p243
        %p372 = pneg %p240
        %s373 = sand.u32 %s230, 1
        %s374 = scalar_lea.sflag [#allocation7], %s373
        %s375 = sand.u32 %s230, 1
        %s376 = smul.addr %s375, 32
        %s377 = scalar_lea.vmem [#allocation12], %s376
        %v378 = vld [vmem:[%s7] sm:$0x7f]
        %v379 = vld [vmem:[%s7 + $0x8] sm:$0x7f]
        %v380 = vld [vmem:[%s334] sm:$0xff]
        %v381 = vld [vmem:[%s334 + $0x8] sm:$0xff]
        %v382 = vld [vmem:[%s334 + $0x10] sm:$0xff]
        %v383 = vld [vmem:[%s334 + $0x20] sm:$0xff]
        %v384 = vld [vmem:[%s334 + $0x28] sm:$0xff]
        %v385 = vld [vmem:[%s334 + $0x30] sm:$0xff]
        %v386 = vlaneseq
        %v387 = vshrl.u32 %v386, 7
        %v388 = vsub.s32 2, %v387
        %v389 = vrot.slane %v378, %v388
        %v390 = vlaneseq
        %v391 = vshrl.u32 %v390, 7
        %v392 = vsub.s32 2, %v391
        %v393 = vrot.slane %v379, %v392
        %396 = vrot.lane.b32.xlu0 %v389, 111
        %v397 = vpop.permute.xlu0 %396
        %398 = vrot.lane.b32.xlu0 %v393, 111
        %v399 = vpop.permute.xlu0 %398
        %vm400 = vcmask 908288
        %v401 = vsel %vm400, %v397, %v399
        %v405 = vmul.f32 %v380, %v397
        %v406 = vmul.f32 %v381, %v401
        %v407 = vmul.f32 %v382, %v399
        %v408 = vmul.f32 %v383, %v397
        %v409 = vmul.f32 %v384, %v401
        %v410 = vmul.f32 %v385, %v399
        %417 = vrot.lane.b32.xlu0 %v405, 17
        %v418 = vpop.permute.xlu0 %417
        %419 = vrot.lane.b32.xlu0 %v406, 17
        %v420 = vpop.permute.xlu0 %419
        %421 = vrot.lane.b32.xlu0 %v407, 17
        %v422 = vpop.permute.xlu0 %421
        %423 = vrot.lane.b32.xlu0 %v408, 17
        %v424 = vpop.permute.xlu0 %423
        %425 = vrot.lane.b32.xlu0 %v409, 17
        %v426 = vpop.permute.xlu0 %425
        %427 = vrot.lane.b32.xlu0 %v410, 17
        %v428 = vpop.permute.xlu0 %427
        %vm429 = vcmask 138240
        %v430 = vsel %vm429, %v418, %v420
        %v431 = vsel %vm429, %v420, %v422
        %v432 = vsel %vm429, %v424, %v426
        %v433 = vsel %vm429, %v426, %v428
        %438 = vst [vmem:[#allocation2] sm:$0xff] %v430
        %439 = vst [vmem:[#allocation2 + $0x8] sm:$0xff] %v431
        %440 = vst [vmem:[#allocation2 + $0x10] sm:$0xff] %v432
        %441 = vst [vmem:[#allocation2 + $0x18] sm:$0xff] %v433
        %v442 = vld [vmem:[%s334] sm:$0xff]
        %v443 = vld [vmem:[%s334 + $0x8] sm:$0xff]
        %v444 = vld [vmem:[%s334 + $0x10] sm:$0xff]
        %v445 = vld [vmem:[%s334 + $0x20] sm:$0xff]
        %v446 = vld [vmem:[%s334 + $0x28] sm:$0xff]
        %v447 = vld [vmem:[%s334 + $0x30] sm:$0xff]
        %454 = vrot.lane.b32.xlu0 %v442, 16
        %v455 = vpop.permute.xlu0 %454
        %456 = vrot.lane.b32.xlu0 %v443, 16
        %v457 = vpop.permute.xlu0 %456
        %458 = vrot.lane.b32.xlu0 %v444, 16
        %v459 = vpop.permute.xlu0 %458
        %460 = vrot.lane.b32.xlu0 %v445, 16
        %v461 = vpop.permute.xlu0 %460
        %462 = vrot.lane.b32.xlu0 %v446, 16
        %v463 = vpop.permute.xlu0 %462
        %464 = vrot.lane.b32.xlu0 %v447, 16
        %v465 = vpop.permute.xlu0 %464
        %vm466 = vcmask 130048
        %v467 = vsel %vm466, %v455, %v457
        %v468 = vsel %vm466, %v457, %v459
        %v469 = vsel %vm466, %v461, %v463
        %v470 = vsel %vm466, %v463, %v465
        %475 = vst [vmem:[#allocation2 + $0x20] sm:$0xff] %v467
        %476 = vst [vmem:[#allocation2 + $0x28] sm:$0xff] %v468
        %477 = vst [vmem:[#allocation2 + $0x30] sm:$0xff] %v469
        %478 = vst [vmem:[#allocation2 + $0x38] sm:$0xff] %v470
        %v479 = vld [vmem:[%s334] sm:$0xff]
        %v480 = vld [vmem:[%s334 + $0x8] sm:$0xff]
        %v481 = vld [vmem:[%s334 + $0x10] sm:$0xff]
        %v482 = vld [vmem:[%s334 + $0x20] sm:$0xff]
        %v483 = vld [vmem:[%s334 + $0x28] sm:$0xff]
        %v484 = vld [vmem:[%s334 + $0x30] sm:$0xff]
        %v485 = vlaneseq
        %v486 = vshrl.u32 %v485, 7
        %v487 = vsub.s32 4, %v486
        %v488 = vrot.slane %v378, %v487
        %v489 = vlaneseq
        %v490 = vshrl.u32 %v489, 7
        %v491 = vsub.s32 4, %v490
        %v492 = vrot.slane %v379, %v491
        %495 = vrot.lane.b32.xlu0 %v488, 113
        %v496 = vpop.permute.xlu0 %495
        %497 = vrot.lane.b32.xlu0 %v492, 113
        %v498 = vpop.permute.xlu0 %497
        %vm499 = vcmask 924672
        %v500 = vsel %vm499, %v496, %v498
        %v504 = vmul.f32 %v479, %v496
        %v505 = vmul.f32 %v480, %v500
        %v506 = vmul.f32 %v481, %v498
        %v507 = vmul.f32 %v482, %v496
        %v508 = vmul.f32 %v483, %v500
        %v509 = vmul.f32 %v484, %v498
        %516 = vrot.lane.b32.xlu0 %v504, 15
        %v517 = vpop.permute.xlu0 %516
        %518 = vrot.lane.b32.xlu0 %v505, 15
        %v519 = vpop.permute.xlu0 %518
        %520 = vrot.lane.b32.xlu0 %v506, 15
        %v521 = vpop.permute.xlu0 %520
        %522 = vrot.lane.b32.xlu0 %v507, 15
        %v523 = vpop.permute.xlu0 %522
        %524 = vrot.lane.b32.xlu0 %v508, 15
        %v525 = vpop.permute.xlu0 %524
        %526 = vrot.lane.b32.xlu0 %v509, 15
        %v527 = vpop.permute.xlu0 %526
        %vm528 = vcmask 121856
        %v529 = vsel %vm528, %v517, %v519
        %v530 = vsel %vm528, %v519, %v521
        %v531 = vsel %vm528, %v523, %v525
        %v532 = vsel %vm528, %v525, %v527
        %537 = vst [vmem:[#allocation2 + $0x40] sm:$0xff] %v529
        %538 = vst [vmem:[#allocation2 + $0x48] sm:$0xff] %v530
        %539 = vst [vmem:[#allocation2 + $0x50] sm:$0xff] %v531
        %540 = vst [vmem:[#allocation2 + $0x58] sm:$0xff] %v532
        %v541 = vld [vmem:[%s334] sm:$0xff]
        %v542 = vld [vmem:[%s334 + $0x8] sm:$0xff]
        %v543 = vld [vmem:[%s334 + $0x10] sm:$0xff]
        %v544 = vld [vmem:[%s334 + $0x20] sm:$0xff]
        %v545 = vld [vmem:[%s334 + $0x28] sm:$0xff]
        %v546 = vld [vmem:[%s334 + $0x30] sm:$0xff]
        %547 = vrot.lane.b32.xlu0 %v389, 127
        %v548 = vpop.permute.xlu0 %547
        %549 = vrot.lane.b32.xlu0 %v393, 127
        %v550 = vpop.permute.xlu0 %549
        %vm551 = vcmask 1039360
        %v552 = vsel %vm551, %v548, %v550
        %v556 = vmul.f32 %v541, %v548
        %v557 = vmul.f32 %v542, %v552
        %v558 = vmul.f32 %v543, %v550
        %v559 = vmul.f32 %v544, %v548
        %v560 = vmul.f32 %v545, %v552
        %v561 = vmul.f32 %v546, %v550
        %568 = vrot.lane.b32.xlu0 %v556, 1
        %v569 = vpop.permute.xlu0 %568
        %570 = vrot.lane.b32.xlu0 %v557, 1
        %v571 = vpop.permute.xlu0 %570
        %572 = vrot.lane.b32.xlu0 %v558, 1
        %v573 = vpop.permute.xlu0 %572
        %574 = vrot.lane.b32.xlu0 %v559, 1
        %v575 = vpop.permute.xlu0 %574
        %576 = vrot.lane.b32.xlu0 %v560, 1
        %v577 = vpop.permute.xlu0 %576
        %578 = vrot.lane.b32.xlu0 %v561, 1
        %v579 = vpop.permute.xlu0 %578
        %vm580 = vcmask 7168
        %v581 = vsel %vm580, %v569, %v571
        %v582 = vsel %vm580, %v571, %v573
        %v583 = vsel %vm580, %v575, %v577
        %v584 = vsel %vm580, %v577, %v579
        %589 = vst [vmem:[#allocation2 + $0x60] sm:$0xff] %v581
        %590 = vst [vmem:[#allocation2 + $0x68] sm:$0xff] %v582
        %591 = vst [vmem:[#allocation2 + $0x70] sm:$0xff] %v583
        %592 = vst [vmem:[#allocation2 + $0x78] sm:$0xff] %v584
        %v593 = vld [vmem:[%s334 + $0x8] sm:$0xff]
        %v594 = vld [vmem:[%s334 + $0x10] sm:$0xff]
        %v595 = vld [vmem:[%s334 + $0x28] sm:$0xff]
        %v596 = vld [vmem:[%s334 + $0x30] sm:$0xff]
        %597 = vst [vmem:[#allocation2 + $0x80] sm:$0xff] %v593
        %598 = vst [vmem:[#allocation2 + $0x88] sm:$0xff] %v594
        %599 = vst [vmem:[#allocation2 + $0x90] sm:$0xff] %v595
        %600 = vst [vmem:[#allocation2 + $0x98] sm:$0xff] %v596
        %v601 = vld [vmem:[%s334 + $0x8] sm:$0xff]
        %v602 = vld [vmem:[%s334 + $0x10] sm:$0xff]
        %v603 = vld [vmem:[%s334 + $0x18] sm:$0xff]
        %v604 = vld [vmem:[%s334 + $0x28] sm:$0xff]
        %v605 = vld [vmem:[%s334 + $0x30] sm:$0xff]
        %v606 = vld [vmem:[%s334 + $0x38] sm:$0xff]
        %607 = vrot.lane.b32.xlu0 %v488, 1
        %v608 = vpop.permute.xlu0 %607
        %609 = vrot.lane.b32.xlu0 %v492, 1
        %v610 = vpop.permute.xlu0 %609
        %v611 = vsel %vm580, %v608, %v610
        %v615 = vmul.f32 %v601, %v608
        %v616 = vmul.f32 %v602, %v611
        %v617 = vmul.f32 %v603, %v610
        %v618 = vmul.f32 %v604, %v608
        %v619 = vmul.f32 %v605, %v611
        %v620 = vmul.f32 %v606, %v610
        %627 = vrot.lane.b32.xlu0 %v615, 127
        %v628 = vpop.permute.xlu0 %627
        %629 = vrot.lane.b32.xlu0 %v616, 127
        %v630 = vpop.permute.xlu0 %629
        %631 = vrot.lane.b32.xlu0 %v617, 127
        %v632 = vpop.permute.xlu0 %631
        %633 = vrot.lane.b32.xlu0 %v618, 127
        %v634 = vpop.permute.xlu0 %633
        %635 = vrot.lane.b32.xlu0 %v619, 127
        %v636 = vpop.permute.xlu0 %635
        %637 = vrot.lane.b32.xlu0 %v620, 127
        %v638 = vpop.permute.xlu0 %637
        %v639 = vsel %vm551, %v628, %v630
        %v640 = vsel %vm551, %v630, %v632
        %v641 = vsel %vm551, %v634, %v636
        %v642 = vsel %vm551, %v636, %v638
        %647 = vst [vmem:[#allocation2 + $0xa0] sm:$0xff] %v639
        %648 = vst [vmem:[#allocation2 + $0xa8] sm:$0xff] %v640
        %649 = vst [vmem:[#allocation2 + $0xb0] sm:$0xff] %v641
        %650 = vst [vmem:[#allocation2 + $0xb8] sm:$0xff] %v642
        %v651 = vld [vmem:[%s334 + $0x8] sm:$0xff]
        %v652 = vld [vmem:[%s334 + $0x10] sm:$0xff]
        %v653 = vld [vmem:[%s334 + $0x18] sm:$0xff]
        %v654 = vld [vmem:[%s334 + $0x28] sm:$0xff]
        %v655 = vld [vmem:[%s334 + $0x30] sm:$0xff]
        %v656 = vld [vmem:[%s334 + $0x38] sm:$0xff]
        %657 = vrot.lane.b32.xlu0 %v389, 15
        %v658 = vpop.permute.xlu0 %657
        %659 = vrot.lane.b32.xlu0 %v393, 15
        %v660 = vpop.permute.xlu0 %659
        %v661 = vsel %vm528, %v658, %v660
        %v665 = vmul.f32 %v651, %v658
        %v666 = vmul.f32 %v652, %v661
        %v667 = vmul.f32 %v653, %v660
        %v668 = vmul.f32 %v654, %v658
        %v669 = vmul.f32 %v655, %v661
        %v670 = vmul.f32 %v656, %v660
        %677 = vrot.lane.b32.xlu0 %v665, 113
        %v678 = vpop.permute.xlu0 %677
        %679 = vrot.lane.b32.xlu0 %v666, 113
        %v680 = vpop.permute.xlu0 %679
        %681 = vrot.lane.b32.xlu0 %v667, 113
        %v682 = vpop.permute.xlu0 %681
        %683 = vrot.lane.b32.xlu0 %v668, 113
        %v684 = vpop.permute.xlu0 %683
        %685 = vrot.lane.b32.xlu0 %v669, 113
        %v686 = vpop.permute.xlu0 %685
        %687 = vrot.lane.b32.xlu0 %v670, 113
        %v688 = vpop.permute.xlu0 %687
        %v689 = vsel %vm499, %v678, %v680
        %v690 = vsel %vm499, %v680, %v682
        %v691 = vsel %vm499, %v684, %v686
        %v692 = vsel %vm499, %v686, %v688
        %697 = vst [vmem:[#allocation2 + $0xc0] sm:$0xff] %v689
        %698 = vst [vmem:[#allocation2 + $0xc8] sm:$0xff] %v690
        %699 = vst [vmem:[#allocation2 + $0xd0] sm:$0xff] %v691
        %700 = vst [vmem:[#allocation2 + $0xd8] sm:$0xff] %v692
        %v701 = vld [vmem:[%s334 + $0x8] sm:$0xff]
        %v702 = vld [vmem:[%s334 + $0x10] sm:$0xff]
        %v703 = vld [vmem:[%s334 + $0x18] sm:$0xff]
        %v704 = vld [vmem:[%s334 + $0x28] sm:$0xff]
        %v705 = vld [vmem:[%s334 + $0x30] sm:$0xff]
        %v706 = vld [vmem:[%s334 + $0x38] sm:$0xff]
        %713 = vrot.lane.b32.xlu0 %v701, 112
        %v714 = vpop.permute.xlu0 %713
        %715 = vrot.lane.b32.xlu0 %v702, 112
        %v716 = vpop.permute.xlu0 %715
        %717 = vrot.lane.b32.xlu0 %v703, 112
        %v718 = vpop.permute.xlu0 %717
        %719 = vrot.lane.b32.xlu0 %v704, 112
        %v720 = vpop.permute.xlu0 %719
        %721 = vrot.lane.b32.xlu0 %v705, 112
        %v722 = vpop.permute.xlu0 %721
        %723 = vrot.lane.b32.xlu0 %v706, 112
        %v724 = vpop.permute.xlu0 %723
        %vm725 = vcmask 916480
        %v726 = vsel %vm725, %v714, %v716
        %v727 = vsel %vm725, %v716, %v718
        %v728 = vsel %vm725, %v720, %v722
        %v729 = vsel %vm725, %v722, %v724
        %734 = vst [vmem:[#allocation2 + $0xe0] sm:$0xff] %v726
        %735 = vst [vmem:[#allocation2 + $0xe8] sm:$0xff] %v727
        %736 = vst [vmem:[#allocation2 + $0xf0] sm:$0xff] %v728
        %737 = vst [vmem:[#allocation2 + $0xf8] sm:$0xff] %v729
        %v738 = vld [vmem:[%s334 + $0x8] sm:$0xff]
        %v739 = vld [vmem:[%s334 + $0x10] sm:$0xff]
        %v740 = vld [vmem:[%s334 + $0x18] sm:$0xff]
        %v741 = vld [vmem:[%s334 + $0x28] sm:$0xff]
        %v742 = vld [vmem:[%s334 + $0x30] sm:$0xff]
        %v743 = vld [vmem:[%s334 + $0x38] sm:$0xff]
        %744 = vrot.lane.b32.xlu0 %v488, 17
        %v745 = vpop.permute.xlu0 %744
        %746 = vrot.lane.b32.xlu0 %v492, 17
        %v747 = vpop.permute.xlu0 %746
        %v748 = vsel %vm429, %v745, %v747
        %v752 = vmul.f32 %v738, %v745
        %v753 = vmul.f32 %v739, %v748
        %v754 = vmul.f32 %v740, %v747
        %v755 = vmul.f32 %v741, %v745
        %v756 = vmul.f32 %v742, %v748
        %v757 = vmul.f32 %v743, %v747
        %764 = vrot.lane.b32.xlu0 %v752, 111
        %v765 = vpop.permute.xlu0 %764
        %766 = vrot.lane.b32.xlu0 %v753, 111
        %v767 = vpop.permute.xlu0 %766
        %768 = vrot.lane.b32.xlu0 %v754, 111
        %v769 = vpop.permute.xlu0 %768
        %770 = vrot.lane.b32.xlu0 %v755, 111
        %v771 = vpop.permute.xlu0 %770
        %772 = vrot.lane.b32.xlu0 %v756, 111
        %v773 = vpop.permute.xlu0 %772
        %774 = vrot.lane.b32.xlu0 %v757, 111
        %v775 = vpop.permute.xlu0 %774
        %v776 = vsel %vm400, %v765, %v767
        %v777 = vsel %vm400, %v767, %v769
        %v778 = vsel %vm400, %v771, %v773
        %v779 = vsel %vm400, %v773, %v775
        %784 = vst [vmem:[#allocation2 + $0x100] sm:$0xff] %v776
        %785 = vst [vmem:[#allocation2 + $0x108] sm:$0xff] %v777
        %786 = vst [vmem:[#allocation2 + $0x110] sm:$0xff] %v778
        %787 = vst [vmem:[#allocation2 + $0x118] sm:$0xff] %v779
        %v788 = vld [vmem:[%s1] sm:$0xff]
        %v789 = vld [vmem:[%s1 + $0x8] sm:$0xff]
        %v790 = vld [vmem:[%s1 + $0x10] sm:$0xff]
        %v791 = vld [vmem:[%s1 + $0x18] sm:$0xff]
        %v792 = vld [vmem:[#allocation2] sm:$0xff]
        %v793 = vld [vmem:[#allocation2 + $0x8] sm:$0xff]
        %v794 = vld [vmem:[#allocation2 + $0x10] sm:$0xff]
        %v795 = vld [vmem:[#allocation2 + $0x18] sm:$0xff]
        %v796 = vld [vmem:[#allocation2 + $0x20] sm:$0xff]
        %v797 = vld [vmem:[#allocation2 + $0x28] sm:$0xff]
        %v798 = vld [vmem:[#allocation2 + $0x30] sm:$0xff]
        %v799 = vld [vmem:[#allocation2 + $0x38] sm:$0xff]
        %v800 = vld [vmem:[#allocation2 + $0x40] sm:$0xff]
        %v801 = vld [vmem:[#allocation2 + $0x48] sm:$0xff]
        %v802 = vld [vmem:[#allocation2 + $0x50] sm:$0xff]
        %v803 = vld [vmem:[#allocation2 + $0x58] sm:$0xff]
        %v804 = vld [vmem:[#allocation2 + $0x60] sm:$0xff]
        %v805 = vld [vmem:[#allocation2 + $0x68] sm:$0xff]
        %v806 = vld [vmem:[#allocation2 + $0x70] sm:$0xff]
        %v807 = vld [vmem:[#allocation2 + $0x78] sm:$0xff]
        %v808 = vld [vmem:[#allocation2 + $0x80] sm:$0xff]
        %v809 = vld [vmem:[#allocation2 + $0x88] sm:$0xff]
        %v810 = vld [vmem:[#allocation2 + $0x90] sm:$0xff]
        %v811 = vld [vmem:[#allocation2 + $0x98] sm:$0xff]
        %v812 = vld [vmem:[#allocation2 + $0xa0] sm:$0xff]
        %v813 = vld [vmem:[#allocation2 + $0xa8] sm:$0xff]
        %v814 = vld [vmem:[#allocation2 + $0xb0] sm:$0xff]
        %v815 = vld [vmem:[#allocation2 + $0xb8] sm:$0xff]
        %v816 = vld [vmem:[#allocation2 + $0xc0] sm:$0xff]
        %v817 = vld [vmem:[#allocation2 + $0xc8] sm:$0xff]
        %v818 = vld [vmem:[#allocation2 + $0xd0] sm:$0xff]
        %v819 = vld [vmem:[#allocation2 + $0xd8] sm:$0xff]
        %v820 = vld [vmem:[#allocation2 + $0xe0] sm:$0xff]
        %v821 = vld [vmem:[#allocation2 + $0xe8] sm:$0xff]
        %v822 = vld [vmem:[#allocation2 + $0xf0] sm:$0xff]
        %v823 = vld [vmem:[#allocation2 + $0xf8] sm:$0xff]
        %v824 = vld [vmem:[#allocation2 + $0x100] sm:$0xff]
        %v825 = vld [vmem:[#allocation2 + $0x108] sm:$0xff]
        %v826 = vld [vmem:[#allocation2 + $0x110] sm:$0xff]
        %v827 = vld [vmem:[#allocation2 + $0x118] sm:$0xff]
        %v828 = vld [vmem:[%s2] sm:$0xff]
        %v829 = vld [vmem:[%s2 + $0x8] sm:$0xff]
        %831 = vset.pattern.permute.xlu0 0
        %832 = vperm.xlu0 %831, %v828
        %v833 = vpop.permute.xlu0 %832
        %836 = vset.pattern.permute.xlu0 0
        %837 = vperm.xlu0 %836, %v829
        %v838 = vpop.permute.xlu0 %837
        %v841 = vsel %vm466, %v789, 0
        %v844 = vsel %vm466, %v791, 0
        %846 = vmatprep.subr.mxu0 %v793
        %847 = vmatpush1.msra.mxu0 %v792
        %848 = vmatprep.subr.mxu0 %v795
        %849 = vmatpush1.msra.mxu0 %v794
        %850 = vmatprep.subr.mxu0 %v797
        %851 = vmatpush1.msra.mxu0 %v796
        %852 = vmatprep.subr.mxu0 %v799
        %853 = vmatpush1.msra.mxu0 %v798
        %854 = vmatprep.subr.mxu0 %v801
        %855 = vmatpush1.msra.mxu0 %v800
        %856 = vmatprep.subr.mxu0 %v803
        %857 = vmatpush1.msra.mxu0 %v802
        %858 = vmatprep.subr.mxu0 %v805
        %859 = vmatpush1.msra.mxu0 %v804
        %860 = vmatprep.subr.mxu0 %v807
        %861 = vmatpush1.msra.mxu0 %v806
        %862 = vmatprep.subr.mxu0 %v809
        %863 = vmatpush1.msra.mxu0 %v808
        %864 = vmatprep.subr.mxu0 %v811
        %865 = vmatpush1.msra.mxu0 %v810
        %866 = vmatprep.subr.mxu0 %v813
        %867 = vmatpush1.msra.mxu0 %v812
        %868 = vmatprep.subr.mxu0 %v815
        %869 = vmatpush1.msra.mxu0 %v814
        %870 = vmatprep.subr.mxu0 %v817
        %871 = vmatpush1.msra.mxu0 %v816
        %872 = vmatprep.subr.mxu0 %v819
        %873 = vmatpush1.msra.mxu0 %v818
        %874 = vmatprep.subr.mxu0 %v821
        %875 = vmatpush1.msra.mxu0 %v820
        %876 = vmatprep.subr.mxu0 %v823
        %877 = vmatpush1.msra.mxu0 %v822
        %878 = vmatprep.subr.mxu0 %v825
        %879 = vmatpush1.msra.mxu0 %v824
        %880 = vmatprep.subr.mxu0 %v827
        %881 = vmatpush1.msra.mxu0 %v826
        %882 = vmatprep.subr.mxu0 0.0
        %883 = vmatpush1.msra.mxu0 0.0
        %884 = vmatprep.subr.mxu0 0.0
        %885 = vmatpush1.msra.mxu0 0.0
        %886 = vmatprep.subr.mxu0 0.0
        %887 = vmatpush1.msra.mxu0 0.0
        %888 = vmatprep.subr.mxu0 0.0
        %889 = vmatpush1.msra.mxu0 0.0
        %890 = vmatprep.subr.mxu0 0.0
        %891 = vmatpush1.msra.mxu0 0.0
        %892 = vmatprep.subr.mxu0 0.0
        %893 = vmatpush1.msra.mxu0 0.0
        %894 = vmatprep.subr.mxu0 0.0
        %895 = vmatpush1.msra.mxu0 0.0
        %896 = vmatprep.subr.mxu0 0.0
        %897 = vmatpush1.msra.mxu0 0.0
        %898 = vmatprep.subr.mxu0 0.0
        %899 = vmatpush1.msra.mxu0 0.0
        %900 = vmatprep.subr.mxu0 0.0
        %901 = vmatpush1.msra.mxu0 0.0
        %902 = vmatprep.subr.mxu0 0.0
        %903 = vmatpush1.msra.mxu0 0.0
        %904 = vmatprep.subr.mxu0 0.0
        %905 = vmatpush1.msra.mxu0 0.0
        %906 = vmatprep.subr.mxu0 0.0
        %907 = vmatpush1.msra.mxu0 0.0
        %908 = vmatprep.subr.mxu0 0.0
        %909 = vmatpush1.msra.mxu0 0.0
        %910 = vmatprep.mubr.f32.mxu0 %v841
        %911 = vmatmul.mubr.f32.gmra.mrb[0].mxu0 %v788
        %v912 = vpop.f32.mrb[0].mxu0
        %v913 = vadd.f32 %v833, %v912
        %v914 = vpop.f32.mrb[0].mxu0
        %v915 = vadd.f32 %v833, %v914
        %916 = vmatprep.mubr.f32.mxu0 %v844
        %917 = vmatmul.mubr.f32.gmra.mrb[0].mxu0 %v790
        %v918 = vpop.f32.mrb[0].mxu0
        %v919 = vadd.f32 %v838, %v918
        %v920 = vpop.f32.mrb[0].mxu0
        %v921 = vadd.f32 %v838, %v920
        %922 = vdwg.mxu0
        %v923 = vmax.f32 %v913, 0.0
        %v924 = vmax.f32 %v915, 0.0
        %v925 = vmax.f32 %v919, 0.0
        %v926 = vmax.f32 %v921, 0.0
        %927 = vst [vmem:[#allocation3] sm:$0xff] 0.0
        %928 = vst [vmem:[#allocation3 + $0x20] sm:$0xff] 0.0
        %929 = vst [vmem:[#allocation3 + $0x18] sm:$0xff] 0.0
        %930 = vst [vmem:[#allocation3 + $0x38] sm:$0xff] 0.0
        %931 = vst [vmem:[#allocation3 + $0x8] sm:$0xff] %v923
        %932 = vst [vmem:[#allocation3 + $0x10] sm:$0xff] %v924
        %933 = vst [vmem:[#allocation3 + $0x28] sm:$0xff] %v925
        %934 = vst [vmem:[#allocation3 + $0x30] sm:$0xff] %v926
        %v935 = vld [vmem:[#allocation3] sm:$0xff]
        %v936 = vld [vmem:[#allocation3 + $0x8] sm:$0xff]
        %v937 = vld [vmem:[#allocation3 + $0x10] sm:$0xff]
        %v938 = vld [vmem:[#allocation3 + $0x20] sm:$0xff]
        %v939 = vld [vmem:[#allocation3 + $0x28] sm:$0xff]
        %v940 = vld [vmem:[#allocation3 + $0x30] sm:$0xff]
        %v941 = vmul.f32 %v935, %v397
        %v942 = vmul.f32 %v936, %v401
        %v943 = vmul.f32 %v937, %v399
        %v944 = vmul.f32 %v938, %v397
        %v945 = vmul.f32 %v939, %v401
        %v946 = vmul.f32 %v940, %v399
        %953 = vrot.lane.b32.xlu0 %v941, 17
        %v954 = vpop.permute.xlu0 %953
        %955 = vrot.lane.b32.xlu0 %v942, 17
        %v956 = vpop.permute.xlu0 %955
        %957 = vrot.lane.b32.xlu0 %v943, 17
        %v958 = vpop.permute.xlu0 %957
        %959 = vrot.lane.b32.xlu0 %v944, 17
        %v960 = vpop.permute.xlu0 %959
        %961 = vrot.lane.b32.xlu0 %v945, 17
        %v962 = vpop.permute.xlu0 %961
        %963 = vrot.lane.b32.xlu0 %v946, 17
        %v964 = vpop.permute.xlu0 %963
        %v965 = vsel %vm429, %v954, %v956
        %v966 = vsel %vm429, %v956, %v958
        %v967 = vsel %vm429, %v960, %v962
        %v968 = vsel %vm429, %v962, %v964
        %973 = vst [vmem:[#allocation2] sm:$0xff] %v965
        %974 = vst [vmem:[#allocation2 + $0x8] sm:$0xff] %v966
        %975 = vst [vmem:[#allocation2 + $0x10] sm:$0xff] %v967
        %976 = vst [vmem:[#allocation2 + $0x18] sm:$0xff] %v968
        %v977 = vld [vmem:[#allocation3] sm:$0xff]
        %v978 = vld [vmem:[#allocation3 + $0x8] sm:$0xff]
        %v979 = vld [vmem:[#allocation3 + $0x10] sm:$0xff]
        %v980 = vld [vmem:[#allocation3 + $0x20] sm:$0xff]
        %v981 = vld [vmem:[#allocation3 + $0x28] sm:$0xff]
        %v982 = vld [vmem:[#allocation3 + $0x30] sm:$0xff]
        %989 = vrot.lane.b32.xlu0 %v977, 16
        %v990 = vpop.permute.xlu0 %989
        %991 = vrot.lane.b32.xlu0 %v978, 16
        %v992 = vpop.permute.xlu0 %991
        %993 = vrot.lane.b32.xlu0 %v979, 16
        %v994 = vpop.permute.xlu0 %993
        %995 = vrot.lane.b32.xlu0 %v980, 16
        %v996 = vpop.permute.xlu0 %995
        %997 = vrot.lane.b32.xlu0 %v981, 16
        %v998 = vpop.permute.xlu0 %997
        %999 = vrot.lane.b32.xlu0 %v982, 16
        %v1000 = vpop.permute.xlu0 %999
        %v1001 = vsel %vm466, %v990, %v992
        %v1002 = vsel %vm466, %v992, %v994
        %v1003 = vsel %vm466, %v996, %v998
        %v1004 = vsel %vm466, %v998, %v1000
        %1009 = vst [vmem:[#allocation2 + $0x20] sm:$0xff] %v1001
        %1010 = vst [vmem:[#allocation2 + $0x28] sm:$0xff] %v1002
        %1011 = vst [vmem:[#allocation2 + $0x30] sm:$0xff] %v1003
        %1012 = vst [vmem:[#allocation2 + $0x38] sm:$0xff] %v1004
        %v1013 = vld [vmem:[#allocation3] sm:$0xff]
        %v1014 = vld [vmem:[#allocation3 + $0x8] sm:$0xff]
        %v1015 = vld [vmem:[#allocation3 + $0x10] sm:$0xff]
        %v1016 = vld [vmem:[#allocation3 + $0x20] sm:$0xff]
        %v1017 = vld [vmem:[#allocation3 + $0x28] sm:$0xff]
        %v1018 = vld [vmem:[#allocation3 + $0x30] sm:$0xff]
        %v1019 = vmul.f32 %v1013, %v496
        %v1020 = vmul.f32 %v1014, %v500
        %v1021 = vmul.f32 %v1015, %v498
        %v1022 = vmul.f32 %v1016, %v496
        %v1023 = vmul.f32 %v1017, %v500
        %v1024 = vmul.f32 %v1018, %v498
        %1031 = vrot.lane.b32.xlu0 %v1019, 15
        %v1032 = vpop.permute.xlu0 %1031
        %1033 = vrot.lane.b32.xlu0 %v1020, 15
        %v1034 = vpop.permute.xlu0 %1033
        %1035 = vrot.lane.b32.xlu0 %v1021, 15
        %v1036 = vpop.permute.xlu0 %1035
        %1037 = vrot.lane.b32.xlu0 %v1022, 15
        %v1038 = vpop.permute.xlu0 %1037
        %1039 = vrot.lane.b32.xlu0 %v1023, 15
        %v1040 = vpop.permute.xlu0 %1039
        %1041 = vrot.lane.b32.xlu0 %v1024, 15
        %v1042 = vpop.permute.xlu0 %1041
        %v1043 = vsel %vm528, %v1032, %v1034
        %v1044 = vsel %vm528, %v1034, %v1036
        %v1045 = vsel %vm528, %v1038, %v1040
        %v1046 = vsel %vm528, %v1040, %v1042
        %1051 = vst [vmem:[#allocation2 + $0x40] sm:$0xff] %v1043
        %1052 = vst [vmem:[#allocation2 + $0x48] sm:$0xff] %v1044
        %1053 = vst [vmem:[#allocation2 + $0x50] sm:$0xff] %v1045
        %1054 = vst [vmem:[#allocation2 + $0x58] sm:$0xff] %v1046
        %v1055 = vld [vmem:[#allocation3] sm:$0xff]
        %v1056 = vld [vmem:[#allocation3 + $0x8] sm:$0xff]
        %v1057 = vld [vmem:[#allocation3 + $0x10] sm:$0xff]
        %v1058 = vld [vmem:[#allocation3 + $0x20] sm:$0xff]
        %v1059 = vld [vmem:[#allocation3 + $0x28] sm:$0xff]
        %v1060 = vld [vmem:[#allocation3 + $0x30] sm:$0xff]
        %v1061 = vmul.f32 %v1055, %v548
        %v1062 = vmul.f32 %v1056, %v552
        %v1063 = vmul.f32 %v1057, %v550
        %v1064 = vmul.f32 %v1058, %v548
        %v1065 = vmul.f32 %v1059, %v552
        %v1066 = vmul.f32 %v1060, %v550
        %1073 = vrot.lane.b32.xlu0 %v1061, 1
        %v1074 = vpop.permute.xlu0 %1073
        %1075 = vrot.lane.b32.xlu0 %v1062, 1
        %v1076 = vpop.permute.xlu0 %1075
        %1077 = vrot.lane.b32.xlu0 %v1063, 1
        %v1078 = vpop.permute.xlu0 %1077
        %1079 = vrot.lane.b32.xlu0 %v1064, 1
        %v1080 = vpop.permute.xlu0 %1079
        %1081 = vrot.lane.b32.xlu0 %v1065, 1
        %v1082 = vpop.permute.xlu0 %1081
        %1083 = vrot.lane.b32.xlu0 %v1066, 1
        %v1084 = vpop.permute.xlu0 %1083
        %v1085 = vsel %vm580, %v1074, %v1076
        %v1086 = vsel %vm580, %v1076, %v1078
        %v1087 = vsel %vm580, %v1080, %v1082
        %v1088 = vsel %vm580, %v1082, %v1084
        %1093 = vst [vmem:[#allocation2 + $0x60] sm:$0xff] %v1085
        %1094 = vst [vmem:[#allocation2 + $0x68] sm:$0xff] %v1086
        %1095 = vst [vmem:[#allocation2 + $0x70] sm:$0xff] %v1087
        %1096 = vst [vmem:[#allocation2 + $0x78] sm:$0xff] %v1088
        %v1097 = vld [vmem:[#allocation3 + $0x8] sm:$0xff]
        %v1098 = vld [vmem:[#allocation3 + $0x10] sm:$0xff]
        %v1099 = vld [vmem:[#allocation3 + $0x28] sm:$0xff]
        %v1100 = vld [vmem:[#allocation3 + $0x30] sm:$0xff]
        %1101 = vst [vmem:[#allocation2 + $0x80] sm:$0xff] %v1097
        %1102 = vst [vmem:[#allocation2 + $0x88] sm:$0xff] %v1098
        %1103 = vst [vmem:[#allocation2 + $0x90] sm:$0xff] %v1099
        %1104 = vst [vmem:[#allocation2 + $0x98] sm:$0xff] %v1100
        %v1105 = vld [vmem:[#allocation3 + $0x8] sm:$0xff]
        %v1106 = vld [vmem:[#allocation3 + $0x10] sm:$0xff]
        %v1107 = vld [vmem:[#allocation3 + $0x18] sm:$0xff]
        %v1108 = vld [vmem:[#allocation3 + $0x28] sm:$0xff]
        %v1109 = vld [vmem:[#allocation3 + $0x30] sm:$0xff]
        %v1110 = vld [vmem:[#allocation3 + $0x38] sm:$0xff]
        %v1111 = vmul.f32 %v1105, %v608
        %v1112 = vmul.f32 %v1106, %v611
        %v1113 = vmul.f32 %v1107, %v610
        %v1114 = vmul.f32 %v1108, %v608
        %v1115 = vmul.f32 %v1109, %v611
        %v1116 = vmul.f32 %v1110, %v610
        %1123 = vrot.lane.b32.xlu0 %v1111, 127
        %v1124 = vpop.permute.xlu0 %1123
        %1125 = vrot.lane.b32.xlu0 %v1112, 127
        %v1126 = vpop.permute.xlu0 %1125
        %1127 = vrot.lane.b32.xlu0 %v1113, 127
        %v1128 = vpop.permute.xlu0 %1127
        %1129 = vrot.lane.b32.xlu0 %v1114, 127
        %v1130 = vpop.permute.xlu0 %1129
        %1131 = vrot.lane.b32.xlu0 %v1115, 127
        %v1132 = vpop.permute.xlu0 %1131
        %1133 = vrot.lane.b32.xlu0 %v1116, 127
        %v1134 = vpop.permute.xlu0 %1133
        %v1135 = vsel %vm551, %v1124, %v1126
        %v1136 = vsel %vm551, %v1126, %v1128
        %v1137 = vsel %vm551, %v1130, %v1132
        %v1138 = vsel %vm551, %v1132, %v1134
        %1143 = vst [vmem:[#allocation2 + $0xa0] sm:$0xff] %v1135
        %1144 = vst [vmem:[#allocation2 + $0xa8] sm:$0xff] %v1136
        %1145 = vst [vmem:[#allocation2 + $0xb0] sm:$0xff] %v1137
        %1146 = vst [vmem:[#allocation2 + $0xb8] sm:$0xff] %v1138
        %v1147 = vld [vmem:[#allocation3 + $0x8] sm:$0xff]
        %v1148 = vld [vmem:[#allocation3 + $0x10] sm:$0xff]
        %v1149 = vld [vmem:[#allocation3 + $0x18] sm:$0xff]
        %v1150 = vld [vmem:[#allocation3 + $0x28] sm:$0xff]
        %v1151 = vld [vmem:[#allocation3 + $0x30] sm:$0xff]
        %v1152 = vld [vmem:[#allocation3 + $0x38] sm:$0xff]
        %v1153 = vmul.f32 %v1147, %v658
        %v1154 = vmul.f32 %v1148, %v661
        %v1155 = vmul.f32 %v1149, %v660
        %v1156 = vmul.f32 %v1150, %v658
        %v1157 = vmul.f32 %v1151, %v661
        %v1158 = vmul.f32 %v1152, %v660
        %1165 = vrot.lane.b32.xlu0 %v1153, 113
        %v1166 = vpop.permute.xlu0 %1165
        %1167 = vrot.lane.b32.xlu0 %v1154, 113
        %v1168 = vpop.permute.xlu0 %1167
        %1169 = vrot.lane.b32.xlu0 %v1155, 113
        %v1170 = vpop.permute.xlu0 %1169
        %1171 = vrot.lane.b32.xlu0 %v1156, 113
        %v1172 = vpop.permute.xlu0 %1171
        %1173 = vrot.lane.b32.xlu0 %v1157, 113
        %v1174 = vpop.permute.xlu0 %1173
        %1175 = vrot.lane.b32.xlu0 %v1158, 113
        %v1176 = vpop.permute.xlu0 %1175
        %v1177 = vsel %vm499, %v1166, %v1168
        %v1178 = vsel %vm499, %v1168, %v1170
        %v1179 = vsel %vm499, %v1172, %v1174
        %v1180 = vsel %vm499, %v1174, %v1176
        %1185 = vst [vmem:[#allocation2 + $0xc0] sm:$0xff] %v1177
        %1186 = vst [vmem:[#allocation2 + $0xc8] sm:$0xff] %v1178
        %1187 = vst [vmem:[#allocation2 + $0xd0] sm:$0xff] %v1179
        %1188 = vst [vmem:[#allocation2 + $0xd8] sm:$0xff] %v1180
        %v1189 = vld [vmem:[#allocation3 + $0x8] sm:$0xff]
        %v1190 = vld [vmem:[#allocation3 + $0x10] sm:$0xff]
        %v1191 = vld [vmem:[#allocation3 + $0x18] sm:$0xff]
        %v1192 = vld [vmem:[#allocation3 + $0x28] sm:$0xff]
        %v1193 = vld [vmem:[#allocation3 + $0x30] sm:$0xff]
        %v1194 = vld [vmem:[#allocation3 + $0x38] sm:$0xff]
        %1201 = vrot.lane.b32.xlu0 %v1189, 112
        %v1202 = vpop.permute.xlu0 %1201
        %1203 = vrot.lane.b32.xlu0 %v1190, 112
        %v1204 = vpop.permute.xlu0 %1203
        %1205 = vrot.lane.b32.xlu0 %v1191, 112
        %v1206 = vpop.permute.xlu0 %1205
        %1207 = vrot.lane.b32.xlu0 %v1192, 112
        %v1208 = vpop.permute.xlu0 %1207
        %1209 = vrot.lane.b32.xlu0 %v1193, 112
        %v1210 = vpop.permute.xlu0 %1209
        %1211 = vrot.lane.b32.xlu0 %v1194, 112
        %v1212 = vpop.permute.xlu0 %1211
        %v1213 = vsel %vm725, %v1202, %v1204
        %v1214 = vsel %vm725, %v1204, %v1206
        %v1215 = vsel %vm725, %v1208, %v1210
        %v1216 = vsel %vm725, %v1210, %v1212
        %1221 = vst [vmem:[#allocation2 + $0xe0] sm:$0xff] %v1213
        %1222 = vst [vmem:[#allocation2 + $0xe8] sm:$0xff] %v1214
        %1223 = vst [vmem:[#allocation2 + $0xf0] sm:$0xff] %v1215
        %1224 = vst [vmem:[#allocation2 + $0xf8] sm:$0xff] %v1216
        %v1225 = vld [vmem:[#allocation3 + $0x8] sm:$0xff]
        %v1226 = vld [vmem:[#allocation3 + $0x10] sm:$0xff]
        %v1227 = vld [vmem:[#allocation3 + $0x18] sm:$0xff]
        %v1228 = vld [vmem:[#allocation3 + $0x28] sm:$0xff]
        %v1229 = vld [vmem:[#allocation3 + $0x30] sm:$0xff]
        %v1230 = vld [vmem:[#allocation3 + $0x38] sm:$0xff]
        %v1231 = vmul.f32 %v1225, %v745
        %v1232 = vmul.f32 %v1226, %v748
        %v1233 = vmul.f32 %v1227, %v747
        %v1234 = vmul.f32 %v1228, %v745
        %v1235 = vmul.f32 %v1229, %v748
        %v1236 = vmul.f32 %v1230, %v747
        %1243 = vrot.lane.b32.xlu0 %v1231, 111
        %v1244 = vpop.permute.xlu0 %1243
        %1245 = vrot.lane.b32.xlu0 %v1232, 111
        %v1246 = vpop.permute.xlu0 %1245
        %1247 = vrot.lane.b32.xlu0 %v1233, 111
        %v1248 = vpop.permute.xlu0 %1247
        %1249 = vrot.lane.b32.xlu0 %v1234, 111
        %v1250 = vpop.permute.xlu0 %1249
        %1251 = vrot.lane.b32.xlu0 %v1235, 111
        %v1252 = vpop.permute.xlu0 %1251
        %1253 = vrot.lane.b32.xlu0 %v1236, 111
        %v1254 = vpop.permute.xlu0 %1253
        %v1255 = vsel %vm400, %v1244, %v1246
        %v1256 = vsel %vm400, %v1246, %v1248
        %v1257 = vsel %vm400, %v1250, %v1252
        %v1258 = vsel %vm400, %v1252, %v1254
        %1263 = vst [vmem:[#allocation2 + $0x100] sm:$0xff] %v1255
        %1264 = vst [vmem:[#allocation2 + $0x108] sm:$0xff] %v1256
        %1265 = vst [vmem:[#allocation2 + $0x110] sm:$0xff] %v1257
        %1266 = vst [vmem:[#allocation2 + $0x118] sm:$0xff] %v1258
        %v1267 = vld [vmem:[%s3] sm:$0xff]
        %v1268 = vld [vmem:[%s3 + $0x8] sm:$0xff]
        %v1269 = vld [vmem:[%s3 + $0x10] sm:$0xff]
        %v1270 = vld [vmem:[%s3 + $0x18] sm:$0xff]
        %v1271 = vld [vmem:[#allocation2] sm:$0xff]
        %v1272 = vld [vmem:[#allocation2 + $0x8] sm:$0xff]
        %v1273 = vld [vmem:[#allocation2 + $0x10] sm:$0xff]
        %v1274 = vld [vmem:[#allocation2 + $0x18] sm:$0xff]
        %v1275 = vld [vmem:[#allocation2 + $0x20] sm:$0xff]
        %v1276 = vld [vmem:[#allocation2 + $0x28] sm:$0xff]
        %v1277 = vld [vmem:[#allocation2 + $0x30] sm:$0xff]
        %v1278 = vld [vmem:[#allocation2 + $0x38] sm:$0xff]
        %v1279 = vld [vmem:[#allocation2 + $0x40] sm:$0xff]
        %v1280 = vld [vmem:[#allocation2 + $0x48] sm:$0xff]
        %v1281 = vld [vmem:[#allocation2 + $0x50] sm:$0xff]
        %v1282 = vld [vmem:[#allocation2 + $0x58] sm:$0xff]
        %v1283 = vld [vmem:[#allocation2 + $0x60] sm:$0xff]
        %v1284 = vld [vmem:[#allocation2 + $0x68] sm:$0xff]
        %v1285 = vld [vmem:[#allocation2 + $0x70] sm:$0xff]
        %v1286 = vld [vmem:[#allocation2 + $0x78] sm:$0xff]
        %v1287 = vld [vmem:[#allocation2 + $0x80] sm:$0xff]
        %v1288 = vld [vmem:[#allocation2 + $0x88] sm:$0xff]
        %v1289 = vld [vmem:[#allocation2 + $0x90] sm:$0xff]
        %v1290 = vld [vmem:[#allocation2 + $0x98] sm:$0xff]
        %v1291 = vld [vmem:[#allocation2 + $0xa0] sm:$0xff]
        %v1292 = vld [vmem:[#allocation2 + $0xa8] sm:$0xff]
        %v1293 = vld [vmem:[#allocation2 + $0xb0] sm:$0xff]
        %v1294 = vld [vmem:[#allocation2 + $0xb8] sm:$0xff]
        %v1295 = vld [vmem:[#allocation2 + $0xc0] sm:$0xff]
        %v1296 = vld [vmem:[#allocation2 + $0xc8] sm:$0xff]
        %v1297 = vld [vmem:[#allocation2 + $0xd0] sm:$0xff]
        %v1298 = vld [vmem:[#allocation2 + $0xd8] sm:$0xff]
        %v1299 = vld [vmem:[#allocation2 + $0xe0] sm:$0xff]
        %v1300 = vld [vmem:[#allocation2 + $0xe8] sm:$0xff]
        %v1301 = vld [vmem:[#allocation2 + $0xf0] sm:$0xff]
        %v1302 = vld [vmem:[#allocation2 + $0xf8] sm:$0xff]
        %v1303 = vld [vmem:[#allocation2 + $0x100] sm:$0xff]
        %v1304 = vld [vmem:[#allocation2 + $0x108] sm:$0xff]
        %v1305 = vld [vmem:[#allocation2 + $0x110] sm:$0xff]
        %v1306 = vld [vmem:[#allocation2 + $0x118] sm:$0xff]
        %v1307 = vld [vmem:[%s4] sm:$0xff]
        %v1308 = vld [vmem:[%s4 + $0x8] sm:$0xff]
        %1310 = vset.pattern.permute.xlu0 0
        %1311 = vperm.xlu0 %1310, %v1307
        %v1312 = vpop.permute.xlu0 %1311
        %1315 = vset.pattern.permute.xlu0 0
        %1316 = vperm.xlu0 %1315, %v1308
        %v1317 = vpop.permute.xlu0 %1316
        %v1320 = vsel %vm466, %v1268, 0
        %v1323 = vsel %vm466, %v1270, 0
        %1325 = vmatprep.subr.mxu0 %v1272
        %1326 = vmatpush1.msra.mxu0 %v1271
        %1327 = vmatprep.subr.mxu0 %v1274
        %1328 = vmatpush1.msra.mxu0 %v1273
        %1329 = vmatprep.subr.mxu0 %v1276
        %1330 = vmatpush1.msra.mxu0 %v1275
        %1331 = vmatprep.subr.mxu0 %v1278
        %1332 = vmatpush1.msra.mxu0 %v1277
        %1333 = vmatprep.subr.mxu0 %v1280
        %1334 = vmatpush1.msra.mxu0 %v1279
        %1335 = vmatprep.subr.mxu0 %v1282
        %1336 = vmatpush1.msra.mxu0 %v1281
        %1337 = vmatprep.subr.mxu0 %v1284
        %1338 = vmatpush1.msra.mxu0 %v1283
        %1339 = vmatprep.subr.mxu0 %v1286
        %1340 = vmatpush1.msra.mxu0 %v1285
        %1341 = vmatprep.subr.mxu0 %v1288
        %1342 = vmatpush1.msra.mxu0 %v1287
        %1343 = vmatprep.subr.mxu0 %v1290
        %1344 = vmatpush1.msra.mxu0 %v1289
        %1345 = vmatprep.subr.mxu0 %v1292
        %1346 = vmatpush1.msra.mxu0 %v1291
        %1347 = vmatprep.subr.mxu0 %v1294
        %1348 = vmatpush1.msra.mxu0 %v1293
        %1349 = vmatprep.subr.mxu0 %v1296
        %1350 = vmatpush1.msra.mxu0 %v1295
        %1351 = vmatprep.subr.mxu0 %v1298
        %1352 = vmatpush1.msra.mxu0 %v1297
        %1353 = vmatprep.subr.mxu0 %v1300
        %1354 = vmatpush1.msra.mxu0 %v1299
        %1355 = vmatprep.subr.mxu0 %v1302
        %1356 = vmatpush1.msra.mxu0 %v1301
        %1357 = vmatprep.subr.mxu0 %v1304
        %1358 = vmatpush1.msra.mxu0 %v1303
        %1359 = vmatprep.subr.mxu0 %v1306
        %1360 = vmatpush1.msra.mxu0 %v1305
        %1361 = vmatprep.subr.mxu0 0.0
        %1362 = vmatpush1.msra.mxu0 0.0
        %1363 = vmatprep.subr.mxu0 0.0
        %1364 = vmatpush1.msra.mxu0 0.0
        %1365 = vmatprep.subr.mxu0 0.0
        %1366 = vmatpush1.msra.mxu0 0.0
        %1367 = vmatprep.subr.mxu0 0.0
        %1368 = vmatpush1.msra.mxu0 0.0
        %1369 = vmatprep.subr.mxu0 0.0
        %1370 = vmatpush1.msra.mxu0 0.0
        %1371 = vmatprep.subr.mxu0 0.0
        %1372 = vmatpush1.msra.mxu0 0.0
        %1373 = vmatprep.subr.mxu0 0.0
        %1374 = vmatpush1.msra.mxu0 0.0
        %1375 = vmatprep.subr.mxu0 0.0
        %1376 = vmatpush1.msra.mxu0 0.0
        %1377 = vmatprep.subr.mxu0 0.0
        %1378 = vmatpush1.msra.mxu0 0.0
        %1379 = vmatprep.subr.mxu0 0.0
        %1380 = vmatpush1.msra.mxu0 0.0
        %1381 = vmatprep.subr.mxu0 0.0
        %1382 = vmatpush1.msra.mxu0 0.0
        %1383 = vmatprep.subr.mxu0 0.0
        %1384 = vmatpush1.msra.mxu0 0.0
        %1385 = vmatprep.subr.mxu0 0.0
        %1386 = vmatpush1.msra.mxu0 0.0
        %1387 = vmatprep.subr.mxu0 0.0
        %1388 = vmatpush1.msra.mxu0 0.0
        %1389 = vmatprep.mubr.f32.mxu0 %v1320
        %1390 = vmatmul.mubr.f32.gmra.mrb[0].mxu0 %v1267
        %v1391 = vpop.f32.mrb[0].mxu0
        %v1392 = vadd.f32 %v1312, %v1391
        %v1393 = vpop.f32.mrb[0].mxu0
        %v1394 = vadd.f32 %v1312, %v1393
        %1395 = vmatprep.mubr.f32.mxu0 %v1323
        %1396 = vmatmul.mubr.f32.gmra.mrb[0].mxu0 %v1269
        %v1397 = vpop.f32.mrb[0].mxu0
        %v1398 = vadd.f32 %v1317, %v1397
        %v1399 = vpop.f32.mrb[0].mxu0
        %v1400 = vadd.f32 %v1317, %v1399
        %1401 = vdwg.mxu0
        %v1402 = vadd.f32 %v1392, %v1394
        %1403 = vadd.xlane.f32.xlu0 %v1402
        %v1404 = vpop.xlane.xlu0 %1403
        %v1405 = vadd.f32 %v1398, %v1400
        %1406 = vadd.xlane.f32.xlu0 %v1405
        %v1407 = vpop.xlane.xlu0 %1406
        %v1408 = vrcp.pop 256.0
        %v1409 = vmul.f32 %v1404, %v1408
        %v1410 = vmul.f32 %v1407, %v1408
        %v1411 = vmax.f32 %v1392, %v1394
        %1412 = vmax.xlane.f32.xlu0 %v1411
        %v1413 = vpop.xlane.xlu0 %1412
        %v1414 = vmax.f32 %v1398, %v1400
        %1415 = vmax.xlane.f32.xlu0 %v1414
        %v1416 = vpop.xlane.xlu0 %1415
        %v1417 = vld [vmem:[#allocation9] sm:$0xf]
        %v1419 = vsel %vm466, %v1417, 0
        %1421 = vmatprep.subr.mxu0 0.0
        %1422 = vmatpush1.msra.mxu0 %v1409
        %1423 = vmatprep.subr.mxu0 0.0
        %1424 = vmatpush1.msra.mxu0 %v1410
        %1425 = vmatprep.subr.mxu0 0.0
        %1426 = vmatpush1.msra.mxu0 0.0
        %1427 = vmatprep.subr.mxu0 0.0
        %1428 = vmatpush1.msra.mxu0 0.0
        %1429 = vmatprep.subr.mxu0 0.0
        %1430 = vmatpush1.msra.mxu0 0.0
        %1431 = vmatprep.subr.mxu0 0.0
        %1432 = vmatpush1.msra.mxu0 0.0
        %1433 = vmatprep.subr.mxu0 0.0
        %1434 = vmatpush1.msra.mxu0 0.0
        %1435 = vmatprep.subr.mxu0 0.0
        %1436 = vmatpush1.msra.mxu0 0.0
        %1437 = vmatprep.subr.mxu0 0.0
        %1438 = vmatpush1.msra.mxu0 0.0
        %1439 = vmatprep.subr.mxu0 0.0
        %1440 = vmatpush1.msra.mxu0 0.0
        %1441 = vmatprep.subr.mxu0 0.0
        %1442 = vmatpush1.msra.mxu0 0.0
        %1443 = vmatprep.subr.mxu0 0.0
        %1444 = vmatpush1.msra.mxu0 0.0
        %1445 = vmatprep.subr.mxu0 0.0
        %1446 = vmatpush1.msra.mxu0 0.0
        %1447 = vmatprep.subr.mxu0 0.0
        %1448 = vmatpush1.msra.mxu0 0.0
        %1449 = vmatprep.subr.mxu0 0.0
        %1450 = vmatpush1.msra.mxu0 0.0
        %1451 = vmatprep.subr.mxu0 0.0
        %1452 = vmatpush1.msra.mxu0 0.0
        %1453 = vmatprep.subr.mxu0 0.0
        %1454 = vmatpush1.msra.mxu0 0.0
        %1455 = vmatprep.subr.mxu0 0.0
        %1456 = vmatpush1.msra.mxu0 0.0
        %1457 = vmatprep.subr.mxu0 0.0
        %1458 = vmatpush1.msra.mxu0 0.0
        %1459 = vmatprep.subr.mxu0 0.0
        %1460 = vmatpush1.msra.mxu0 0.0
        %1461 = vmatprep.subr.mxu0 0.0
        %1462 = vmatpush1.msra.mxu0 0.0
        %1463 = vmatprep.subr.mxu0 0.0
        %1464 = vmatpush1.msra.mxu0 0.0
        %1465 = vmatprep.subr.mxu0 0.0
        %1466 = vmatpush1.msra.mxu0 0.0
        %1467 = vmatprep.subr.mxu0 0.0
        %1468 = vmatpush1.msra.mxu0 0.0
        %1469 = vmatprep.subr.mxu0 0.0
        %1470 = vmatpush1.msra.mxu0 0.0
        %1471 = vmatprep.subr.mxu0 0.0
        %1472 = vmatpush1.msra.mxu0 0.0
        %1473 = vmatprep.subr.mxu0 0.0
        %1474 = vmatpush1.msra.mxu0 0.0
        %1475 = vmatprep.subr.mxu0 0.0
        %1476 = vmatpush1.msra.mxu0 0.0
        %1477 = vmatprep.subr.mxu0 0.0
        %1478 = vmatpush1.msra.mxu0 0.0
        %1479 = vmatprep.subr.mxu0 0.0
        %1480 = vmatpush1.msra.mxu0 0.0
        %1481 = vmatprep.subr.mxu0 0.0
        %1482 = vmatpush1.msra.mxu0 0.0
        %1483 = vmatprep.subr.mxu0 0.0
        %1484 = vmatpush1.msra.mxu0 0.0
        %1485 = vmatprep.mubr.f32.mxu0 0.0
        %1486 = vmatmul.mubr.f32.gmra.mrb[0].mxu0 %v1419
        %v1487 = vpop.f32.mrb[0].mxu0
        %v1488 = vadd.f32 0.0, %v1487
        %v1489 = vpop.f32.mrb[0].mxu0
        %1490 = vdwg.mxu0
        %v1491 = vmax.f32 %v1488, 0.0
        %v1492 = vld [vmem:[%s6] sm:$0xff]
        %v1493 = vld [vmem:[%s6 + $0x8] sm:$0xff]
        %1494 = vmatprep.subr.mxu0 0.0
        %1495 = vmatpush1.msra.mxu0 %v1413
        %1496 = vmatprep.subr.mxu0 0.0
        %1497 = vmatpush1.msra.mxu0 %v1416
        %1498 = vmatprep.subr.mxu0 0.0
        %1499 = vmatpush1.msra.mxu0 0.0
        %1500 = vmatprep.subr.mxu0 0.0
        %1501 = vmatpush1.msra.mxu0 0.0
        %1502 = vmatprep.subr.mxu0 0.0
        %1503 = vmatpush1.msra.mxu0 0.0
        %1504 = vmatprep.subr.mxu0 0.0
        %1505 = vmatpush1.msra.mxu0 0.0
        %1506 = vmatprep.subr.mxu0 0.0
        %1507 = vmatpush1.msra.mxu0 0.0
        %1508 = vmatprep.subr.mxu0 0.0
        %1509 = vmatpush1.msra.mxu0 0.0
        %1510 = vmatprep.subr.mxu0 0.0
        %1511 = vmatpush1.msra.mxu0 0.0
        %1512 = vmatprep.subr.mxu0 0.0
        %1513 = vmatpush1.msra.mxu0 0.0
        %1514 = vmatprep.subr.mxu0 0.0
        %1515 = vmatpush1.msra.mxu0 0.0
        %1516 = vmatprep.subr.mxu0 0.0
        %1517 = vmatpush1.msra.mxu0 0.0
        %1518 = vmatprep.subr.mxu0 0.0
        %1519 = vmatpush1.msra.mxu0 0.0
        %1520 = vmatprep.subr.mxu0 0.0
        %1521 = vmatpush1.msra.mxu0 0.0
        %1522 = vmatprep.subr.mxu0 0.0
        %1523 = vmatpush1.msra.mxu0 0.0
        %1524 = vmatprep.subr.mxu0 0.0
        %1525 = vmatpush1.msra.mxu0 0.0
        %1526 = vmatprep.subr.mxu0 0.0
        %1527 = vmatpush1.msra.mxu0 0.0
        %1528 = vmatprep.subr.mxu0 0.0
        %1529 = vmatpush1.msra.mxu0 0.0
        %1530 = vmatprep.subr.mxu0 0.0
        %1531 = vmatpush1.msra.mxu0 0.0
        %1532 = vmatprep.subr.mxu0 0.0
        %1533 = vmatpush1.msra.mxu0 0.0
        %1534 = vmatprep.subr.mxu0 0.0
        %1535 = vmatpush1.msra.mxu0 0.0
        %1536 = vmatprep.subr.mxu0 0.0
        %1537 = vmatpush1.msra.mxu0 0.0
        %1538 = vmatprep.subr.mxu0 0.0
        %1539 = vmatpush1.msra.mxu0 0.0
        %1540 = vmatprep.subr.mxu0 0.0
        %1541 = vmatpush1.msra.mxu0 0.0
        %1542 = vmatprep.subr.mxu0 0.0
        %1543 = vmatpush1.msra.mxu0 0.0
        %1544 = vmatprep.subr.mxu0 0.0
        %1545 = vmatpush1.msra.mxu0 0.0
        %1546 = vmatprep.subr.mxu0 0.0
        %1547 = vmatpush1.msra.mxu0 0.0
        %1548 = vmatprep.subr.mxu0 0.0
        %1549 = vmatpush1.msra.mxu0 0.0
        %1550 = vmatprep.subr.mxu0 0.0
        %1551 = vmatpush1.msra.mxu0 0.0
        %1552 = vmatprep.subr.mxu0 0.0
        %1553 = vmatpush1.msra.mxu0 0.0
        %1554 = vmatprep.subr.mxu0 0.0
        %1555 = vmatpush1.msra.mxu0 0.0
        %1556 = vmatprep.subr.mxu0 0.0
        %1557 = vmatpush1.msra.mxu0 0.0
        %1558 = vmatprep.mubr.f32.mxu0 0.0
        %1559 = vmatmul.mubr.f32.gmra.mrb[0].mxu0 %v1419
        %v1560 = vpop.f32.mrb[0].mxu0
        %v1561 = vadd.f32 0.0, %v1560
        %v1562 = vpop.f32.mrb[0].mxu0
        %1563 = vdwg.mxu0
        %v1564 = vmax.f32 %v1561, 0.0
        %vm1565 = vcmask 31744
        %v1567 = vsel %vm1565, %v1492, 0
        %v1570 = vsel %vm1565, %v1493, 0
        %vm1572 = vcmask 1043456
        %v1574 = vsel %vm1572, %v1564, 0
        %1576 = vmatprep.subr.mxu0 0.0
        %1577 = vmatpush1.msra.mxu0 %v1574
        %1578 = vmatprep.subr.mxu0 0.0
        %1579 = vmatpush1.msra.mxu0 0.0
        %1580 = vmatprep.subr.mxu0 0.0
        %1581 = vmatpush1.msra.mxu0 0.0
        %1582 = vmatprep.subr.mxu0 0.0
        %1583 = vmatpush1.msra.mxu0 0.0
        %1584 = vmatprep.subr.mxu0 0.0
        %1585 = vmatpush1.msra.mxu0 0.0
        %1586 = vmatprep.subr.mxu0 0.0
        %1587 = vmatpush1.msra.mxu0 0.0
        %1588 = vmatprep.subr.mxu0 0.0
        %1589 = vmatpush1.msra.mxu0 0.0
        %1590 = vmatprep.subr.mxu0 0.0
        %1591 = vmatpush1.msra.mxu0 0.0
        %1592 = vmatprep.subr.mxu0 0.0
        %1593 = vmatpush1.msra.mxu0 0.0
        %1594 = vmatprep.subr.mxu0 0.0
        %1595 = vmatpush1.msra.mxu0 0.0
        %1596 = vmatprep.subr.mxu0 0.0
        %1597 = vmatpush1.msra.mxu0 0.0
        %1598 = vmatprep.subr.mxu0 0.0
        %1599 = vmatpush1.msra.mxu0 0.0
        %1600 = vmatprep.subr.mxu0 0.0
        %1601 = vmatpush1.msra.mxu0 0.0
        %1602 = vmatprep.subr.mxu0 0.0
        %1603 = vmatpush1.msra.mxu0 0.0
        %1604 = vmatprep.subr.mxu0 0.0
        %1605 = vmatpush1.msra.mxu0 0.0
        %1606 = vmatprep.subr.mxu0 0.0
        %1607 = vmatpush1.msra.mxu0 0.0
        %1608 = vmatprep.subr.mxu0 0.0
        %1609 = vmatpush1.msra.mxu0 0.0
        %1610 = vmatprep.subr.mxu0 0.0
        %1611 = vmatpush1.msra.mxu0 0.0
        %1612 = vmatprep.subr.mxu0 0.0
        %1613 = vmatpush1.msra.mxu0 0.0
        %1614 = vmatprep.subr.mxu0 0.0
        %1615 = vmatpush1.msra.mxu0 0.0
        %1616 = vmatprep.subr.mxu0 0.0
        %1617 = vmatpush1.msra.mxu0 0.0
        %1618 = vmatprep.subr.mxu0 0.0
        %1619 = vmatpush1.msra.mxu0 0.0
        %1620 = vmatprep.subr.mxu0 0.0
        %1621 = vmatpush1.msra.mxu0 0.0
        %1622 = vmatprep.subr.mxu0 0.0
        %1623 = vmatpush1.msra.mxu0 0.0
        %1624 = vmatprep.subr.mxu0 0.0
        %1625 = vmatpush1.msra.mxu0 0.0
        %1626 = vmatprep.subr.mxu0 0.0
        %1627 = vmatpush1.msra.mxu0 0.0
        %1628 = vmatprep.subr.mxu0 0.0
        %1629 = vmatpush1.msra.mxu0 0.0
        %1630 = vmatprep.subr.mxu0 0.0
        %1631 = vmatpush1.msra.mxu0 0.0
        %1632 = vmatprep.subr.mxu0 0.0
        %1633 = vmatpush1.msra.mxu0 0.0
        %1634 = vmatprep.subr.mxu0 0.0
        %1635 = vmatpush1.msra.mxu0 0.0
        %1636 = vmatprep.subr.mxu0 0.0
        %1637 = vmatpush1.msra.mxu0 0.0
        %1638 = vmatprep.subr.mxu0 0.0
        %1639 = vmatpush1.msra.mxu0 0.0
        %1640 = vmatprep.mubr.f32.mxu0 0.0
        %1641 = vmatmul.mubr.f32.gmra.mrb[0].mxu0 %v1567
        %v1642 = vpop.f32.mrb[0].mxu0
        %v1643 = vadd.f32 0.0, %v1642
        %v1644 = vpop.f32.mrb[0].mxu0
        %1645 = vmatprep.mubr.f32.mxu0 0.0
        %1646 = vmatmul.mubr.f32.gmra.mrb[0].mxu0 %v1570
        %v1647 = vpop.f32.mrb[0].mxu0
        %v1648 = vadd.f32 0.0, %v1647
        %v1649 = vpop.f32.mrb[0].mxu0
        %1650 = vdwg.mxu0
        %v1652 = vsel %vm1572, %v1491, 0
        %1654 = vmatprep.subr.mxu0 0.0
        %1655 = vmatpush1.msra.mxu0 %v1652
        %1656 = vmatprep.subr.mxu0 0.0
        %1657 = vmatpush1.msra.mxu0 0.0
        %1658 = vmatprep.subr.mxu0 0.0
        %1659 = vmatpush1.msra.mxu0 0.0
        %1660 = vmatprep.subr.mxu0 0.0
        %1661 = vmatpush1.msra.mxu0 0.0
        %1662 = vmatprep.subr.mxu0 0.0
        %1663 = vmatpush1.msra.mxu0 0.0
        %1664 = vmatprep.subr.mxu0 0.0
        %1665 = vmatpush1.msra.mxu0 0.0
        %1666 = vmatprep.subr.mxu0 0.0
        %1667 = vmatpush1.msra.mxu0 0.0
        %1668 = vmatprep.subr.mxu0 0.0
        %1669 = vmatpush1.msra.mxu0 0.0
        %1670 = vmatprep.subr.mxu0 0.0
        %1671 = vmatpush1.msra.mxu0 0.0
        %1672 = vmatprep.subr.mxu0 0.0
        %1673 = vmatpush1.msra.mxu0 0.0
        %1674 = vmatprep.subr.mxu0 0.0
        %1675 = vmatpush1.msra.mxu0 0.0
        %1676 = vmatprep.subr.mxu0 0.0
        %1677 = vmatpush1.msra.mxu0 0.0
        %1678 = vmatprep.subr.mxu0 0.0
        %1679 = vmatpush1.msra.mxu0 0.0
        %1680 = vmatprep.subr.mxu0 0.0
        %1681 = vmatpush1.msra.mxu0 0.0
        %1682 = vmatprep.subr.mxu0 0.0
        %1683 = vmatpush1.msra.mxu0 0.0
        %1684 = vmatprep.subr.mxu0 0.0
        %1685 = vmatpush1.msra.mxu0 0.0
        %1686 = vmatprep.subr.mxu0 0.0
        %1687 = vmatpush1.msra.mxu0 0.0
        %1688 = vmatprep.subr.mxu0 0.0
        %1689 = vmatpush1.msra.mxu0 0.0
        %1690 = vmatprep.subr.mxu0 0.0
        %1691 = vmatpush1.msra.mxu0 0.0
        %1692 = vmatprep.subr.mxu0 0.0
        %1693 = vmatpush1.msra.mxu0 0.0
        %1694 = vmatprep.subr.mxu0 0.0
        %1695 = vmatpush1.msra.mxu0 0.0
        %1696 = vmatprep.subr.mxu0 0.0
        %1697 = vmatpush1.msra.mxu0 0.0
        %1698 = vmatprep.subr.mxu0 0.0
        %1699 = vmatpush1.msra.mxu0 0.0
        %1700 = vmatprep.subr.mxu0 0.0
        %1701 = vmatpush1.msra.mxu0 0.0
        %1702 = vmatprep.subr.mxu0 0.0
        %1703 = vmatpush1.msra.mxu0 0.0
        %1704 = vmatprep.subr.mxu0 0.0
        %1705 = vmatpush1.msra.mxu0 0.0
        %1706 = vmatprep.subr.mxu0 0.0
        %1707 = vmatpush1.msra.mxu0 0.0
        %1708 = vmatprep.subr.mxu0 0.0
        %1709 = vmatpush1.msra.mxu0 0.0
        %1710 = vmatprep.subr.mxu0 0.0
        %1711 = vmatpush1.msra.mxu0 0.0
        %1712 = vmatprep.subr.mxu0 0.0
        %1713 = vmatpush1.msra.mxu0 0.0
        %1714 = vmatprep.subr.mxu0 0.0
        %1715 = vmatpush1.msra.mxu0 0.0
        %1716 = vmatprep.subr.mxu0 0.0
        %1717 = vmatpush1.msra.mxu0 0.0
        %1718 = vmatprep.mubr.f32.mxu0 0.0
        %1719 = vmatmul.mubr.f32.gmra.mrb[0].mxu0 %v1567
        %v1720 = vpop.f32.mrb[0].mxu0
        %v1721 = vadd.f32 %v1643, %v1720
        %v1722 = vpop.f32.mrb[0].mxu0
        %1723 = vmatprep.mubr.f32.mxu0 0.0
        %1724 = vmatmul.mubr.f32.gmra.mrb[0].mxu0 %v1570
        %v1725 = vpop.f32.mrb[0].mxu0
        %v1726 = vadd.f32 %v1648, %v1725
        %v1727 = vpop.f32.mrb[0].mxu0
        %1728 = vdwg.mxu0
        %v1729 = vxor.u32 %v1721, 2147483648
        %v1730 = vxor.u32 %v1726, 2147483648
        %v1731 = vmul.f32 %v1729, 1.442695
        %v1732 = vpow.pop %v1731
        %v1733 = vmul.f32 %v1730, 1.442695
        %v1734 = vpow.pop %v1733
        %v1735 = vadd.f32 %v1732, 1.0
        %v1736 = vadd.f32 %v1734, 1.0
        %v1737 = vrcp.pop %v1735
        %v1738 = vmul.f32 1.0, %v1737
        %v1739 = vrcp.pop %v1736
        %v1740 = vmul.f32 1.0, %v1739
        %1742 = vset.pattern.permute.xlu0 0
        %1743 = vperm.xlu0 %1742, %v1738
        %v1744 = vpop.permute.xlu0 %1743
        %1747 = vset.pattern.permute.xlu0 0
        %1748 = vperm.xlu0 %1747, %v1740
        %v1749 = vpop.permute.xlu0 %1748
        %v1751 = vmul.f32 %v1392, %v1744
        %v1752 = vmul.f32 %v1394, %v1744
        %v1753 = vmul.f32 %v1398, %v1749
        %v1754 = vmul.f32 %v1400, %v1749
        %v1755 = vadd.f32 %v1751, %v1753
        %v1756 = vrot.slane %v1755, 4
        %v1757 = vadd.f32 %v1755, %v1756
        %v1758 = vrot.slane %v1757, 2
        %v1759 = vadd.f32 %v1757, %v1758
        %v1760 = vrot.slane %v1759, 1
        %v1761 = vadd.f32 %v1759, %v1760
        %v1762 = vadd.f32 %v1752, %v1754
        %v1763 = vrot.slane %v1762, 4
        %v1764 = vadd.f32 %v1762, %v1763
        %v1765 = vrot.slane %v1764, 2
        %v1766 = vadd.f32 %v1764, %v1765
        %v1767 = vrot.slane %v1766, 1
        %v1768 = vadd.f32 %v1766, %v1767
        %v1769 = vrcp.pop 16.0
        %v1770 = vmul.f32 %v1761, %v1769
        %v1771 = vmul.f32 %v1768, %v1769
        %v1772 = vmax.f32 %v1751, %v1753
        %v1773 = vrot.slane %v1772, 4
        %v1774 = vmax.f32 %v1772, %v1773
        %v1775 = vrot.slane %v1774, 2
        %v1776 = vmax.f32 %v1774, %v1775
        %v1777 = vrot.slane %v1776, 1
        %v1778 = vmax.f32 %v1776, %v1777
        %v1779 = vmax.f32 %v1752, %v1754
        %v1780 = vrot.slane %v1779, 4
        %v1781 = vmax.f32 %v1779, %v1780
        %v1782 = vrot.slane %v1781, 2
        %v1783 = vmax.f32 %v1781, %v1782
        %v1784 = vrot.slane %v1783, 1
        %v1785 = vmax.f32 %v1783, %v1784
        %1786 = vst [vmem:[#allocation4] sm:$0x3] 0.0
        %1787 = vst [vmem:[#allocation4 + $0x6] sm:$0x3] 0.0
        %v1790 = vcombine.low %v1770, %v1771
        %v1792 = vunpack.c.l.s4 1966171168
        %v1793 = vunpack.c.0.s8 %v1792
        %v1794 = vlaneseq
        %v1795 = vshrl.u32 %v1794, 7
        %v1796 = vsub.s32 %v1793, %v1795
        %v1797 = vrot.slane %v1790, %v1796
        %v1799 = vunpack.c.l.s4 1966171168
        %v1800 = vunpack.c.0.s8 %v1799
        %v1801 = vlaneseq
        %v1802 = vshrl.u32 %v1801, 7
        %v1803 = vsub.s32 %v1800, %v1802
        %v1804 = vrot.slane %v1797, %v1803
        %v1806 = vlaneseq
        %vm1807 = vcmp.ge.s32.totalorder %v1806, 0
        %vm1808 = vcmp.lt.s32.totalorder %v1806, 256
        %vm1809 = vmand %vm1807, %vm1808
        %s1810 = scalar_lea.vmem [#allocation4], 2
        %1811 = vst.msk [vmem:[%s1810] ss:$2 sm:$0x3] %vm1809, %v1804
        %v1814 = vcombine.low %v1778, %v1785
        %v1816 = vunpack.c.l.s4 1966171168
        %v1817 = vunpack.c.0.s8 %v1816
        %v1818 = vlaneseq
        %v1819 = vshrl.u32 %v1818, 7
        %v1820 = vsub.s32 %v1817, %v1819
        %v1821 = vrot.slane %v1814, %v1820
        %v1823 = vunpack.c.l.s4 1966171168
        %v1824 = vunpack.c.0.s8 %v1823
        %v1825 = vlaneseq
        %v1826 = vshrl.u32 %v1825, 7
        %v1827 = vsub.s32 %v1824, %v1826
        %v1828 = vrot.slane %v1821, %v1827
        %s1830 = scalar_lea.vmem [#allocation4], 3
        %1831 = vst.msk [vmem:[%s1830] ss:$2 sm:$0x3] %vm1809, %v1828
        %v1832 = vld [vmem:[#allocation4] sm:$0x3f]
        %v1833 = vlaneseq
        %v1834 = vshrl.u32 %v1833, 7
        %v1835 = vsub.s32 0, %v1834
        %v1836 = vrot.slane %v378, %v1835
        %v1837 = vlaneseq
        %v1838 = vshrl.u32 %v1837, 7
        %v1839 = vsub.s32 0, %v1838
        %v1840 = vrot.slane %v379, %v1839
        %v1843 = vcombine.low %v1836, %v1840
        %v1845 = vunpack.c.l.s4 1983009808
        %v1846 = vunpack.c.0.s8 %v1845
        %v1847 = vlaneseq
        %v1848 = vshrl.u32 %v1847, 7
        %v1849 = vsub.s32 %v1846, %v1848
        %v1850 = vrot.slane %v1843, %v1849
        %1851 = vrot.lane.b32.xlu0 %v1850, 77
        %v1852 = vpop.permute.xlu0 %1851
        %v1853 = vrot.slane %v1852, 6
        %vm1854 = vcmask 629760
        %v1855 = vsel %vm1854, %v1853, %v1852
        %v1857 = vmul.f32 %v1832, %v1855
        %s1858 = sld [smem:[#allocation11]]
        %s1859 = sld [smem:[#allocation11 + $0x1]]
        %v1860 = vstv %s1858
        %v1861 = vmul.f32 %v1860, %v1857
        %v1862 = vadd.f32 %v1861, 0.0
        %v1863 = vstv %s1859
        %v1864 = vmul.f32 %v1863, %v1857
        %v1866 = vrot.slane %v1864, 7
        %v1867 = vrot.slane %v1866, 2
        %v1869 = vadd.f32 %v1862, %v1867
        %v1870 = vld [vmem:[#allocation4] sm:$0x3f]
        %v1871 = vlaneseq
        %v1872 = vshrl.u32 %v1871, 7
        %v1873 = vsub.s32 1, %v1872
        %v1874 = vrot.slane %v378, %v1873
        %v1875 = vlaneseq
        %v1876 = vshrl.u32 %v1875, 7
        %v1877 = vsub.s32 1, %v1876
        %v1878 = vrot.slane %v379, %v1877
        %v1881 = vcombine.low %v1874, %v1878
        %v1883 = vunpack.c.l.s4 1983009808
        %v1884 = vunpack.c.0.s8 %v1883
        %v1885 = vlaneseq
        %v1886 = vshrl.u32 %v1885, 7
        %v1887 = vsub.s32 %v1884, %v1886
        %v1888 = vrot.slane %v1881, %v1887
        %1889 = vrot.lane.b32.xlu0 %v1888, 78
        %v1890 = vpop.permute.xlu0 %1889
        %v1891 = vrot.slane %v1890, 6
        %vm1892 = vcmask 637952
        %v1893 = vsel %vm1892, %v1891, %v1890
        %v1895 = vmul.f32 %v1870, %v1893
        %s1896 = sld [smem:[#allocation11 + $0x2]]
        %s1897 = sld [smem:[#allocation11 + $0x3]]
        %v1898 = vstv %s1896
        %v1899 = vmul.f32 %v1898, %v1895
        %1901 = vrot.lane.b32.xlu0 %v1899, 127
        %v1902 = vpop.permute.xlu0 %1901
        %v1903 = vrot.slane %v1902, 2
        %v1904 = vsel %vm551, %v1902, %v1903
        %v1906 = vadd.f32 %v1869, %v1904
        %v1907 = vstv %s1897
        %v1908 = vmul.f32 %v1907, %v1895
        %v1910 = vrot.slane %v1908, 7
        %v1911 = vrot.slane %v1910, 2
        %1912 = vrot.lane.b32.xlu0 %v1911, 127
        %v1913 = vpop.permute.xlu0 %1912
        %v1914 = vrot.slane %v1913, 2
        %v1915 = vsel %vm551, %v1913, %v1914
        %v1917 = vadd.f32 %v1906, %v1915
        %v1918 = vld [vmem:[#allocation4] sm:$0x3f]
        %v1919 = vcombine.low %v389, %v393
        %v1921 = vunpack.c.l.s4 1983009808
        %v1922 = vunpack.c.0.s8 %v1921
        %v1923 = vlaneseq
        %v1924 = vshrl.u32 %v1923, 7
        %v1925 = vsub.s32 %v1922, %v1924
        %v1926 = vrot.slane %v1919, %v1925
        %1927 = vrot.lane.b32.xlu0 %v1926, 79
        %v1928 = vpop.permute.xlu0 %1927
        %v1929 = vrot.slane %v1928, 6
        %vm1930 = vcmask 646144
        %v1931 = vsel %vm1930, %v1929, %v1928
        %v1933 = vmul.f32 %v1918, %v1931
        %s1934 = sld [smem:[#allocation11 + $0x4]]
        %s1935 = sld [smem:[#allocation11 + $0x5]]
        %v1936 = vstv %s1934
        %v1937 = vmul.f32 %v1936, %v1933
        %1939 = vrot.lane.b32.xlu0 %v1937, 126
        %v1940 = vpop.permute.xlu0 %1939
        %v1941 = vrot.slane %v1940, 2
        %vm1942 = vcmask 1031168
        %v1943 = vsel %vm1942, %v1940, %v1941
        %v1945 = vadd.f32 %v1917, %v1943
        %v1946 = vstv %s1935
        %v1947 = vmul.f32 %v1946, %v1933
        %v1949 = vrot.slane %v1947, 7
        %v1950 = vrot.slane %v1949, 2
        %1951 = vrot.lane.b32.xlu0 %v1950, 126
        %v1952 = vpop.permute.xlu0 %1951
        %v1953 = vrot.slane %v1952, 2
        %v1954 = vsel %vm1942, %v1952, %v1953
        %v1956 = vadd.f32 %v1945, %v1954
        %v1957 = vld [vmem:[#allocation4] sm:$0x3f]
        %s1958 = sld [smem:[#allocation11 + $0x6]]
        %s1959 = sld [smem:[#allocation11 + $0x7]]
        %v1960 = vstv %s1958
        %v1961 = vmul.f32 %v1960, %v1957
        %1963 = vrot.lane.b32.xlu0 %v1961, 125
        %v1964 = vpop.permute.xlu0 %1963
        %v1965 = vrot.slane %v1964, 2
        %vm1966 = vcmask 1022976
        %v1967 = vsel %vm1966, %v1964, %v1965
        %v1969 = vadd.f32 %v1956, %v1967
        %v1970 = vstv %s1959
        %v1971 = vmul.f32 %v1970, %v1957
        %v1973 = vrot.slane %v1971, 7
        %v1974 = vrot.slane %v1973, 2
        %1975 = vrot.lane.b32.xlu0 %v1974, 125
        %v1976 = vpop.permute.xlu0 %1975
        %v1977 = vrot.slane %v1976, 2
        %v1978 = vsel %vm1966, %v1976, %v1977
        %v1980 = vadd.f32 %v1969, %v1978
        %v1981 = vcombine.low %v488, %v492
        %v1983 = vunpack.c.l.s4 1983009808
        %v1984 = vunpack.c.0.s8 %v1983
        %v1985 = vlaneseq
        %v1986 = vshrl.u32 %v1985, 7
        %v1987 = vsub.s32 %v1984, %v1986
        %v1988 = vrot.slane %v1981, %v1987
        %1989 = vrot.lane.b32.xlu0 %v1988, 81
        %v1990 = vpop.permute.xlu0 %1989
        %v1991 = vrot.slane %v1990, 6
        %vm1992 = vcmask 662528
        %v1993 = vsel %vm1992, %v1991, %v1990
        %v1995 = vmul.f32 %v1957, %v1993
        %s1996 = sld [smem:[#allocation11 + $0x8]]
        %s1997 = sld [smem:[#allocation11 + $0x9]]
        %v1998 = vstv %s1996
        %v1999 = vmul.f32 %v1998, %v1995
        %2001 = vrot.lane.b32.xlu0 %v1999, 124
        %v2002 = vpop.permute.xlu0 %2001
        %v2003 = vrot.slane %v2002, 2
        %vm2004 = vcmask 1014784
        %v2005 = vsel %vm2004, %v2002, %v2003
        %v2007 = vadd.f32 %v1980, %v2005
        %v2008 = vstv %s1997
        %v2009 = vmul.f32 %v2008, %v1995
        %v2011 = vrot.slane %v2009, 7
        %v2012 = vrot.slane %v2011, 2
        %2013 = vrot.lane.b32.xlu0 %v2012, 124
        %v2014 = vpop.permute.xlu0 %2013
        %v2015 = vrot.slane %v2014, 2
        %v2016 = vsel %vm2004, %v2014, %v2015
        %v2018 = vadd.f32 %v2007, %v2016
        %v2019 = vld [vmem:[#allocation4] sm:$0x3f]
        %v2020 = vlaneseq
        %v2021 = vshrl.u32 %v2020, 7
        %v2022 = vsub.s32 5, %v2021
        %v2023 = vrot.slane %v378, %v2022
        %v2024 = vlaneseq
        %v2025 = vshrl.u32 %v2024, 7
        %v2026 = vsub.s32 5, %v2025
        %v2027 = vrot.slane %v379, %v2026
        %v2030 = vcombine.low %v2023, %v2027
        %v2032 = vunpack.c.l.s4 1983009808
        %v2033 = vunpack.c.0.s8 %v2032
        %v2034 = vlaneseq
        %v2035 = vshrl.u32 %v2034, 7
        %v2036 = vsub.s32 %v2033, %v2035
        %v2037 = vrot.slane %v2030, %v2036
        %2038 = vrot.lane.b32.xlu0 %v2037, 82
        %v2039 = vpop.permute.xlu0 %2038
        %v2040 = vrot.slane %v2039, 6
        %vm2041 = vcmask 670720
        %v2042 = vsel %vm2041, %v2040, %v2039
        %v2044 = vmul.f32 %v2019, %v2042
        %s2045 = sld [smem:[#allocation11 + $0xa]]
        %s2046 = sld [smem:[#allocation11 + $0xb]]
        %v2047 = vstv %s2045
        %v2048 = vmul.f32 %v2047, %v2044
        %2050 = vrot.lane.b32.xlu0 %v2048, 123
        %v2051 = vpop.permute.xlu0 %2050
        %v2052 = vrot.slane %v2051, 2
        %vm2053 = vcmask 1006592
        %v2054 = vsel %vm2053, %v2051, %v2052
        %v2056 = vadd.f32 %v2018, %v2054
        %v2057 = vstv %s2046
        %v2058 = vmul.f32 %v2057, %v2044
        %v2060 = vrot.slane %v2058, 7
        %v2061 = vrot.slane %v2060, 2
        %2062 = vrot.lane.b32.xlu0 %v2061, 123
        %v2063 = vpop.permute.xlu0 %2062
        %v2064 = vrot.slane %v2063, 2
        %v2065 = vsel %vm2053, %v2063, %v2064
        %v2067 = vadd.f32 %v2056, %v2065
        %v2068 = vld [vmem:[#allocation4] sm:$0x3f]
        %v2069 = vlaneseq
        %v2070 = vshrl.u32 %v2069, 7
        %v2071 = vsub.s32 6, %v2070
        %v2072 = vrot.slane %v378, %v2071
        %v2073 = vlaneseq
        %v2074 = vshrl.u32 %v2073, 7
        %v2075 = vsub.s32 6, %v2074
        %v2076 = vrot.slane %v379, %v2075
        %v2079 = vcombine.low %v2072, %v2076
        %v2081 = vunpack.c.l.s4 1983009808
        %v2082 = vunpack.c.0.s8 %v2081
        %v2083 = vlaneseq
        %v2084 = vshrl.u32 %v2083, 7
        %v2085 = vsub.s32 %v2082, %v2084
        %v2086 = vrot.slane %v2079, %v2085
        %2087 = vrot.lane.b32.xlu0 %v2086, 83
        %v2088 = vpop.permute.xlu0 %2087
        %v2089 = vrot.slane %v2088, 6
        %vm2090 = vcmask 678912
        %v2091 = vsel %vm2090, %v2089, %v2088
        %v2093 = vmul.f32 %v2068, %v2091
        %s2094 = sld [smem:[#allocation11 + $0xc]]
        %s2095 = sld [smem:[#allocation11 + $0xd]]
        %v2096 = vstv %s2094
        %v2097 = vmul.f32 %v2096, %v2093
        %2099 = vrot.lane.b32.xlu0 %v2097, 122
        %v2100 = vpop.permute.xlu0 %2099
        %v2101 = vrot.slane %v2100, 2
        %vm2102 = vcmask 998400
        %v2103 = vsel %vm2102, %v2100, %v2101
        %v2105 = vadd.f32 %v2067, %v2103
        %v2106 = vstv %s2095
        %v2107 = vmul.f32 %v2106, %v2093
        %v2109 = vrot.slane %v2107, 7
        %v2110 = vrot.slane %v2109, 2
        %2111 = vrot.lane.b32.xlu0 %v2110, 122
        %v2112 = vpop.permute.xlu0 %2111
        %v2113 = vrot.slane %v2112, 2
        %v2114 = vsel %vm2102, %v2112, %v2113
        %v2116 = vadd.f32 %v2105, %v2114
        %v2117 = vld [vmem:[#allocation4] sm:$0x3f]
        %2118 = vrot.lane.b32.xlu0 %v1850, 93
        %v2119 = vpop.permute.xlu0 %2118
        %v2120 = vrot.slane %v2119, 6
        %vm2121 = vcmask 760832
        %v2122 = vsel %vm2121, %v2120, %v2119
        %v2124 = vmul.f32 %v2117, %v2122
        %s2125 = sld [smem:[#allocation11 + $0xe]]
        %s2126 = sld [smem:[#allocation11 + $0xf]]
        %v2127 = vstv %s2125
        %v2128 = vmul.f32 %v2127, %v2124
        %2130 = vrot.lane.b32.xlu0 %v2128, 112
        %v2131 = vpop.permute.xlu0 %2130
        %v2132 = vrot.slane %v2131, 2
        %v2133 = vsel %vm725, %v2131, %v2132
        %v2135 = vadd.f32 %v2116, %v2133
        %v2136 = vstv %s2126
        %v2137 = vmul.f32 %v2136, %v2124
        %v2139 = vrot.slane %v2137, 7
        %v2140 = vrot.slane %v2139, 2
        %2141 = vrot.lane.b32.xlu0 %v2140, 112
        %v2142 = vpop.permute.xlu0 %2141
        %v2143 = vrot.slane %v2142, 2
        %v2144 = vsel %vm725, %v2142, %v2143
        %v2146 = vadd.f32 %v2135, %v2144
        %v2147 = vld [vmem:[#allocation4] sm:$0x3f]
        %2148 = vrot.lane.b32.xlu0 %v1888, 94
        %v2149 = vpop.permute.xlu0 %2148
        %v2150 = vrot.slane %v2149, 6
        %vm2151 = vcmask 769024
        %v2152 = vsel %vm2151, %v2150, %v2149
        %v2154 = vmul.f32 %v2147, %v2152
        %s2155 = sld [smem:[#allocation11 + $0x10]]
        %s2156 = sld [smem:[#allocation11 + $0x11]]
        %v2157 = vstv %s2155
        %v2158 = vmul.f32 %v2157, %v2154
        %2160 = vrot.lane.b32.xlu0 %v2158, 111
        %v2161 = vpop.permute.xlu0 %2160
        %v2162 = vrot.slane %v2161, 2
        %v2163 = vsel %vm400, %v2161, %v2162
        %v2165 = vadd.f32 %v2146, %v2163
        %v2166 = vstv %s2156
        %v2167 = vmul.f32 %v2166, %v2154
        %v2169 = vrot.slane %v2167, 7
        %v2170 = vrot.slane %v2169, 2
        %2171 = vrot.lane.b32.xlu0 %v2170, 111
        %v2172 = vpop.permute.xlu0 %2171
        %v2173 = vrot.slane %v2172, 2
        %v2174 = vsel %vm400, %v2172, %v2173
        %v2176 = vadd.f32 %v2165, %v2174
        %v2177 = vld [vmem:[#allocation4] sm:$0x3f]
        %2178 = vrot.lane.b32.xlu0 %v1926, 95
        %v2179 = vpop.permute.xlu0 %2178
        %v2180 = vrot.slane %v2179, 6
        %vm2181 = vcmask 777216
        %v2182 = vsel %vm2181, %v2180, %v2179
        %v2184 = vmul.f32 %v2177, %v2182
        %s2185 = sld [smem:[#allocation11 + $0x12]]
        %s2186 = sld [smem:[#allocation11 + $0x13]]
        %v2187 = vstv %s2185
        %v2188 = vmul.f32 %v2187, %v2184
        %2190 = vrot.lane.b32.xlu0 %v2188, 110
        %v2191 = vpop.permute.xlu0 %2190
        %v2192 = vrot.slane %v2191, 2
        %vm2193 = vcmask 900096
        %v2194 = vsel %vm2193, %v2191, %v2192
        %v2196 = vadd.f32 %v2176, %v2194
        %v2197 = vstv %s2186
        %v2198 = vmul.f32 %v2197, %v2184
        %v2200 = vrot.slane %v2198, 7
        %v2201 = vrot.slane %v2200, 2
        %2202 = vrot.lane.b32.xlu0 %v2201, 110
        %v2203 = vpop.permute.xlu0 %2202
        %v2204 = vrot.slane %v2203, 2
        %v2205 = vsel %vm2193, %v2203, %v2204
        %v2207 = vadd.f32 %v2196, %v2205
        %v2208 = vld [vmem:[#allocation4] sm:$0x3f]
        %s2209 = sld [smem:[#allocation11 + $0x14]]
        %s2210 = sld [smem:[#allocation11 + $0x15]]
        %v2211 = vstv %s2209
        %v2212 = vmul.f32 %v2211, %v2208
        %2214 = vrot.lane.b32.xlu0 %v2212, 109
        %v2215 = vpop.permute.xlu0 %2214
        %v2216 = vrot.slane %v2215, 2
        %vm2217 = vcmask 891904
        %v2218 = vsel %vm2217, %v2215, %v2216
        %v2220 = vadd.f32 %v2207, %v2218
        %v2221 = vstv %s2210
        %v2222 = vmul.f32 %v2221, %v2208
        %v2224 = vrot.slane %v2222, 7
        %v2225 = vrot.slane %v2224, 2
        %2226 = vrot.lane.b32.xlu0 %v2225, 109
        %v2227 = vpop.permute.xlu0 %2226
        %v2228 = vrot.slane %v2227, 2
        %v2229 = vsel %vm2217, %v2227, %v2228
        %v2231 = vadd.f32 %v2220, %v2229
        %2232 = vrot.lane.b32.xlu0 %v1988, 97
        %v2233 = vpop.permute.xlu0 %2232
        %v2234 = vrot.slane %v2233, 6
        %vm2235 = vcmask 793600
        %v2236 = vsel %vm2235, %v2234, %v2233
        %v2238 = vmul.f32 %v2208, %v2236
        %s2239 = sld [smem:[#allocation11 + $0x16]]
        %s2240 = sld [smem:[#allocation11 + $0x17]]
        %v2241 = vstv %s2239
        %v2242 = vmul.f32 %v2241, %v2238
        %2244 = vrot.lane.b32.xlu0 %v2242, 108
        %v2245 = vpop.permute.xlu0 %2244
        %v2246 = vrot.slane %v2245, 2
        %vm2247 = vcmask 883712
        %v2248 = vsel %vm2247, %v2245, %v2246
        %v2250 = vadd.f32 %v2231, %v2248
        %v2251 = vstv %s2240
        %v2252 = vmul.f32 %v2251, %v2238
        %v2254 = vrot.slane %v2252, 7
        %v2255 = vrot.slane %v2254, 2
        %2256 = vrot.lane.b32.xlu0 %v2255, 108
        %v2257 = vpop.permute.xlu0 %2256
        %v2258 = vrot.slane %v2257, 2
        %v2259 = vsel %vm2247, %v2257, %v2258
        %v2261 = vadd.f32 %v2250, %v2259
        %v2262 = vld [vmem:[#allocation4] sm:$0x3f]
        %2263 = vrot.lane.b32.xlu0 %v2037, 98
        %v2264 = vpop.permute.xlu0 %2263
        %v2265 = vrot.slane %v2264, 6
        %vm2266 = vcmask 801792
        %v2267 = vsel %vm2266, %v2265, %v2264
        %v2269 = vmul.f32 %v2262, %v2267
        %s2270 = sld [smem:[#allocation11 + $0x18]]
        %s2271 = sld [smem:[#allocation11 + $0x19]]
        %v2272 = vstv %s2270
        %v2273 = vmul.f32 %v2272, %v2269
        %2275 = vrot.lane.b32.xlu0 %v2273, 107
        %v2276 = vpop.permute.xlu0 %2275
        %v2277 = vrot.slane %v2276, 2
        %vm2278 = vcmask 875520
        %v2279 = vsel %vm2278, %v2276, %v2277
        %v2281 = vadd.f32 %v2261, %v2279
        %v2282 = vstv %s2271
        %v2283 = vmul.f32 %v2282, %v2269
        %v2285 = vrot.slane %v2283, 7
        %v2286 = vrot.slane %v2285, 2
        %2287 = vrot.lane.b32.xlu0 %v2286, 107
        %v2288 = vpop.permute.xlu0 %2287
        %v2289 = vrot.slane %v2288, 2
        %v2290 = vsel %vm2278, %v2288, %v2289
        %v2292 = vadd.f32 %v2281, %v2290
        %v2293 = vld [vmem:[#allocation4] sm:$0x3f]
        %2294 = vrot.lane.b32.xlu0 %v2086, 99
        %v2295 = vpop.permute.xlu0 %2294
        %v2296 = vrot.slane %v2295, 6
        %vm2297 = vcmask 809984
        %v2298 = vsel %vm2297, %v2296, %v2295
        %v2300 = vmul.f32 %v2293, %v2298
        %s2301 = sld [smem:[#allocation11 + $0x1a]]
        %s2302 = sld [smem:[#allocation11 + $0x1b]]
        %v2303 = vstv %s2301
        %v2304 = vmul.f32 %v2303, %v2300
        %2306 = vrot.lane.b32.xlu0 %v2304, 106
        %v2307 = vpop.permute.xlu0 %2306
        %v2308 = vrot.slane %v2307, 2
        %vm2309 = vcmask 867328
        %v2310 = vsel %vm2309, %v2307, %v2308
        %v2312 = vadd.f32 %v2292, %v2310
        %v2313 = vstv %s2302
        %v2314 = vmul.f32 %v2313, %v2300
        %v2316 = vrot.slane %v2314, 7
        %v2317 = vrot.slane %v2316, 2
        %2318 = vrot.lane.b32.xlu0 %v2317, 106
        %v2319 = vpop.permute.xlu0 %2318
        %v2320 = vrot.slane %v2319, 2
        %v2321 = vsel %vm2309, %v2319, %v2320
        %v2323 = vadd.f32 %v2312, %v2321
        %v2324 = vld [vmem:[#allocation4] sm:$0x3f]
        %2325 = vrot.lane.b32.xlu0 %v1850, 109
        %v2326 = vpop.permute.xlu0 %2325
        %v2327 = vrot.slane %v2326, 6
        %v2328 = vsel %vm2217, %v2327, %v2326
        %v2330 = vmul.f32 %v2324, %v2328
        %s2331 = sld [smem:[#allocation11 + $0x1c]]
        %s2332 = sld [smem:[#allocation11 + $0x1d]]
        %v2333 = vstv %s2331
        %v2334 = vmul.f32 %v2333, %v2330
        %2336 = vrot.lane.b32.xlu0 %v2334, 96
        %v2337 = vpop.permute.xlu0 %2336
        %v2338 = vrot.slane %v2337, 2
        %vm2339 = vcmask 785408
        %v2340 = vsel %vm2339, %v2337, %v2338
        %v2342 = vadd.f32 %v2323, %v2340
        %v2343 = vstv %s2332
        %v2344 = vmul.f32 %v2343, %v2330
        %v2346 = vrot.slane %v2344, 7
        %v2347 = vrot.slane %v2346, 2
        %2348 = vrot.lane.b32.xlu0 %v2347, 96
        %v2349 = vpop.permute.xlu0 %2348
        %v2350 = vrot.slane %v2349, 2
        %v2351 = vsel %vm2339, %v2349, %v2350
        %v2353 = vadd.f32 %v2342, %v2351
        %v2354 = vld [vmem:[#allocation4] sm:$0x3f]
        %2355 = vrot.lane.b32.xlu0 %v1888, 110
        %v2356 = vpop.permute.xlu0 %2355
        %v2357 = vrot.slane %v2356, 6
        %v2358 = vsel %vm2193, %v2357, %v2356
        %v2360 = vmul.f32 %v2354, %v2358
        %s2361 = sld [smem:[#allocation11 + $0x1e]]
        %s2362 = sld [smem:[#allocation11 + $0x1f]]
        %v2363 = vstv %s2361
        %v2364 = vmul.f32 %v2363, %v2360
        %2366 = vrot.lane.b32.xlu0 %v2364, 95
        %v2367 = vpop.permute.xlu0 %2366
        %v2368 = vrot.slane %v2367, 2
        %v2369 = vsel %vm2181, %v2367, %v2368
        %v2371 = vadd.f32 %v2353, %v2369
        %v2372 = vstv %s2362
        %v2373 = vmul.f32 %v2372, %v2360
        %v2375 = vrot.slane %v2373, 7
        %v2376 = vrot.slane %v2375, 2
        %2377 = vrot.lane.b32.xlu0 %v2376, 95
        %v2378 = vpop.permute.xlu0 %2377
        %v2379 = vrot.slane %v2378, 2
        %v2380 = vsel %vm2181, %v2378, %v2379
        %v2382 = vadd.f32 %v2371, %v2380
        %v2383 = vld [vmem:[#allocation4] sm:$0x3f]
        %2384 = vrot.lane.b32.xlu0 %v1926, 111
        %v2385 = vpop.permute.xlu0 %2384
        %v2386 = vrot.slane %v2385, 6
        %v2387 = vsel %vm400, %v2386, %v2385
        %v2389 = vmul.f32 %v2383, %v2387
        %s2390 = sld [smem:[#allocation11 + $0x20]]
        %s2391 = sld [smem:[#allocation11 + $0x21]]
        %v2392 = vstv %s2390
        %v2393 = vmul.f32 %v2392, %v2389
        %2395 = vrot.lane.b32.xlu0 %v2393, 94
        %v2396 = vpop.permute.xlu0 %2395
        %v2397 = vrot.slane %v2396, 2
        %v2398 = vsel %vm2151, %v2396, %v2397
        %v2400 = vadd.f32 %v2382, %v2398
        %v2401 = vstv %s2391
        %v2402 = vmul.f32 %v2401, %v2389
        %v2404 = vrot.slane %v2402, 7
        %v2405 = vrot.slane %v2404, 2
        %2406 = vrot.lane.b32.xlu0 %v2405, 94
        %v2407 = vpop.permute.xlu0 %2406
        %v2408 = vrot.slane %v2407, 2
        %v2409 = vsel %vm2151, %v2407, %v2408
        %v2411 = vadd.f32 %v2400, %v2409
        %v2412 = vld [vmem:[#allocation4] sm:$0x3f]
        %s2413 = sld [smem:[#allocation11 + $0x22]]
        %s2414 = sld [smem:[#allocation11 + $0x23]]
        %v2415 = vstv %s2413
        %v2416 = vmul.f32 %v2415, %v2412
        %2418 = vrot.lane.b32.xlu0 %v2416, 93
        %v2419 = vpop.permute.xlu0 %2418
        %v2420 = vrot.slane %v2419, 2
        %v2421 = vsel %vm2121, %v2419, %v2420
        %v2423 = vadd.f32 %v2411, %v2421
        %v2424 = vstv %s2414
        %v2425 = vmul.f32 %v2424, %v2412
        %v2427 = vrot.slane %v2425, 7
        %v2428 = vrot.slane %v2427, 2
        %2429 = vrot.lane.b32.xlu0 %v2428, 93
        %v2430 = vpop.permute.xlu0 %2429
        %v2431 = vrot.slane %v2430, 2
        %v2432 = vsel %vm2121, %v2430, %v2431
        %v2434 = vadd.f32 %v2423, %v2432
        %2435 = vrot.lane.b32.xlu0 %v1988, 113
        %v2436 = vpop.permute.xlu0 %2435
        %v2437 = vrot.slane %v2436, 6
        %v2438 = vsel %vm499, %v2437, %v2436
        %v2440 = vmul.f32 %v2412, %v2438
        %s2441 = sld [smem:[#allocation11 + $0x24]]
        %s2442 = sld [smem:[#allocation11 + $0x25]]
        %v2443 = vstv %s2441
        %v2444 = vmul.f32 %v2443, %v2440
        %2446 = vrot.lane.b32.xlu0 %v2444, 92
        %v2447 = vpop.permute.xlu0 %2446
        %v2448 = vrot.slane %v2447, 2
        %vm2449 = vcmask 752640
        %v2450 = vsel %vm2449, %v2447, %v2448
        %v2452 = vadd.f32 %v2434, %v2450
        %v2453 = vstv %s2442
        %v2454 = vmul.f32 %v2453, %v2440
        %v2456 = vrot.slane %v2454, 7
        %v2457 = vrot.slane %v2456, 2
        %2458 = vrot.lane.b32.xlu0 %v2457, 92
        %v2459 = vpop.permute.xlu0 %2458
        %v2460 = vrot.slane %v2459, 2
        %v2461 = vsel %vm2449, %v2459, %v2460
        %v2463 = vadd.f32 %v2452, %v2461
        %v2464 = vld [vmem:[#allocation4] sm:$0x3f]
        %2465 = vrot.lane.b32.xlu0 %v2037, 114
        %v2466 = vpop.permute.xlu0 %2465
        %v2467 = vrot.slane %v2466, 6
        %vm2468 = vcmask 932864
        %v2469 = vsel %vm2468, %v2467, %v2466
        %v2471 = vmul.f32 %v2464, %v2469
        %s2472 = sld [smem:[#allocation11 + $0x26]]
        %s2473 = sld [smem:[#allocation11 + $0x27]]
        %v2474 = vstv %s2472
        %v2475 = vmul.f32 %v2474, %v2471
        %2477 = vrot.lane.b32.xlu0 %v2475, 91
        %v2478 = vpop.permute.xlu0 %2477
        %v2479 = vrot.slane %v2478, 2
        %vm2480 = vcmask 744448
        %v2481 = vsel %vm2480, %v2478, %v2479
        %v2483 = vadd.f32 %v2463, %v2481
        %v2484 = vstv %s2473
        %v2485 = vmul.f32 %v2484, %v2471
        %v2487 = vrot.slane %v2485, 7
        %v2488 = vrot.slane %v2487, 2
        %2489 = vrot.lane.b32.xlu0 %v2488, 91
        %v2490 = vpop.permute.xlu0 %2489
        %v2491 = vrot.slane %v2490, 2
        %v2492 = vsel %vm2480, %v2490, %v2491
        %v2494 = vadd.f32 %v2483, %v2492
        %v2495 = vld [vmem:[#allocation4] sm:$0x3f]
        %2496 = vrot.lane.b32.xlu0 %v2086, 115
        %v2497 = vpop.permute.xlu0 %2496
        %v2498 = vrot.slane %v2497, 6
        %vm2499 = vcmask 941056
        %v2500 = vsel %vm2499, %v2498, %v2497
        %v2502 = vmul.f32 %v2495, %v2500
        %s2503 = sld [smem:[#allocation11 + $0x28]]
        %s2504 = sld [smem:[#allocation11 + $0x29]]
        %v2505 = vstv %s2503
        %v2506 = vmul.f32 %v2505, %v2502
        %2508 = vrot.lane.b32.xlu0 %v2506, 90
        %v2509 = vpop.permute.xlu0 %2508
        %v2510 = vrot.slane %v2509, 2
        %vm2511 = vcmask 736256
        %v2512 = vsel %vm2511, %v2509, %v2510
        %v2514 = vadd.f32 %v2494, %v2512
        %v2515 = vstv %s2504
        %v2516 = vmul.f32 %v2515, %v2502
        %v2518 = vrot.slane %v2516, 7
        %v2519 = vrot.slane %v2518, 2
        %2520 = vrot.lane.b32.xlu0 %v2519, 90
        %v2521 = vpop.permute.xlu0 %2520
        %v2522 = vrot.slane %v2521, 2
        %v2523 = vsel %vm2511, %v2521, %v2522
        %v2525 = vadd.f32 %v2514, %v2523
        %v2526 = vld [vmem:[#allocation4] sm:$0x3f]
        %2527 = vrot.lane.b32.xlu0 %v1850, 125
        %v2528 = vpop.permute.xlu0 %2527
        %v2529 = vrot.slane %v2528, 6
        %v2530 = vsel %vm1966, %v2529, %v2528
        %v2532 = vmul.f32 %v2526, %v2530
        %s2533 = sld [smem:[#allocation11 + $0x2a]]
        %s2534 = sld [smem:[#allocation11 + $0x2b]]
        %v2535 = vstv %s2533
        %v2536 = vmul.f32 %v2535, %v2532
        %2538 = vrot.lane.b32.xlu0 %v2536, 80
        %v2539 = vpop.permute.xlu0 %2538
        %v2540 = vrot.slane %v2539, 2
        %vm2541 = vcmask 654336
        %v2542 = vsel %vm2541, %v2539, %v2540
        %v2544 = vadd.f32 %v2525, %v2542
        %v2545 = vstv %s2534
        %v2546 = vmul.f32 %v2545, %v2532
        %v2548 = vrot.slane %v2546, 7
        %v2549 = vrot.slane %v2548, 2
        %2550 = vrot.lane.b32.xlu0 %v2549, 80
        %v2551 = vpop.permute.xlu0 %2550
        %v2552 = vrot.slane %v2551, 2
        %v2553 = vsel %vm2541, %v2551, %v2552
        %v2555 = vadd.f32 %v2544, %v2553
        %v2556 = vld [vmem:[#allocation4] sm:$0x3f]
        %2557 = vrot.lane.b32.xlu0 %v1888, 126
        %v2558 = vpop.permute.xlu0 %2557
        %v2559 = vrot.slane %v2558, 6
        %v2560 = vsel %vm1942, %v2559, %v2558
        %v2562 = vmul.f32 %v2556, %v2560
        %s2563 = sld [smem:[#allocation11 + $0x2c]]
        %s2564 = sld [smem:[#allocation11 + $0x2d]]
        %v2565 = vstv %s2563
        %v2566 = vmul.f32 %v2565, %v2562
        %2568 = vrot.lane.b32.xlu0 %v2566, 79
        %v2569 = vpop.permute.xlu0 %2568
        %v2570 = vrot.slane %v2569, 2
        %v2571 = vsel %vm1930, %v2569, %v2570
        %v2573 = vadd.f32 %v2555, %v2571
        %v2574 = vstv %s2564
        %v2575 = vmul.f32 %v2574, %v2562
        %v2577 = vrot.slane %v2575, 7
        %v2578 = vrot.slane %v2577, 2
        %2579 = vrot.lane.b32.xlu0 %v2578, 79
        %v2580 = vpop.permute.xlu0 %2579
        %v2581 = vrot.slane %v2580, 2
        %v2582 = vsel %vm1930, %v2580, %v2581
        %v2584 = vadd.f32 %v2573, %v2582
        %v2585 = vld [vmem:[#allocation4] sm:$0x3f]
        %2586 = vrot.lane.b32.xlu0 %v1926, 127
        %v2587 = vpop.permute.xlu0 %2586
        %v2588 = vrot.slane %v2587, 6
        %v2589 = vsel %vm551, %v2588, %v2587
        %v2591 = vmul.f32 %v2585, %v2589
        %s2592 = sld [smem:[#allocation11 + $0x2e]]
        %s2593 = sld [smem:[#allocation11 + $0x2f]]
        %v2594 = vstv %s2592
        %v2595 = vmul.f32 %v2594, %v2591
        %2597 = vrot.lane.b32.xlu0 %v2595, 78
        %v2598 = vpop.permute.xlu0 %2597
        %v2599 = vrot.slane %v2598, 2
        %v2600 = vsel %vm1892, %v2598, %v2599
        %v2602 = vadd.f32 %v2584, %v2600
        %v2603 = vstv %s2593
        %v2604 = vmul.f32 %v2603, %v2591
        %v2606 = vrot.slane %v2604, 7
        %v2607 = vrot.slane %v2606, 2
        %2608 = vrot.lane.b32.xlu0 %v2607, 78
        %v2609 = vpop.permute.xlu0 %2608
        %v2610 = vrot.slane %v2609, 2
        %v2611 = vsel %vm1892, %v2609, %v2610
        %v2613 = vadd.f32 %v2602, %v2611
        %v2614 = vld [vmem:[#allocation4 + $0x2] sm:$0xf]
        %s2615 = sld [smem:[#allocation11 + $0x30]]
        %s2616 = sld [smem:[#allocation11 + $0x31]]
        %v2617 = vstv %s2615
        %v2618 = vmul.f32 %v2617, %v2614
        %2620 = vrot.lane.b32.xlu0 %v2618, 77
        %v2621 = vpop.permute.xlu0 %2620
        %v2622 = vrot.slane %v2621, 6
        %v2623 = vsel %vm1854, %v2622, %v2621
        %v2625 = vadd.f32 %v2613, %v2623
        %v2626 = vstv %s2616
        %v2627 = vmul.f32 %v2626, %v2614
        %v2629 = vrot.slane %v2627, 7
        %v2630 = vrot.slane %v2629, 2
        %2631 = vrot.lane.b32.xlu0 %v2630, 77
        %v2632 = vpop.permute.xlu0 %2631
        %v2633 = vrot.slane %v2632, 6
        %v2634 = vsel %vm1854, %v2633, %v2632
        %v2636 = vadd.f32 %v2625, %v2634
        %v2637 = vld [vmem:[#allocation4 + $0x2] sm:$0x3f]
        %2638 = vrot.lane.b32.xlu0 %v1988, 1
        %v2639 = vpop.permute.xlu0 %2638
        %v2640 = vrot.slane %v2639, 6
        %v2641 = vsel %vm580, %v2640, %v2639
        %v2643 = vmul.f32 %v2637, %v2641
        %s2644 = sld [smem:[#allocation11 + $0x32]]
        %s2645 = sld [smem:[#allocation11 + $0x33]]
        %v2646 = vstv %s2644
        %v2647 = vmul.f32 %v2646, %v2643
        %2649 = vrot.lane.b32.xlu0 %v2647, 76
        %v2650 = vpop.permute.xlu0 %2649
        %v2651 = vrot.slane %v2650, 6
        %vm2652 = vcmask 621568
        %v2653 = vsel %vm2652, %v2651, %v2650
        %v2655 = vadd.f32 %v2636, %v2653
        %v2656 = vstv %s2645
        %v2657 = vmul.f32 %v2656, %v2643
        %v2659 = vrot.slane %v2657, 7
        %v2660 = vrot.slane %v2659, 2
        %2661 = vrot.lane.b32.xlu0 %v2660, 76
        %v2662 = vpop.permute.xlu0 %2661
        %v2663 = vrot.slane %v2662, 6
        %v2664 = vsel %vm2652, %v2663, %v2662
        %v2666 = vadd.f32 %v2655, %v2664
        %v2667 = vld [vmem:[#allocation4 + $0x2] sm:$0x3f]
        %2668 = vrot.lane.b32.xlu0 %v2037, 2
        %v2669 = vpop.permute.xlu0 %2668
        %v2670 = vrot.slane %v2669, 6
        %vm2671 = vcmask 15360
        %v2672 = vsel %vm2671, %v2670, %v2669
        %v2674 = vmul.f32 %v2667, %v2672
        %s2675 = sld [smem:[#allocation11 + $0x34]]
        %s2676 = sld [smem:[#allocation11 + $0x35]]
        %v2677 = vstv %s2675
        %v2678 = vmul.f32 %v2677, %v2674
        %2680 = vrot.lane.b32.xlu0 %v2678, 75
        %v2681 = vpop.permute.xlu0 %2680
        %v2682 = vrot.slane %v2681, 6
        %vm2683 = vcmask 613376
        %v2684 = vsel %vm2683, %v2682, %v2681
        %v2686 = vadd.f32 %v2666, %v2684
        %v2687 = vstv %s2676
        %v2688 = vmul.f32 %v2687, %v2674
        %v2690 = vrot.slane %v2688, 7
        %v2691 = vrot.slane %v2690, 2
        %2692 = vrot.lane.b32.xlu0 %v2691, 75
        %v2693 = vpop.permute.xlu0 %2692
        %v2694 = vrot.slane %v2693, 6
        %v2695 = vsel %vm2683, %v2694, %v2693
        %v2697 = vadd.f32 %v2686, %v2695
        %v2698 = vld [vmem:[#allocation4 + $0x2] sm:$0x3f]
        %2699 = vrot.lane.b32.xlu0 %v2086, 3
        %v2700 = vpop.permute.xlu0 %2699
        %v2701 = vrot.slane %v2700, 6
        %vm2702 = vcmask 23552
        %v2703 = vsel %vm2702, %v2701, %v2700
        %v2705 = vmul.f32 %v2698, %v2703
        %s2706 = sld [smem:[#allocation11 + $0x36]]
        %s2707 = sld [smem:[#allocation11 + $0x37]]
        %v2708 = vstv %s2706
        %v2709 = vmul.f32 %v2708, %v2705
        %2711 = vrot.lane.b32.xlu0 %v2709, 74
        %v2712 = vpop.permute.xlu0 %2711
        %v2713 = vrot.slane %v2712, 6
        %vm2714 = vcmask 605184
        %v2715 = vsel %vm2714, %v2713, %v2712
        %v2717 = vadd.f32 %v2697, %v2715
        %v2718 = vstv %s2707
        %v2719 = vmul.f32 %v2718, %v2705
        %v2721 = vrot.slane %v2719, 7
        %v2722 = vrot.slane %v2721, 2
        %2723 = vrot.lane.b32.xlu0 %v2722, 74
        %v2724 = vpop.permute.xlu0 %2723
        %v2725 = vrot.slane %v2724, 6
        %v2726 = vsel %vm2714, %v2725, %v2724
        %v2728 = vadd.f32 %v2717, %v2726
        %v2729 = vld [vmem:[#allocation4 + $0x2] sm:$0x3f]
        %2730 = vrot.lane.b32.xlu0 %v1850, 13
        %v2731 = vpop.permute.xlu0 %2730
        %v2732 = vrot.slane %v2731, 6
        %vm2733 = vcmask 105472
        %v2734 = vsel %vm2733, %v2732, %v2731
        %v2736 = vmul.f32 %v2729, %v2734
        %s2737 = sld [smem:[#allocation11 + $0x38]]
        %s2738 = sld [smem:[#allocation11 + $0x39]]
        %v2739 = vstv %s2737
        %v2740 = vmul.f32 %v2739, %v2736
        %2742 = vrot.lane.b32.xlu0 %v2740, 64
        %v2743 = vpop.permute.xlu0 %2742
        %v2744 = vrot.slane %v2743, 6
        %vm2745 = vcmask 523264
        %v2746 = vsel %vm2745, %v2744, %v2743
        %v2748 = vadd.f32 %v2728, %v2746
        %v2749 = vstv %s2738
        %v2750 = vmul.f32 %v2749, %v2736
        %v2752 = vrot.slane %v2750, 7
        %v2753 = vrot.slane %v2752, 2
        %2754 = vrot.lane.b32.xlu0 %v2753, 64
        %v2755 = vpop.permute.xlu0 %2754
        %v2756 = vrot.slane %v2755, 6
        %v2757 = vsel %vm2745, %v2756, %v2755
        %v2759 = vadd.f32 %v2748, %v2757
        %v2760 = vld [vmem:[#allocation4 + $0x2] sm:$0x3f]
        %2761 = vrot.lane.b32.xlu0 %v1888, 14
        %v2762 = vpop.permute.xlu0 %2761
        %v2763 = vrot.slane %v2762, 6
        %vm2764 = vcmask 113664
        %v2765 = vsel %vm2764, %v2763, %v2762
        %v2767 = vmul.f32 %v2760, %v2765
        %s2768 = sld [smem:[#allocation11 + $0x3a]]
        %s2769 = sld [smem:[#allocation11 + $0x3b]]
        %v2770 = vstv %s2768
        %v2771 = vmul.f32 %v2770, %v2767
        %2773 = vrot.lane.b32.xlu0 %v2771, 63
        %v2774 = vpop.permute.xlu0 %2773
        %v2775 = vrot.slane %v2774, 6
        %vm2776 = vcmask 515072
        %v2777 = vsel %vm2776, %v2775, %v2774
        %v2779 = vadd.f32 %v2759, %v2777
        %v2780 = vstv %s2769
        %v2781 = vmul.f32 %v2780, %v2767
        %v2783 = vrot.slane %v2781, 7
        %v2784 = vrot.slane %v2783, 2
        %2785 = vrot.lane.b32.xlu0 %v2784, 63
        %v2786 = vpop.permute.xlu0 %2785
        %v2787 = vrot.slane %v2786, 6
        %v2788 = vsel %vm2776, %v2787, %v2786
        %v2790 = vadd.f32 %v2779, %v2788
        %v2791 = vld [vmem:[#allocation4 + $0x2] sm:$0x3f]
        %2792 = vrot.lane.b32.xlu0 %v1926, 15
        %v2793 = vpop.permute.xlu0 %2792
        %v2794 = vrot.slane %v2793, 6
        %v2795 = vsel %vm528, %v2794, %v2793
        %v2797 = vmul.f32 %v2791, %v2795
        %s2798 = sld [smem:[#allocation11 + $0x3c]]
        %s2799 = sld [smem:[#allocation11 + $0x3d]]
        %v2800 = vstv %s2798
        %v2801 = vmul.f32 %v2800, %v2797
        %2803 = vrot.lane.b32.xlu0 %v2801, 62
        %v2804 = vpop.permute.xlu0 %2803
        %v2805 = vrot.slane %v2804, 6
        %vm2806 = vcmask 506880
        %v2807 = vsel %vm2806, %v2805, %v2804
        %v2809 = vadd.f32 %v2790, %v2807
        %v2810 = vstv %s2799
        %v2811 = vmul.f32 %v2810, %v2797
        %v2813 = vrot.slane %v2811, 7
        %v2814 = vrot.slane %v2813, 2
        %2815 = vrot.lane.b32.xlu0 %v2814, 62
        %v2816 = vpop.permute.xlu0 %2815
        %v2817 = vrot.slane %v2816, 6
        %v2818 = vsel %vm2806, %v2817, %v2816
        %v2820 = vadd.f32 %v2809, %v2818
        %v2821 = vld [vmem:[#allocation4 + $0x2] sm:$0x3f]
        %s2822 = sld [smem:[#allocation11 + $0x3e]]
        %s2823 = sld [smem:[#allocation11 + $0x3f]]
        %v2824 = vstv %s2822
        %v2825 = vmul.f32 %v2824, %v2821
        %2827 = vrot.lane.b32.xlu0 %v2825, 61
        %v2828 = vpop.permute.xlu0 %2827
        %v2829 = vrot.slane %v2828, 6
        %vm2830 = vcmask 498688
        %v2831 = vsel %vm2830, %v2829, %v2828
        %v2833 = vadd.f32 %v2820, %v2831
        %v2834 = vstv %s2823
        %v2835 = vmul.f32 %v2834, %v2821
        %v2837 = vrot.slane %v2835, 7
        %v2838 = vrot.slane %v2837, 2
        %2839 = vrot.lane.b32.xlu0 %v2838, 61
        %v2840 = vpop.permute.xlu0 %2839
        %v2841 = vrot.slane %v2840, 6
        %v2842 = vsel %vm2830, %v2841, %v2840
        %v2844 = vadd.f32 %v2833, %v2842
        %2845 = vrot.lane.b32.xlu0 %v1988, 17
        %v2846 = vpop.permute.xlu0 %2845
        %v2847 = vrot.slane %v2846, 6
        %v2848 = vsel %vm429, %v2847, %v2846
        %v2850 = vmul.f32 %v2821, %v2848
        %s2851 = sld [smem:[#allocation11 + $0x40]]
        %s2852 = sld [smem:[#allocation11 + $0x41]]
        %v2853 = vstv %s2851
        %v2854 = vmul.f32 %v2853, %v2850
        %2856 = vrot.lane.b32.xlu0 %v2854, 60
        %v2857 = vpop.permute.xlu0 %2856
        %v2858 = vrot.slane %v2857, 6
        %vm2859 = vcmask 490496
        %v2860 = vsel %vm2859, %v2858, %v2857
        %v2862 = vadd.f32 %v2844, %v2860
        %v2863 = vstv %s2852
        %v2864 = vmul.f32 %v2863, %v2850
        %v2866 = vrot.slane %v2864, 7
        %v2867 = vrot.slane %v2866, 2
        %2868 = vrot.lane.b32.xlu0 %v2867, 60
        %v2869 = vpop.permute.xlu0 %2868
        %v2870 = vrot.slane %v2869, 6
        %v2871 = vsel %vm2859, %v2870, %v2869
        %v2873 = vadd.f32 %v2862, %v2871
        %v2874 = vld [vmem:[#allocation4 + $0x2] sm:$0x3f]
        %2875 = vrot.lane.b32.xlu0 %v2037, 18
        %v2876 = vpop.permute.xlu0 %2875
        %v2877 = vrot.slane %v2876, 6
        %vm2878 = vcmask 146432
        %v2879 = vsel %vm2878, %v2877, %v2876
        %v2881 = vmul.f32 %v2874, %v2879
        %s2882 = sld [smem:[#allocation11 + $0x42]]
        %s2883 = sld [smem:[#allocation11 + $0x43]]
        %v2884 = vstv %s2882
        %v2885 = vmul.f32 %v2884, %v2881
        %2887 = vrot.lane.b32.xlu0 %v2885, 59
        %v2888 = vpop.permute.xlu0 %2887
        %v2889 = vrot.slane %v2888, 6
        %vm2890 = vcmask 482304
        %v2891 = vsel %vm2890, %v2889, %v2888
        %v2893 = vadd.f32 %v2873, %v2891
        %v2894 = vstv %s2883
        %v2895 = vmul.f32 %v2894, %v2881
        %v2897 = vrot.slane %v2895, 7
        %v2898 = vrot.slane %v2897, 2
        %2899 = vrot.lane.b32.xlu0 %v2898, 59
        %v2900 = vpop.permute.xlu0 %2899
        %v2901 = vrot.slane %v2900, 6
        %v2902 = vsel %vm2890, %v2901, %v2900
        %v2904 = vadd.f32 %v2893, %v2902
        %v2905 = vld [vmem:[#allocation4 + $0x2] sm:$0x3f]
        %2906 = vrot.lane.b32.xlu0 %v2086, 19
        %v2907 = vpop.permute.xlu0 %2906
        %v2908 = vrot.slane %v2907, 6
        %vm2909 = vcmask 154624
        %v2910 = vsel %vm2909, %v2908, %v2907
        %v2912 = vmul.f32 %v2905, %v2910
        %s2913 = sld [smem:[#allocation11 + $0x44]]
        %s2914 = sld [smem:[#allocation11 + $0x45]]
        %v2915 = vstv %s2913
        %v2916 = vmul.f32 %v2915, %v2912
        %2918 = vrot.lane.b32.xlu0 %v2916, 58
        %v2919 = vpop.permute.xlu0 %2918
        %v2920 = vrot.slane %v2919, 6
        %vm2921 = vcmask 474112
        %v2922 = vsel %vm2921, %v2920, %v2919
        %v2924 = vadd.f32 %v2904, %v2922
        %v2925 = vstv %s2914
        %v2926 = vmul.f32 %v2925, %v2912
        %v2928 = vrot.slane %v2926, 7
        %v2929 = vrot.slane %v2928, 2
        %2930 = vrot.lane.b32.xlu0 %v2929, 58
        %v2931 = vpop.permute.xlu0 %2930
        %v2932 = vrot.slane %v2931, 6
        %v2933 = vsel %vm2921, %v2932, %v2931
        %v2935 = vadd.f32 %v2924, %v2933
        %v2936 = vld [vmem:[#allocation4 + $0x2] sm:$0x3f]
        %2937 = vrot.lane.b32.xlu0 %v1850, 29
        %v2938 = vpop.permute.xlu0 %2937
        %v2939 = vrot.slane %v2938, 6
        %vm2940 = vcmask 236544
        %v2941 = vsel %vm2940, %v2939, %v2938
        %v2943 = vmul.f32 %v2936, %v2941
        %s2944 = sld [smem:[#allocation11 + $0x46]]
        %s2945 = sld [smem:[#allocation11 + $0x47]]
        %v2946 = vstv %s2944
        %v2947 = vmul.f32 %v2946, %v2943
        %2949 = vrot.lane.b32.xlu0 %v2947, 48
        %v2950 = vpop.permute.xlu0 %2949
        %v2951 = vrot.slane %v2950, 6
        %vm2952 = vcmask 392192
        %v2953 = vsel %vm2952, %v2951, %v2950
        %v2955 = vadd.f32 %v2935, %v2953
        %v2956 = vstv %s2945
        %v2957 = vmul.f32 %v2956, %v2943
        %v2959 = vrot.slane %v2957, 7
        %v2960 = vrot.slane %v2959, 2
        %2961 = vrot.lane.b32.xlu0 %v2960, 48
        %v2962 = vpop.permute.xlu0 %2961
        %v2963 = vrot.slane %v2962, 6
        %v2964 = vsel %vm2952, %v2963, %v2962
        %v2966 = vadd.f32 %v2955, %v2964
        %v2967 = vld [vmem:[#allocation4 + $0x2] sm:$0x3f]
        %2968 = vrot.lane.b32.xlu0 %v1888, 30
        %v2969 = vpop.permute.xlu0 %2968
        %v2970 = vrot.slane %v2969, 6
        %vm2971 = vcmask 244736
        %v2972 = vsel %vm2971, %v2970, %v2969
        %v2974 = vmul.f32 %v2967, %v2972
        %s2975 = sld [smem:[#allocation11 + $0x48]]
        %s2976 = sld [smem:[#allocation11 + $0x49]]
        %v2977 = vstv %s2975
        %v2978 = vmul.f32 %v2977, %v2974
        %2980 = vrot.lane.b32.xlu0 %v2978, 47
        %v2981 = vpop.permute.xlu0 %2980
        %v2982 = vrot.slane %v2981, 6
        %vm2983 = vcmask 384000
        %v2984 = vsel %vm2983, %v2982, %v2981
        %v2986 = vadd.f32 %v2966, %v2984
        %v2987 = vstv %s2976
        %v2988 = vmul.f32 %v2987, %v2974
        %v2990 = vrot.slane %v2988, 7
        %v2991 = vrot.slane %v2990, 2
        %2992 = vrot.lane.b32.xlu0 %v2991, 47
        %v2993 = vpop.permute.xlu0 %2992
        %v2994 = vrot.slane %v2993, 6
        %v2995 = vsel %vm2983, %v2994, %v2993
        %v2997 = vadd.f32 %v2986, %v2995
        %v2998 = vld [vmem:[#allocation4 + $0x2] sm:$0x3f]
        %2999 = vrot.lane.b32.xlu0 %v1926, 31
        %v3000 = vpop.permute.xlu0 %2999
        %v3001 = vrot.slane %v3000, 6
        %vm3002 = vcmask 252928
        %v3003 = vsel %vm3002, %v3001, %v3000
        %v3005 = vmul.f32 %v2998, %v3003
        %s3006 = sld [smem:[#allocation11 + $0x4a]]
        %s3007 = sld [smem:[#allocation11 + $0x4b]]
        %v3008 = vstv %s3006
        %v3009 = vmul.f32 %v3008, %v3005
        %3011 = vrot.lane.b32.xlu0 %v3009, 46
        %v3012 = vpop.permute.xlu0 %3011
        %v3013 = vrot.slane %v3012, 6
        %vm3014 = vcmask 375808
        %v3015 = vsel %vm3014, %v3013, %v3012
        %v3017 = vadd.f32 %v2997, %v3015
        %v3018 = vstv %s3007
        %v3019 = vmul.f32 %v3018, %v3005
        %v3021 = vrot.slane %v3019, 7
        %v3022 = vrot.slane %v3021, 2
        %3023 = vrot.lane.b32.xlu0 %v3022, 46
        %v3024 = vpop.permute.xlu0 %3023
        %v3025 = vrot.slane %v3024, 6
        %v3026 = vsel %vm3014, %v3025, %v3024
        %v3028 = vadd.f32 %v3017, %v3026
        %v3029 = vld [vmem:[#allocation4 + $0x2] sm:$0x3f]
        %s3030 = sld [smem:[#allocation11 + $0x4c]]
        %s3031 = sld [smem:[#allocation11 + $0x4d]]
        %v3032 = vstv %s3030
        %v3033 = vmul.f32 %v3032, %v3029
        %3035 = vrot.lane.b32.xlu0 %v3033, 45
        %v3036 = vpop.permute.xlu0 %3035
        %v3037 = vrot.slane %v3036, 6
        %vm3038 = vcmask 367616
        %v3039 = vsel %vm3038, %v3037, %v3036
        %v3041 = vadd.f32 %v3028, %v3039
        %v3042 = vstv %s3031
        %v3043 = vmul.f32 %v3042, %v3029
        %v3045 = vrot.slane %v3043, 7
        %v3046 = vrot.slane %v3045, 2
        %3047 = vrot.lane.b32.xlu0 %v3046, 45
        %v3048 = vpop.permute.xlu0 %3047
        %v3049 = vrot.slane %v3048, 6
        %v3050 = vsel %vm3038, %v3049, %v3048
        %v3052 = vadd.f32 %v3041, %v3050
        %3053 = vrot.lane.b32.xlu0 %v1988, 33
        %v3054 = vpop.permute.xlu0 %3053
        %v3055 = vrot.slane %v3054, 6
        %vm3056 = vcmask 269312
        %v3057 = vsel %vm3056, %v3055, %v3054
        %v3059 = vmul.f32 %v3029, %v3057
        %s3060 = sld [smem:[#allocation11 + $0x4e]]
        %s3061 = sld [smem:[#allocation11 + $0x4f]]
        %v3062 = vstv %s3060
        %v3063 = vmul.f32 %v3062, %v3059
        %3065 = vrot.lane.b32.xlu0 %v3063, 44
        %v3066 = vpop.permute.xlu0 %3065
        %v3067 = vrot.slane %v3066, 6
        %vm3068 = vcmask 359424
        %v3069 = vsel %vm3068, %v3067, %v3066
        %v3071 = vadd.f32 %v3052, %v3069
        %v3072 = vstv %s3061
        %v3073 = vmul.f32 %v3072, %v3059
        %v3075 = vrot.slane %v3073, 7
        %v3076 = vrot.slane %v3075, 2
        %3077 = vrot.lane.b32.xlu0 %v3076, 44
        %v3078 = vpop.permute.xlu0 %3077
        %v3079 = vrot.slane %v3078, 6
        %v3080 = vsel %vm3068, %v3079, %v3078
        %v3082 = vadd.f32 %v3071, %v3080
        %v3083 = vld [vmem:[#allocation4 + $0x2] sm:$0x3f]
        %3084 = vrot.lane.b32.xlu0 %v2037, 34
        %v3085 = vpop.permute.xlu0 %3084
        %v3086 = vrot.slane %v3085, 6
        %vm3087 = vcmask 277504
        %v3088 = vsel %vm3087, %v3086, %v3085
        %v3090 = vmul.f32 %v3083, %v3088
        %s3091 = sld [smem:[#allocation11 + $0x50]]
        %s3092 = sld [smem:[#allocation11 + $0x51]]
        %v3093 = vstv %s3091
        %v3094 = vmul.f32 %v3093, %v3090
        %3096 = vrot.lane.b32.xlu0 %v3094, 43
        %v3097 = vpop.permute.xlu0 %3096
        %v3098 = vrot.slane %v3097, 6
        %vm3099 = vcmask 351232
        %v3100 = vsel %vm3099, %v3098, %v3097
        %v3102 = vadd.f32 %v3082, %v3100
        %v3103 = vstv %s3092
        %v3104 = vmul.f32 %v3103, %v3090
        %v3106 = vrot.slane %v3104, 7
        %v3107 = vrot.slane %v3106, 2
        %3108 = vrot.lane.b32.xlu0 %v3107, 43
        %v3109 = vpop.permute.xlu0 %3108
        %v3110 = vrot.slane %v3109, 6
        %v3111 = vsel %vm3099, %v3110, %v3109
        %v3113 = vadd.f32 %v3102, %v3111
        %v3114 = vld [vmem:[#allocation4 + $0x2] sm:$0x3f]
        %3115 = vrot.lane.b32.xlu0 %v2086, 35
        %v3116 = vpop.permute.xlu0 %3115
        %v3117 = vrot.slane %v3116, 6
        %vm3118 = vcmask 285696
        %v3119 = vsel %vm3118, %v3117, %v3116
        %v3121 = vmul.f32 %v3114, %v3119
        %s3122 = sld [smem:[#allocation11 + $0x52]]
        %s3123 = sld [smem:[#allocation11 + $0x53]]
        %v3124 = vstv %s3122
        %v3125 = vmul.f32 %v3124, %v3121
        %3127 = vrot.lane.b32.xlu0 %v3125, 42
        %v3128 = vpop.permute.xlu0 %3127
        %v3129 = vrot.slane %v3128, 6
        %vm3130 = vcmask 343040
        %v3131 = vsel %vm3130, %v3129, %v3128
        %v3133 = vadd.f32 %v3113, %v3131
        %v3134 = vstv %s3123
        %v3135 = vmul.f32 %v3134, %v3121
        %v3137 = vrot.slane %v3135, 7
        %v3138 = vrot.slane %v3137, 2
        %3139 = vrot.lane.b32.xlu0 %v3138, 42
        %v3140 = vpop.permute.xlu0 %3139
        %v3141 = vrot.slane %v3140, 6
        %v3142 = vsel %vm3130, %v3141, %v3140
        %v3144 = vadd.f32 %v3133, %v3142
        %v3145 = vld [vmem:[#allocation4 + $0x2] sm:$0x3f]
        %3146 = vrot.lane.b32.xlu0 %v1850, 45
        %v3147 = vpop.permute.xlu0 %3146
        %v3148 = vrot.slane %v3147, 6
        %v3149 = vsel %vm3038, %v3148, %v3147
        %v3151 = vmul.f32 %v3145, %v3149
        %s3152 = sld [smem:[#allocation11 + $0x54]]
        %s3153 = sld [smem:[#allocation11 + $0x55]]
        %v3154 = vstv %s3152
        %v3155 = vmul.f32 %v3154, %v3151
        %3157 = vrot.lane.b32.xlu0 %v3155, 32
        %v3158 = vpop.permute.xlu0 %3157
        %v3159 = vrot.slane %v3158, 6
        %vm3160 = vcmask 261120
        %v3161 = vsel %vm3160, %v3159, %v3158
        %v3163 = vadd.f32 %v3144, %v3161
        %v3164 = vstv %s3153
        %v3165 = vmul.f32 %v3164, %v3151
        %v3167 = vrot.slane %v3165, 7
        %v3168 = vrot.slane %v3167, 2
        %3169 = vrot.lane.b32.xlu0 %v3168, 32
        %v3170 = vpop.permute.xlu0 %3169
        %v3171 = vrot.slane %v3170, 6
        %v3172 = vsel %vm3160, %v3171, %v3170
        %v3174 = vadd.f32 %v3163, %v3172
        %v3175 = vld [vmem:[#allocation4 + $0x2] sm:$0x3f]
        %3176 = vrot.lane.b32.xlu0 %v1888, 46
        %v3177 = vpop.permute.xlu0 %3176
        %v3178 = vrot.slane %v3177, 6
        %v3179 = vsel %vm3014, %v3178, %v3177
        %v3181 = vmul.f32 %v3175, %v3179
        %s3182 = sld [smem:[#allocation11 + $0x56]]
        %s3183 = sld [smem:[#allocation11 + $0x57]]
        %v3184 = vstv %s3182
        %v3185 = vmul.f32 %v3184, %v3181
        %3187 = vrot.lane.b32.xlu0 %v3185, 31
        %v3188 = vpop.permute.xlu0 %3187
        %v3189 = vrot.slane %v3188, 6
        %v3190 = vsel %vm3002, %v3189, %v3188
        %v3192 = vadd.f32 %v3174, %v3190
        %v3193 = vstv %s3183
        %v3194 = vmul.f32 %v3193, %v3181
        %v3196 = vrot.slane %v3194, 7
        %v3197 = vrot.slane %v3196, 2
        %3198 = vrot.lane.b32.xlu0 %v3197, 31
        %v3199 = vpop.permute.xlu0 %3198
        %v3200 = vrot.slane %v3199, 6
        %v3201 = vsel %vm3002, %v3200, %v3199
        %v3203 = vadd.f32 %v3192, %v3201
        %v3204 = vld [vmem:[#allocation4 + $0x2] sm:$0x3f]
        %3205 = vrot.lane.b32.xlu0 %v1926, 47
        %v3206 = vpop.permute.xlu0 %3205
        %v3207 = vrot.slane %v3206, 6
        %v3208 = vsel %vm2983, %v3207, %v3206
        %v3210 = vmul.f32 %v3204, %v3208
        %s3211 = sld [smem:[#allocation11 + $0x58]]
        %s3212 = sld [smem:[#allocation11 + $0x59]]
        %v3213 = vstv %s3211
        %v3214 = vmul.f32 %v3213, %v3210
        %3216 = vrot.lane.b32.xlu0 %v3214, 30
        %v3217 = vpop.permute.xlu0 %3216
        %v3218 = vrot.slane %v3217, 6
        %v3219 = vsel %vm2971, %v3218, %v3217
        %v3221 = vadd.f32 %v3203, %v3219
        %v3222 = vstv %s3212
        %v3223 = vmul.f32 %v3222, %v3210
        %v3225 = vrot.slane %v3223, 7
        %v3226 = vrot.slane %v3225, 2
        %3227 = vrot.lane.b32.xlu0 %v3226, 30
        %v3228 = vpop.permute.xlu0 %3227
        %v3229 = vrot.slane %v3228, 6
        %v3230 = vsel %vm2971, %v3229, %v3228
        %v3232 = vadd.f32 %v3221, %v3230
        %v3233 = vld [vmem:[#allocation4 + $0x2] sm:$0x3f]
        %s3234 = sld [smem:[#allocation11 + $0x5a]]
        %s3235 = sld [smem:[#allocation11 + $0x5b]]
        %v3236 = vstv %s3234
        %v3237 = vmul.f32 %v3236, %v3233
        %3239 = vrot.lane.b32.xlu0 %v3237, 29
        %v3240 = vpop.permute.xlu0 %3239
        %v3241 = vrot.slane %v3240, 6
        %v3242 = vsel %vm2940, %v3241, %v3240
        %v3244 = vadd.f32 %v3232, %v3242
        %v3245 = vstv %s3235
        %v3246 = vmul.f32 %v3245, %v3233
        %v3248 = vrot.slane %v3246, 7
        %v3249 = vrot.slane %v3248, 2
        %3250 = vrot.lane.b32.xlu0 %v3249, 29
        %v3251 = vpop.permute.xlu0 %3250
        %v3252 = vrot.slane %v3251, 6
        %v3253 = vsel %vm2940, %v3252, %v3251
        %v3255 = vadd.f32 %v3244, %v3253
        %3256 = vrot.lane.b32.xlu0 %v1988, 49
        %v3257 = vpop.permute.xlu0 %3256
        %v3258 = vrot.slane %v3257, 6
        %vm3259 = vcmask 400384
        %v3260 = vsel %vm3259, %v3258, %v3257
        %v3262 = vmul.f32 %v3233, %v3260
        %s3263 = sld [smem:[#allocation11 + $0x5c]]
        %s3264 = sld [smem:[#allocation11 + $0x5d]]
        %v3265 = vstv %s3263
        %v3266 = vmul.f32 %v3265, %v3262
        %3268 = vrot.lane.b32.xlu0 %v3266, 28
        %v3269 = vpop.permute.xlu0 %3268
        %v3270 = vrot.slane %v3269, 6
        %vm3271 = vcmask 228352
        %v3272 = vsel %vm3271, %v3270, %v3269
        %v3274 = vadd.f32 %v3255, %v3272
        %v3275 = vstv %s3264
        %v3276 = vmul.f32 %v3275, %v3262
        %v3278 = vrot.slane %v3276, 7
        %v3279 = vrot.slane %v3278, 2
        %3280 = vrot.lane.b32.xlu0 %v3279, 28
        %v3281 = vpop.permute.xlu0 %3280
        %v3282 = vrot.slane %v3281, 6
        %v3283 = vsel %vm3271, %v3282, %v3281
        %v3285 = vadd.f32 %v3274, %v3283
        %v3286 = vld [vmem:[#allocation4 + $0x2] sm:$0x3f]
        %3287 = vrot.lane.b32.xlu0 %v2037, 50
        %v3288 = vpop.permute.xlu0 %3287
        %v3289 = vrot.slane %v3288, 6
        %vm3290 = vcmask 408576
        %v3291 = vsel %vm3290, %v3289, %v3288
        %v3293 = vmul.f32 %v3286, %v3291
        %s3294 = sld [smem:[#allocation11 + $0x5e]]
        %s3295 = sld [smem:[#allocation11 + $0x5f]]
        %v3296 = vstv %s3294
        %v3297 = vmul.f32 %v3296, %v3293
        %3299 = vrot.lane.b32.xlu0 %v3297, 27
        %v3300 = vpop.permute.xlu0 %3299
        %v3301 = vrot.slane %v3300, 6
        %vm3302 = vcmask 220160
        %v3303 = vsel %vm3302, %v3301, %v3300
        %v3305 = vadd.f32 %v3285, %v3303
        %v3306 = vstv %s3295
        %v3307 = vmul.f32 %v3306, %v3293
        %v3309 = vrot.slane %v3307, 7
        %v3310 = vrot.slane %v3309, 2
        %3311 = vrot.lane.b32.xlu0 %v3310, 27
        %v3312 = vpop.permute.xlu0 %3311
        %v3313 = vrot.slane %v3312, 6
        %v3314 = vsel %vm3302, %v3313, %v3312
        %v3316 = vadd.f32 %v3305, %v3314
        %v3317 = vld [vmem:[#allocation4 + $0x2] sm:$0x3f]
        %3318 = vrot.lane.b32.xlu0 %v2086, 51
        %v3319 = vpop.permute.xlu0 %3318
        %v3320 = vrot.slane %v3319, 6
        %vm3321 = vcmask 416768
        %v3322 = vsel %vm3321, %v3320, %v3319
        %v3324 = vmul.f32 %v3317, %v3322
        %s3325 = sld [smem:[#allocation11 + $0x60]]
        %s3326 = sld [smem:[#allocation11 + $0x61]]
        %v3327 = vstv %s3325
        %v3328 = vmul.f32 %v3327, %v3324
        %3330 = vrot.lane.b32.xlu0 %v3328, 26
        %v3331 = vpop.permute.xlu0 %3330
        %v3332 = vrot.slane %v3331, 6
        %vm3333 = vcmask 211968
        %v3334 = vsel %vm3333, %v3332, %v3331
        %v3336 = vadd.f32 %v3316, %v3334
        %v3337 = vstv %s3326
        %v3338 = vmul.f32 %v3337, %v3324
        %v3340 = vrot.slane %v3338, 7
        %v3341 = vrot.slane %v3340, 2
        %3342 = vrot.lane.b32.xlu0 %v3341, 26
        %v3343 = vpop.permute.xlu0 %3342
        %v3344 = vrot.slane %v3343, 6
        %v3345 = vsel %vm3333, %v3344, %v3343
        %v3347 = vadd.f32 %v3336, %v3345
        %v3348 = vxor.u32 %v3347, 2147483648
        %v3349 = vmul.f32 %v3348, 1.442695
        %v3350 = vpow.pop %v3349
        %v3351 = vadd.f32 %v3350, 1.0
        %v3352 = vrcp.pop %v3351
        %v3353 = vmul.f32 1.0, %v3352
        %v3355 = vlaneseq
        %v3356 = vshrl.u32 %v3355, 7
        %v3357 = vsub.s32 0, %v3356
        %v3358 = vrot.slane %v3353, %v3357
        %v3359 = vlaneseq
        %v3360 = vshrl.u32 %v3359, 7
        %v3361 = vsub.s32 2, %v3360
        %v3362 = vrot.slane %v3353, %v3361
        %v3363 = vlaneseq
        %v3364 = vshrl.u32 %v3363, 7
        %v3365 = vsub.s32 4, %v3364
        %v3366 = vrot.slane %v3353, %v3365
        %v3370 = vlaneseq
        %v3371 = vshrl.u32 %v3370, 7
        %v3372 = vsub.s32 0, %v3371
        %v3373 = vrot.slane %v3358, %v3372
        %v3374 = vlaneseq
        %v3375 = vshrl.u32 %v3374, 7
        %v3376 = vsub.s32 0, %v3375
        %v3377 = vrot.slane %v3362, %v3376
        %v3378 = vlaneseq
        %v3379 = vshrl.u32 %v3378, 7
        %v3380 = vsub.s32 0, %v3379
        %v3381 = vrot.slane %v3366, %v3380
        %3385 = vrot.lane.b32.xlu0 %v3373, 51
        %v3386 = vpop.permute.xlu0 %3385
        %3387 = vrot.lane.b32.xlu0 %v3377, 51
        %v3388 = vpop.permute.xlu0 %3387
        %3389 = vrot.lane.b32.xlu0 %v3381, 51
        %v3390 = vpop.permute.xlu0 %3389
        %v3391 = vsel %vm3321, %v3386, %v3388
        %v3392 = vsel %vm3321, %v3388, %v3390
        %v3395 = vmul.f32 %v1751, %v3391
        %v3396 = vmul.f32 %v1752, %v3392
        %v3397 = vmul.f32 %v1753, %v3391
        %v3398 = vmul.f32 %v1754, %v3392
        %v3399 = vld [vmem:[%s334 + $0x8] sm:$0xff]
        %v3400 = vld [vmem:[%s334 + $0x10] sm:$0xff]
        %v3401 = vld [vmem:[%s334 + $0x28] sm:$0xff]
        %v3402 = vld [vmem:[%s334 + $0x30] sm:$0xff]
        %v3403 = vadd.f32 %v3395, %v3399
        %v3404 = vadd.f32 %v3396, %v3400
        %v3405 = vadd.f32 %v3397, %v3401
        %v3406 = vadd.f32 %v3398, %v3402
        %3407 = vst [vmem:[%s377] sm:$0xff] %v3403
        %3408 = vst [vmem:[%s377 + $0x8] sm:$0xff] %v3404
        %3409 = vst [vmem:[%s377 + $0x10] sm:$0xff] %v3405
        %3410 = vst [vmem:[%s377 + $0x18] sm:$0xff] %v3406
        %s3411 = sand.u32 %s230, 1
        %s3412 = scalar_lea.sflag [#allocation7], %s3411
        %s3413 = sand.u32 %s230, 1
        %s3414 = smul.addr %s3413, 32
        %s3415 = scalar_lea.vmem [#allocation12], %s3414
        // Predicated region
        $region69: #{tpu_custom_call.1} parent=55 // pred_check
          %p3416 = pneg %p240
        $region70: #{tpu_custom_call.1} parent=55 // pred_check_branch
          %3418 = sbr.rel (%p3416) target = $region72
        $region71: #{tpu_custom_call.1} parent=55 // pred_region
          %s3420 = ssub.s32 512, 512
          %3421 = vsyncadd %s3412, %s3420
          %s3422 = smul.addr %s28, 4
          %s3423 = smul.addr %s3422, 128
          %s3424 = scalar_lea.hbm %s9, %s3423
          %s3425 = sshll.u32 %s3415, 4
          %s3426 = int_to_ptr.vmem [resolvable:$true] %s3425
          %3431 = dma.vmem_to_hbm [thread:$0]  %s3426, 512, %s3424, %s3412, 256, 256, 16
        $region72: #{tpu_custom_call.1} parent=55 // pred_fallthru
          _
      $region56: #{tpu_custom_call.1} parent=5 // pred_fallthru
        _
      %p3432 = scmp.le.s32.totalorder 2, %s23
      // Predicated region
      $region73: #{tpu_custom_call.1} parent=5 // pred_check
        %p3433 = pneg %p3432
      $region74: #{tpu_custom_call.1} parent=5 // pred_check_branch
        %3435 = sbr.rel (%p3433) target = $region76
      $region75: #{tpu_custom_call.1} parent=5 // pred_region
        %s3436 = ssub.s32 %s23, 2
        // Predicated region
        $region77: #{tpu_custom_call.1} parent=75 // pred_check
          %p3437 = pneg %p246
        $region78: #{tpu_custom_call.1} parent=75 // pred_check_branch
          %3439 = sbr.rel (%p3437) target = $region80
        $region79: #{tpu_custom_call.1} parent=75 // pred_region
          %s3440 = sand.u32 %s231, 1
          %s3441 = scalar_lea.sflag [#allocation7], %s3440
          %s3442 = sand.u32 %s231, 1
          %s3443 = smul.addr %s3442, 32
          %s3444 = scalar_lea.vmem [#allocation12], %s3443
          %3445 = dma.done %s3441, 512
        $region80: #{tpu_custom_call.1} parent=75 // pred_fallthru
          _
      $region76: #{tpu_custom_call.1} parent=5 // pred_fallthru
        _
    $region6: #{tpu_custom_call.1} parent=1 // loop_footer
      %s27 = sadd.s32 1, %s23
    $region7: #{tpu_custom_call.1} parent=1 // loop_footer_branch
      %22 = sbr.rel target = $region3
    $region8: #{tpu_custom_call.1} parent=1 // loop_exit
      _
    %3446 = vsyncpa [#allocation6], 1
    %s3447 = scalar_lea.sflag [#allocation6], 1
    %3448 = vsyncpa %s3447, 1
    %3449 = vsyncpa [#allocation10], 1
    %3450 = vsyncpa [#allocation7], 1
    %s3451 = scalar_lea.sflag [#allocation7], 1
    %3452 = vsyncpa %s3451, 1
    %3453 = vsyncpa [#allocation8], 1
    %s3454 = scalar_lea.sflag [#allocation8], 1
    %3455 = vsyncpa %s3454, 1

</llo_original>
